<compile_context>
chip_gen: v6e
topology: v6e:2x2x1
jax: 0.10.0
libtpu: 0.0.40
codegen_flags: <defaults>
</compile_context>

<pallas_src>
import jax
import jax.numpy as jnp
from jax import lax
from jax.experimental import pallas as pl
from jax.experimental.pallas import tpu as pltpu


def _mf_kernel(uid_ref, iid_ref, ut_ref, it_ref, o_ref):
    """One batch tile of TB rows.

    uid_ref, iid_ref : (1, 1, TB) int32   ids for this tile (TB on lanes)
    ut_ref           : (F_p, NU_p)        transposed user table (VMEM-resident)
    it_ref           : (F_p, NI_p)        transposed item table (VMEM-resident)
    o_ref            : (1, 1, TB) float32 lane-dense per-row dot products
    """
    uids = uid_ref[0]                                    # (1, TB)
    iids = iid_ref[0]                                    # (1, TB)
    nu = ut_ref.shape[1]
    ni = it_ref.shape[1]
    tb = uids.shape[-1]
    tdtype = ut_ref.dtype

    # f32 tables: force the exact multi-pass MXU path so the gather matches the
    # f32 reference bit-for-bit; bf16 fast path: single-pass default is fine
    # (0/1 one-hot values are exact in bf16, accumulate in f32).
    prec = lax.Precision.HIGHEST if tdtype == jnp.float32 else lax.Precision.DEFAULT

    # One-hot selection matrices, TB on the lane axis.
    oh_u = (lax.broadcasted_iota(jnp.int32, (nu, tb), 0) == uids).astype(tdtype)
    oh_i = (lax.broadcasted_iota(jnp.int32, (ni, tb), 0) == iids).astype(tdtype)

    # Gather-as-matmul on the MXU: (F, N) @ (N, TB) -> (F, TB), f32 accumulate.
    gu = jnp.dot(ut_ref[...], oh_u, preferred_element_type=jnp.float32, precision=prec)
    gi = jnp.dot(it_ref[...], oh_i, preferred_element_type=jnp.float32, precision=prec)

    # Elementwise product (VPU) + reduction over F on sublanes (XLU),
    # lane-dense (1, TB) store.
    o_ref[0] = jnp.sum(gu * gi, axis=0, keepdims=True)


def matrix_factorization_forward(user_factors, item_factors, user, item, *,
                                 batch_tile=None, use_bf16=False):
    """user_factors: (n_users, F), item_factors: (n_items, F),
    user/item: (B,) integer index arrays.  Returns (B,) float32.

    use_bf16=True casts the resident tables (and one-hot) to bf16 for the
    MXU's native single-pass rate; only the table values themselves are
    rounded (~1e-3 rel).  Default f32 path is bit-exact vs the reference.
    """
    B = user.shape[0]
    n_users, F = user_factors.shape
    n_items, _ = item_factors.shape

    tdtype = jnp.bfloat16 if use_bf16 else jnp.float32
    elt = 2 if use_bf16 else 4

    # Tile-aligned table layout: F -> multiple of the sublane pack, N -> 128.
    f_mult = 16 if use_bf16 else 8
    F_p = pl.cdiv(F, f_mult) * f_mult
    NU_p = pl.cdiv(n_users, 128) * 128
    NI_p = pl.cdiv(n_items, 128) * 128

    # ---- generation-aware batch-tile sizing ---------------------------------
    try:
        vmem_cap = int(pltpu.get_tpu_info().vmem_capacity_bytes)
    except Exception:
        vmem_cap = 64 << 20  # conservative fallback (v7x per-TC budget)

    table_bytes = (NU_p + NI_p) * F_p * elt               # resident tables (single-buffered)
    budget = vmem_cap // 2                                  # leave headroom for compiler scratch
    avail = max(budget - table_bytes, 1 << 20)
    # VMEM bytes per lane column: the two (N, TB) one-hot temporaries + the
    # gathered / product (F_p, TB) f32 temporaries + id/out tile slivers.
    per_col = (NU_p + NI_p) * elt + 3 * F_p * 4 + 64
    tb_cap = max(128, (avail // per_col) // 128 * 128)

    if batch_tile is None:
        # bigger tiles where VMEM is plentiful (v5e/v6e 128 MiB), smaller on v7x (64 MiB/TC)
        batch_tile = 1024 if vmem_cap >= (96 << 20) else 512
    batch_tile = max(128, (batch_tile // 128) * 128)        # enforce lane-dense multiple of 128

    b128 = pl.cdiv(B, 128) * 128
    tb = min(batch_tile, tb_cap, b128)
    b_pad = pl.cdiv(B, tb) * tb
    num_tiles = b_pad // tb

    # Give both TensorCores work on v7x when the batch allows it (cheap no-op
    # elsewhere: one extra ~0.35 us grid step).
    if num_tiles == 1 and b_pad >= 256:
        tb = max(128, ((b_pad // 2) // 128) * 128)
        b_pad = pl.cdiv(B, tb) * tb
        num_tiles = b_pad // tb

    # ---- input prep (layout plumbing only, done once in the wrapper) --------
    def prep_ids(ids, n_rows):
        ids = jnp.clip(ids.astype(jnp.int32), 0, n_rows - 1)    # bounds safety
        ids = jnp.pad(ids, (0, b_pad - B))
        return ids.reshape(num_tiles, 1, tb)

    uid = prep_ids(user, n_users)
    iid = prep_ids(item, n_items)

    # Transposed, padded tables: F on sublanes, rows on lanes; resident in VMEM
    # across all grid steps (block index never changes).
    ut = jnp.transpose(user_factors.astype(jnp.float32)).astype(tdtype)   # (F, n_users)
    ut = jnp.pad(ut, ((0, F_p - F), (0, NU_p - n_users)))
    it = jnp.transpose(item_factors.astype(jnp.float32)).astype(tdtype)   # (F, n_items)
    it = jnp.pad(it, ((0, F_p - F), (0, NI_p - n_items)))

    # ---- VMEM accounting for the compiler ------------------------------------
    vmem_needed = (2 * table_bytes                       # tables (2x in case of dbl-buffer fallback)
                   + (NU_p + NI_p) * tb * elt            # one-hot temporaries
                   + 3 * F_p * tb * 4                     # gathered + product f32 temporaries
                   + 2 * (2 * tb * 4) + 2 * (tb * 4))     # id / output tiles (double-buffered)
    vmem_limit = int(min(max(2 * vmem_needed + (2 << 20), 32 << 20), vmem_cap))

    # ---- pallas_call ----------------------------------------------------------
    def _table_spec(shape, single_buffer):
        if single_buffer:
            # Constant block index -> no need to double-buffer; halves table VMEM.
            return pl.BlockSpec(shape, lambda t: (0, 0), pipeline_mode=pl.Buffered(1))
        return pl.BlockSpec(shape, lambda t: (0, 0))

    def _run(single_buffer_tables):
        grid_spec = pltpu.PrefetchScalarGridSpec(
            num_scalar_prefetch=0,
            grid=(num_tiles,),
            in_specs=[
                pl.BlockSpec((1, 1, tb), lambda t: (t, 0, 0)),        # user ids tile
                pl.BlockSpec((1, 1, tb), lambda t: (t, 0, 0)),        # item ids tile
                _table_spec((F_p, NU_p), single_buffer_tables),        # resident user table^T
                _table_spec((F_p, NI_p), single_buffer_tables),        # resident item table^T
            ],
            out_specs=pl.BlockSpec((1, 1, tb), lambda t: (t, 0, 0)),
        )
        return pl.pallas_call(
            _mf_kernel,
            out_shape=jax.ShapeDtypeStruct((num_tiles, 1, tb), jnp.float32),
            grid_spec=grid_spec,
            compiler_params=pltpu.CompilerParams(
                dimension_semantics=("parallel",),        # batch tiles are independent
                vmem_limit_bytes=vmem_limit,
            ),
        )(uid, iid, ut, it)

    try:
        out = _run(True)
    except Exception:
        # Fallback for jax versions without per-operand pipeline_mode support.
        out = _run(False)

    return out.reshape(b_pad)[:B]


if __name__ == "__main__":
    # Deterministic parameter init (mirrors torch.nn.Embedding: N(0, 1)).
    n_users, n_items, n_factors = 10, 12, 32
    batch = 8

    key = jax.random.PRNGKey(0)
    k_u, k_i, k_uid, k_iid = jax.random.split(key, 4)

    user_factors = jax.random.normal(k_u, (n_users, n_factors), dtype=jnp.float32)
    item_factors = jax.random.normal(k_i, (n_items, n_factors), dtype=jnp.float32)

    user = jax.random.randint(k_uid, (batch,), 0, n_users, dtype=jnp.int32)
    item = jax.random.randint(k_iid, (batch,), 0, n_items, dtype=jnp.int32)

    out = matrix_factorization_forward(user_factors, item_factors, user, item)
    out = jax.block_until_ready(out)

    # Reference check in plain JAX (same semantics as the PyTorch forward).
    ref = jnp.sum(user_factors[user] * item_factors[item], axis=1)
    assert out.shape == (batch,)
    assert jnp.allclose(out, ref, atol=1e-5, rtol=1e-5)

    print("KERNEL_OK")
</pallas_src>

<mosaic_0001>
module attributes {stable_mosaic.version = 11 : i64} {
  func.func @_mf_kernel(%arg0: i32, %arg1: memref<1x1x128xi32, #tpu.memory_space<vmem>>, %arg2: memref<1x1x128xi32, #tpu.memory_space<vmem>>, %arg3: memref<32x128xf32, #tpu.memory_space<vmem>>, %arg4: memref<32x128xf32, #tpu.memory_space<vmem>>, %arg5: memref<1x1x128xf32, #tpu.memory_space<vmem>>) attributes {dimension_semantics = [#tpu.dimension_semantics<parallel>], iteration_bounds = array<i64: 1>, scalar_prefetch = 0 : i64, scratch_operands = 0 : i64, tpu.core_type = #tpu.core_type<tc>, window_params = [{transform_indices = @transform_0, window_bounds = array<i64: 1, 1, 128>}, {transform_indices = @transform_1, window_bounds = array<i64: 1, 1, 128>}, {pipeline_mode = #tpu.pipeline_mode<synchronous>, transform_indices = @transform_2, window_bounds = array<i64: 32, 128>}, {pipeline_mode = #tpu.pipeline_mode<synchronous>, transform_indices = @transform_3, window_bounds = array<i64: 32, 128>}, {transform_indices = @transform_4, window_bounds = array<i64: 1, 1, 128>}]} {
    %c0 = arith.constant 0 : index
    %c0_0 = arith.constant 0 : index
    %c0_1 = arith.constant 0 : index
    %0 = vector.load %arg1[%c0, %c0_0, %c0_1] : memref<1x1x128xi32, #tpu.memory_space<vmem>>, vector<1x1x128xi32>
    %1 = vector.shape_cast %0 : vector<1x1x128xi32> to vector<1x128xi32>
    %c0_2 = arith.constant 0 : index
    %c0_3 = arith.constant 0 : index
    %c0_4 = arith.constant 0 : index
    %2 = vector.load %arg2[%c0_2, %c0_3, %c0_4] : memref<1x1x128xi32, #tpu.memory_space<vmem>>, vector<1x1x128xi32>
    %3 = vector.shape_cast %2 : vector<1x1x128xi32> to vector<1x128xi32>
    %4 = tpu.iota {dimensions = array<i32: 0>} : vector<128x128xi32>
    %5 = vector.broadcast %1 : vector<1x128xi32> to vector<128x128xi32>
    %6 = arith.cmpi eq, %4, %5 : vector<128x128xi32>
    %7 = arith.extui %6 : vector<128x128xi1> to vector<128x128xi32>
    %8 = arith.sitofp %7 : vector<128x128xi32> to vector<128x128xf32>
    %9 = tpu.iota {dimensions = array<i32: 0>} : vector<128x128xi32>
    %10 = vector.broadcast %3 : vector<1x128xi32> to vector<128x128xi32>
    %11 = arith.cmpi eq, %9, %10 : vector<128x128xi32>
    %12 = arith.extui %11 : vector<128x128xi1> to vector<128x128xi32>
    %13 = arith.sitofp %12 : vector<128x128xi32> to vector<128x128xf32>
    %c0_5 = arith.constant 0 : index
    %c0_6 = arith.constant 0 : index
    %14 = vector.load %arg3[%c0_5, %c0_6] : memref<32x128xf32, #tpu.memory_space<vmem>>, vector<32x128xf32>
    %cst = arith.constant dense<0.000000e+00> : vector<32x128xf32>
    %15 = tpu.matmul %14, %8, %cst {dimension_numbers = #tpu.dot_dimension_numbers<[1], [0], [0], [1], [0, 0, 1, 1], [], []>, precision = #tpu.contract_precision<fp32>} : vector<32x128xf32>, vector<128x128xf32>, vector<32x128xf32> -> vector<32x128xf32>
    %c0_7 = arith.constant 0 : index
    %c0_8 = arith.constant 0 : index
    %16 = vector.load %arg4[%c0_7, %c0_8] : memref<32x128xf32, #tpu.memory_space<vmem>>, vector<32x128xf32>
    %cst_9 = arith.constant dense<0.000000e+00> : vector<32x128xf32>
    %17 = tpu.matmul %16, %13, %cst_9 {dimension_numbers = #tpu.dot_dimension_numbers<[1], [0], [0], [1], [0, 0, 1, 1], [], []>, precision = #tpu.contract_precision<fp32>} : vector<32x128xf32>, vector<128x128xf32>, vector<32x128xf32> -> vector<32x128xf32>
    %18 = arith.mulf %15, %17 : vector<32x128xf32>
    %cst_10 = arith.constant dense<0.000000e+00> : vector<128xf32>
    %19 = vector.multi_reduction <add>, %18, %cst_10 [0] : vector<32x128xf32> to vector<128xf32>
    %20 = vector.shape_cast %19 : vector<128xf32> to vector<1x128xf32>
    %c0_11 = arith.constant 0 : index
    %c0_12 = arith.constant 0 : index
    %c0_13 = arith.constant 0 : index
    %21 = vector.load %arg5[%c0_11, %c0_12, %c0_13] : memref<1x1x128xf32, #tpu.memory_space<vmem>>, vector<1x1x128xf32>
    %22 = vector.shape_cast %21 : vector<1x1x128xf32> to vector<1x128xf32>
    %23 = vector.shape_cast %20 : vector<1x128xf32> to vector<1x1x128xf32>
    tpu.vector_store %arg5[%c0_11, %c0_12, %c0_13], %23 {strides = array<i32>} : memref<1x1x128xf32, #tpu.memory_space<vmem>>, vector<1x1x128xf32>,
    return
  }
  func.func @transform_0(%arg0: i32) -> (i32, i32, i32) {
    %c0_i32 = arith.constant 0 : i32
    %c0_i32_0 = arith.constant 0 : i32
    %c0_i32_1 = arith.constant 0 : i32
    return %arg0, %c0_i32, %c0_i32_0 : i32, i32, i32
  }
  func.func @transform_1(%arg0: i32) -> (i32, i32, i32) {
    %c0_i32 = arith.constant 0 : i32
    %c0_i32_0 = arith.constant 0 : i32
    %c0_i32_1 = arith.constant 0 : i32
    return %arg0, %c0_i32, %c0_i32_0 : i32, i32, i32
  }
  func.func @transform_2(%arg0: i32) -> (i32, i32) {
    %c0_i32 = arith.constant 0 : i32
    %c0_i32_0 = arith.constant 0 : i32
    %c0_i32_1 = arith.constant 0 : i32
    return %c0_i32, %c0_i32_0 : i32, i32
  }
  func.func @transform_3(%arg0: i32) -> (i32, i32) {
    %c0_i32 = arith.constant 0 : i32
    %c0_i32_0 = arith.constant 0 : i32
    %c0_i32_1 = arith.constant 0 : i32
    return %c0_i32, %c0_i32_0 : i32, i32
  }
  func.func @transform_4(%arg0: i32) -> (i32, i32, i32) {
    %c0_i32 = arith.constant 0 : i32
    %c0_i32_0 = arith.constant 0 : i32
    %c0_i32_1 = arith.constant 0 : i32
    return %arg0, %c0_i32, %c0_i32_0 : i32, i32, i32
  }
}

module attributes {stable_mosaic.version = 11 : i64} {
  func.func @_mf_kernel(%arg0: i32, %arg1: memref<1x1x128xi32, #tpu.memory_space<vmem>>, %arg2: memref<1x1x128xi32, #tpu.memory_space<vmem>>, %arg3: memref<32x128xf32, #tpu.memory_space<vmem>>, %arg4: memref<32x128xf32, #tpu.memory_space<vmem>>, %arg5: memref<1x1x128xf32, #tpu.memory_space<vmem>>) attributes {dimension_semantics = [#tpu.dimension_semantics<parallel>], iteration_bounds = array<i64: 1>, scalar_prefetch = 0 : i64, scratch_operands = 0 : i64, tpu.core_type = #tpu.core_type<tc>, window_params = [{transform_indices = @transform_0, window_bounds = array<i64: 1, 1, 128>}, {transform_indices = @transform_1, window_bounds = array<i64: 1, 1, 128>}, {pipeline_mode = #tpu.pipeline_mode<synchronous>, transform_indices = @transform_2, window_bounds = array<i64: 32, 128>}, {pipeline_mode = #tpu.pipeline_mode<synchronous>, transform_indices = @transform_3, window_bounds = array<i64: 32, 128>}, {transform_indices = @transform_4, window_bounds = array<i64: 1, 1, 128>}]} {
    %c0 = arith.constant 0 : index
    %c0_0 = arith.constant 0 : index
    %c0_1 = arith.constant 0 : index
    %0 = vector.load %arg1[%c0, %c0_0, %c0_1] : memref<1x1x128xi32, #tpu.memory_space<vmem>>, vector<1x1x128xi32>
    %1 = vector.shape_cast %0 : vector<1x1x128xi32> to vector<1x128xi32>
    %c0_2 = arith.constant 0 : index
    %c0_3 = arith.constant 0 : index
    %c0_4 = arith.constant 0 : index
    %2 = vector.load %arg2[%c0_2, %c0_3, %c0_4] : memref<1x1x128xi32, #tpu.memory_space<vmem>>, vector<1x1x128xi32>
    %3 = vector.shape_cast %2 : vector<1x1x128xi32> to vector<1x128xi32>
    %4 = tpu.iota {dimensions = array<i32: 0>} : vector<128x128xi32>
    %5 = vector.broadcast %1 : vector<1x128xi32> to vector<128x128xi32>
    %6 = arith.cmpi eq, %4, %5 : vector<128x128xi32>
    %7 = arith.extui %6 : vector<128x128xi1> to vector<128x128xi32>
    %8 = arith.sitofp %7 : vector<128x128xi32> to vector<128x128xf32>
    %9 = tpu.iota {dimensions = array<i32: 0>} : vector<128x128xi32>
    %10 = vector.broadcast %3 : vector<1x128xi32> to vector<128x128xi32>
    %11 = arith.cmpi eq, %9, %10 : vector<128x128xi32>
    %12 = arith.extui %11 : vector<128x128xi1> to vector<128x128xi32>
    %13 = arith.sitofp %12 : vector<128x128xi32> to vector<128x128xf32>
    %c0_5 = arith.constant 0 : index
    %c0_6 = arith.constant 0 : index
    %14 = vector.load %arg3[%c0_5, %c0_6] : memref<32x128xf32, #tpu.memory_space<vmem>>, vector<32x128xf32>
    %cst = arith.constant dense<0.000000e+00> : vector<32x128xf32>
    %15 = tpu.matmul %14, %8, %cst {dimension_numbers = #tpu.dot_dimension_numbers<[1], [0], [0], [1], [0, 0, 1, 1], [], []>, precision = #tpu.contract_precision<fp32>} : vector<32x128xf32>, vector<128x128xf32>, vector<32x128xf32> -> vector<32x128xf32>
    %c0_7 = arith.constant 0 : index
    %c0_8 = arith.constant 0 : index
    %16 = vector.load %arg4[%c0_7, %c0_8] : memref<32x128xf32, #tpu.memory_space<vmem>>, vector<32x128xf32>
    %cst_9 = arith.constant dense<0.000000e+00> : vector<32x128xf32>
    %17 = tpu.matmul %16, %13, %cst_9 {dimension_numbers = #tpu.dot_dimension_numbers<[1], [0], [0], [1], [0, 0, 1, 1], [], []>, precision = #tpu.contract_precision<fp32>} : vector<32x128xf32>, vector<128x128xf32>, vector<32x128xf32> -> vector<32x128xf32>
    %18 = arith.mulf %15, %17 : vector<32x128xf32>
    %cst_10 = arith.constant dense<0.000000e+00> : vector<128xf32>
    %19 = vector.multi_reduction <add>, %18, %cst_10 [0] : vector<32x128xf32> to vector<128xf32>
    %20 = vector.shape_cast %19 : vector<128xf32> to vector<1x128xf32>
    %c0_11 = arith.constant 0 : index
    %c0_12 = arith.constant 0 : index
    %c0_13 = arith.constant 0 : index
    %21 = vector.load %arg5[%c0_11, %c0_12, %c0_13] : memref<1x1x128xf32, #tpu.memory_space<vmem>>, vector<1x1x128xf32>
    %22 = vector.shape_cast %21 : vector<1x1x128xf32> to vector<1x128xf32>
    %23 = vector.shape_cast %20 : vector<1x128xf32> to vector<1x1x128xf32>
    tpu.vector_store %arg5[%c0_11, %c0_12, %c0_13], %23 {strides = array<i32>} : memref<1x1x128xf32, #tpu.memory_space<vmem>>, vector<1x1x128xf32>,
    return
  }
  func.func @transform_0(%arg0: i32) -> (i32, i32, i32) {
    %c0_i32 = arith.constant 0 : i32
    %c0_i32_0 = arith.constant 0 : i32
    %c0_i32_1 = arith.constant 0 : i32
    return %arg0, %c0_i32, %c0_i32_0 : i32, i32, i32
  }
  func.func @transform_1(%arg0: i32) -> (i32, i32, i32) {
    %c0_i32 = arith.constant 0 : i32
    %c0_i32_0 = arith.constant 0 : i32
    %c0_i32_1 = arith.constant 0 : i32
    return %arg0, %c0_i32, %c0_i32_0 : i32, i32, i32
  }
  func.func @transform_2(%arg0: i32) -> (i32, i32) {
    %c0_i32 = arith.constant 0 : i32
    %c0_i32_0 = arith.constant 0 : i32
    %c0_i32_1 = arith.constant 0 : i32
    return %c0_i32, %c0_i32_0 : i32, i32
  }
  func.func @transform_3(%arg0: i32) -> (i32, i32) {
    %c0_i32 = arith.constant 0 : i32
    %c0_i32_0 = arith.constant 0 : i32
    %c0_i32_1 = arith.constant 0 : i32
    return %c0_i32, %c0_i32_0 : i32, i32
  }
  func.func @transform_4(%arg0: i32) -> (i32, i32, i32) {
    %c0_i32 = arith.constant 0 : i32
    %c0_i32_0 = arith.constant 0 : i32
    %c0_i32_1 = arith.constant 0 : i32
    return %arg0, %c0_i32, %c0_i32_0 : i32, i32, i32
  }
}

</mosaic_0001>

<llo_original>
// kernel: tpu_custom_call.1
$region0: #{tpu_custom_call.1}
  #allocation0 [shape = 'u32[]', space=smem, size = 0x4, offset = 0x4, fixed_abs, tag = 'smem constant byte address 0x4 - core index']
  #allocation1 [shape = 'u32[144,128]{1,0:T(1,128)}', space=vmem, size = 0x12000, scoped, tag = 'internal scratch']
  %s0 = inlined_call_operand.hbm [shape: s32[1,1,128], index: 0, kind: input, shape index: {}]
  %s1 = inlined_call_operand.vmem [shape: s32[1,1,128], index: 1, kind: input, shape index: {}]
  %s2 = inlined_call_operand.hbm [shape: f32[32,128], index: 2, kind: input, shape index: {}]
  %s3 = inlined_call_operand.hbm [shape: f32[32,128], index: 3, kind: input, shape index: {}]
  %s4 = inlined_call_operand.hbm [shape: f32[1,1,128], index: 4, kind: output, shape index: {}]
  %s5 = sld [smem:[#allocation0]]
  $region38: #{tpu_custom_call.1} parent=0
    _
  %s7 = ssub.s32 1, %s5
  %s8 = scalar_select 0, %s7, %s5
  $region1: #{tpu_custom_call.1} parent=0
    #allocation2 [shape = 'u8[512]{0}', space=vmem, size = 0x400, scoped, tag = 'input window, operand 0, single buffered']
    #allocation3 [shape = 's32[1]{0}', space=sflag, size = 0x4, scoped, tag = 'scoped memory for tpu_custom_call.1']
    #allocation4 [shape = 's32[1]{0}', space=sflag, size = 0x4, scoped, tag = 'scoped memory for tpu_custom_call.1']
    #allocation5 [shape = 'u8[16384]{0}', space=vmem, size = 0x4000, scoped, tag = 'input window, operand 2, single buffered']
    #allocation6 [shape = 's32[1]{0}', space=sflag, size = 0x4, scoped, tag = 'scoped memory for tpu_custom_call.1']
    #allocation7 [shape = 'u8[16384]{0}', space=vmem, size = 0x4000, scoped, tag = 'input window, operand 3, single buffered']
    #allocation8 [shape = 'u8[512]{0}', space=vmem, size = 0x400, scoped, tag = 'output window, operand 0, single buffered']
    %9 = vsyncpa [#allocation3], 0
    %10 = vsyncpa [#allocation6], 0
    %11 = vsyncpa [#allocation4], 0
    // Predicated region
    $region2: #{tpu_custom_call.1} parent=1 // pred_check
      _
    $region3: #{tpu_custom_call.1} parent=1 // pred_check_branch
      %13 = sbr.rel (0) target = $region5
    $region4: #{tpu_custom_call.1} parent=1 // pred_region
      %s15 = ssub.s32 16, 16
      %16 = vsyncadd [#allocation3], %s15
      %s18 = sshll.u32 [#allocation2], 4
      %s19 = int_to_ptr.vmem [resolvable:$true] %s18
      %21 = dma.hbm_to_vmem [thread:$0]  %s0, 16, %s19, [#allocation3]
    $region5: #{tpu_custom_call.1} parent=1 // pred_fallthru
      _
    // Predicated region
    $region6: #{tpu_custom_call.1} parent=1 // pred_check
      _
    $region7: #{tpu_custom_call.1} parent=1 // pred_check_branch
      %23 = sbr.rel (0) target = $region9
    $region8: #{tpu_custom_call.1} parent=1 // pred_region
      _
    $region9: #{tpu_custom_call.1} parent=1 // pred_fallthru
      _
    // Predicated region
    $region10: #{tpu_custom_call.1} parent=1 // pred_check
      _
    $region11: #{tpu_custom_call.1} parent=1 // pred_check_branch
      %25 = sbr.rel (0) target = $region13
    $region12: #{tpu_custom_call.1} parent=1 // pred_region
      %s27 = ssub.s32 512, 512
      %28 = vsyncadd [#allocation6], %s27
      %s29 = sshll.u32 [#allocation5], 4
      %s30 = int_to_ptr.vmem [resolvable:$true] %s29
      %35 = dma.hbm_to_vmem [thread:$0]  %s2, 512, %s30, [#allocation6], 128, 128, 8
    $region13: #{tpu_custom_call.1} parent=1 // pred_fallthru
      _
    // Predicated region
    $region14: #{tpu_custom_call.1} parent=1 // pred_check
      _
    $region15: #{tpu_custom_call.1} parent=1 // pred_check_branch
      %37 = sbr.rel (0) target = $region17
    $region16: #{tpu_custom_call.1} parent=1 // pred_region
      %s39 = ssub.s32 512, 512
      %40 = vsyncadd [#allocation6], %s39
      %s41 = sshll.u32 [#allocation7], 4
      %s42 = int_to_ptr.vmem [resolvable:$true] %s41
      %47 = dma.hbm_to_vmem [thread:$0]  %s3, 512, %s42, [#allocation6], 128, 128, 8
    $region17: #{tpu_custom_call.1} parent=1 // pred_fallthru
      _
    // Predicated region
    $region18: #{tpu_custom_call.1} parent=1 // pred_check
      _
    $region19: #{tpu_custom_call.1} parent=1 // pred_check_branch
      %49 = sbr.rel (0) target = $region21
    $region20: #{tpu_custom_call.1} parent=1 // pred_region
      %50 = dma.done [#allocation3], 16
    $region21: #{tpu_custom_call.1} parent=1 // pred_fallthru
      _
    // Predicated region
    $region22: #{tpu_custom_call.1} parent=1 // pred_check
      _
    $region23: #{tpu_custom_call.1} parent=1 // pred_check_branch
      %52 = sbr.rel (0) target = $region25
    $region24: #{tpu_custom_call.1} parent=1 // pred_region
      %53 = dma.done [#allocation6], 512
    $region25: #{tpu_custom_call.1} parent=1 // pred_fallthru
      _
    // Predicated region
    $region26: #{tpu_custom_call.1} parent=1 // pred_check
      _
    $region27: #{tpu_custom_call.1} parent=1 // pred_check_branch
      %55 = sbr.rel (0) target = $region29
    $region28: #{tpu_custom_call.1} parent=1 // pred_region
      %56 = dma.done [#allocation6], 512
    $region29: #{tpu_custom_call.1} parent=1 // pred_fallthru
      _
    %v57 = vld [vmem:[#allocation2] sm:$0x1]
    %v58 = vld [vmem:[%s1] sm:$0x1]
    %v59 = vlaneseq
    %v60 = vshrl.u32 %v59, 7
    %v61 = vadd.s32 %v60, 8
    %v62 = vadd.s32 %v60, 16
    %v63 = vadd.s32 %v60, 24
    %v64 = vadd.s32 %v60, 32
    %v65 = vadd.s32 %v60, 40
    %v66 = vadd.s32 %v60, 48
    %v67 = vadd.s32 %v60, 56
    %v68 = vadd.s32 %v60, 64
    %v69 = vadd.s32 %v60, 72
    %v70 = vadd.s32 %v60, 80
    %v71 = vadd.s32 %v60, 88
    %v72 = vadd.s32 %v60, 96
    %v73 = vadd.s32 %v60, 104
    %v74 = vadd.s32 %v60, 112
    %v75 = vadd.s32 %v60, 120
    %v76 = vlaneseq
    %v77 = vshrl.u32 %v76, 7
    %v78 = vsub.s32 0, %v77
    %v79 = vrot.slane %v57, %v78
    %vm80 = vcmp.eq.s32.totalorder %v60, %v79
    %vm81 = vcmp.eq.s32.totalorder %v61, %v79
    %vm82 = vcmp.eq.s32.totalorder %v62, %v79
    %vm83 = vcmp.eq.s32.totalorder %v63, %v79
    %vm84 = vcmp.eq.s32.totalorder %v64, %v79
    %vm85 = vcmp.eq.s32.totalorder %v65, %v79
    %vm86 = vcmp.eq.s32.totalorder %v66, %v79
    %vm87 = vcmp.eq.s32.totalorder %v67, %v79
    %vm88 = vcmp.eq.s32.totalorder %v68, %v79
    %vm89 = vcmp.eq.s32.totalorder %v69, %v79
    %vm90 = vcmp.eq.s32.totalorder %v70, %v79
    %vm91 = vcmp.eq.s32.totalorder %v71, %v79
    %vm92 = vcmp.eq.s32.totalorder %v72, %v79
    %vm93 = vcmp.eq.s32.totalorder %v73, %v79
    %vm94 = vcmp.eq.s32.totalorder %v74, %v79
    %vm95 = vcmp.eq.s32.totalorder %v75, %v79
    %v96 = vsel %vm80, 1, 0
    %v97 = vsel %vm81, 1, 0
    %v98 = vsel %vm82, 1, 0
    %v99 = vsel %vm83, 1, 0
    %v100 = vsel %vm84, 1, 0
    %v101 = vsel %vm85, 1, 0
    %v102 = vsel %vm86, 1, 0
    %v103 = vsel %vm87, 1, 0
    %v104 = vsel %vm88, 1, 0
    %v105 = vsel %vm89, 1, 0
    %v106 = vsel %vm90, 1, 0
    %v107 = vsel %vm91, 1, 0
    %v108 = vsel %vm92, 1, 0
    %v109 = vsel %vm93, 1, 0
    %v110 = vsel %vm94, 1, 0
    %v111 = vsel %vm95, 1, 0
    %v112 = vcvt.s32.f32 %v96
    %v113 = vcvt.s32.f32 %v97
    %v114 = vcvt.s32.f32 %v98
    %v115 = vcvt.s32.f32 %v99
    %v116 = vcvt.s32.f32 %v100
    %v117 = vcvt.s32.f32 %v101
    %v118 = vcvt.s32.f32 %v102
    %v119 = vcvt.s32.f32 %v103
    %v120 = vcvt.s32.f32 %v104
    %v121 = vcvt.s32.f32 %v105
    %v122 = vcvt.s32.f32 %v106
    %v123 = vcvt.s32.f32 %v107
    %v124 = vcvt.s32.f32 %v108
    %v125 = vcvt.s32.f32 %v109
    %v126 = vcvt.s32.f32 %v110
    %v127 = vcvt.s32.f32 %v111
    %v128 = vlaneseq
    %v129 = vshrl.u32 %v128, 7
    %v130 = vsub.s32 0, %v129
    %v131 = vrot.slane %v58, %v130
    %vm132 = vcmp.eq.s32.totalorder %v60, %v131
    %vm133 = vcmp.eq.s32.totalorder %v61, %v131
    %vm134 = vcmp.eq.s32.totalorder %v62, %v131
    %vm135 = vcmp.eq.s32.totalorder %v63, %v131
    %vm136 = vcmp.eq.s32.totalorder %v64, %v131
    %vm137 = vcmp.eq.s32.totalorder %v65, %v131
    %vm138 = vcmp.eq.s32.totalorder %v66, %v131
    %vm139 = vcmp.eq.s32.totalorder %v67, %v131
    %vm140 = vcmp.eq.s32.totalorder %v68, %v131
    %vm141 = vcmp.eq.s32.totalorder %v69, %v131
    %vm142 = vcmp.eq.s32.totalorder %v70, %v131
    %vm143 = vcmp.eq.s32.totalorder %v71, %v131
    %vm144 = vcmp.eq.s32.totalorder %v72, %v131
    %vm145 = vcmp.eq.s32.totalorder %v73, %v131
    %vm146 = vcmp.eq.s32.totalorder %v74, %v131
    %vm147 = vcmp.eq.s32.totalorder %v75, %v131
    %v148 = vsel %vm132, 1, 0
    %v149 = vsel %vm133, 1, 0
    %v150 = vsel %vm134, 1, 0
    %v151 = vsel %vm135, 1, 0
    %v152 = vsel %vm136, 1, 0
    %v153 = vsel %vm137, 1, 0
    %v154 = vsel %vm138, 1, 0
    %v155 = vsel %vm139, 1, 0
    %v156 = vsel %vm140, 1, 0
    %v157 = vsel %vm141, 1, 0
    %v158 = vsel %vm142, 1, 0
    %v159 = vsel %vm143, 1, 0
    %v160 = vsel %vm144, 1, 0
    %v161 = vsel %vm145, 1, 0
    %v162 = vsel %vm146, 1, 0
    %v163 = vsel %vm147, 1, 0
    %v164 = vcvt.s32.f32 %v148
    %v165 = vcvt.s32.f32 %v149
    %v166 = vcvt.s32.f32 %v150
    %v167 = vcvt.s32.f32 %v151
    %v168 = vcvt.s32.f32 %v152
    %v169 = vcvt.s32.f32 %v153
    %v170 = vcvt.s32.f32 %v154
    %v171 = vcvt.s32.f32 %v155
    %v172 = vcvt.s32.f32 %v156
    %v173 = vcvt.s32.f32 %v157
    %v174 = vcvt.s32.f32 %v158
    %v175 = vcvt.s32.f32 %v159
    %v176 = vcvt.s32.f32 %v160
    %v177 = vcvt.s32.f32 %v161
    %v178 = vcvt.s32.f32 %v162
    %v179 = vcvt.s32.f32 %v163
    %v180 = vld [vmem:[#allocation5] sm:$0xff]
    %v181 = vld [vmem:[#allocation5 + $0x8] sm:$0xff]
    %v182 = vld [vmem:[#allocation5 + $0x10] sm:$0xff]
    %v183 = vld [vmem:[#allocation5 + $0x18] sm:$0xff]
    %184 = vmatprep.subr.mxu0 0.0
    %v185 = vand.u32 %v127, 4294901760
    %186 = vmatpush1.msra.mxu0 %v185
    %187 = vmatprep.subr.mxu0 0.0
    %v188 = vand.u32 %v126, 4294901760
    %189 = vmatpush1.msra.mxu0 %v188
    %190 = vmatprep.subr.mxu0 0.0
    %v191 = vand.u32 %v125, 4294901760
    %192 = vmatpush1.msra.mxu0 %v191
    %193 = vmatprep.subr.mxu0 0.0
    %v194 = vand.u32 %v124, 4294901760
    %195 = vmatpush1.msra.mxu0 %v194
    %196 = vmatprep.subr.mxu0 0.0
    %v197 = vand.u32 %v123, 4294901760
    %198 = vmatpush1.msra.mxu0 %v197
    %199 = vmatprep.subr.mxu0 0.0
    %v200 = vand.u32 %v122, 4294901760
    %201 = vmatpush1.msra.mxu0 %v200
    %202 = vmatprep.subr.mxu0 0.0
    %v203 = vand.u32 %v121, 4294901760
    %204 = vmatpush1.msra.mxu0 %v203
    %205 = vmatprep.subr.mxu0 0.0
    %v206 = vand.u32 %v120, 4294901760
    %207 = vmatpush1.msra.mxu0 %v206
    %208 = vmatprep.subr.mxu0 0.0
    %v209 = vand.u32 %v119, 4294901760
    %210 = vmatpush1.msra.mxu0 %v209
    %211 = vmatprep.subr.mxu0 0.0
    %v212 = vand.u32 %v118, 4294901760
    %213 = vmatpush1.msra.mxu0 %v212
    %214 = vmatprep.subr.mxu0 0.0
    %v215 = vand.u32 %v117, 4294901760
    %216 = vmatpush1.msra.mxu0 %v215
    %217 = vmatprep.subr.mxu0 0.0
    %v218 = vand.u32 %v116, 4294901760
    %219 = vmatpush1.msra.mxu0 %v218
    %220 = vmatprep.subr.mxu0 0.0
    %v221 = vand.u32 %v115, 4294901760
    %222 = vmatpush1.msra.mxu0 %v221
    %223 = vmatprep.subr.mxu0 0.0
    %v224 = vand.u32 %v114, 4294901760
    %225 = vmatpush1.msra.mxu0 %v224
    %226 = vmatprep.subr.mxu0 0.0
    %v227 = vand.u32 %v113, 4294901760
    %228 = vmatpush1.msra.mxu0 %v227
    %229 = vmatprep.subr.mxu0 0.0
    %v230 = vand.u32 %v112, 4294901760
    %231 = vmatpush1.msra.mxu0 %v230
    %232 = vmatprep.subr.mxu0 0.0
    %233 = vmatpush2.msra.mxu0 0.0
    %234 = vmatprep.subr.mxu0 0.0
    %235 = vmatpush2.msra.mxu0 0.0
    %236 = vmatprep.subr.mxu0 0.0
    %237 = vmatpush2.msra.mxu0 0.0
    %238 = vmatprep.subr.mxu0 0.0
    %239 = vmatpush2.msra.mxu0 0.0
    %240 = vmatprep.subr.mxu0 0.0
    %241 = vmatpush2.msra.mxu0 0.0
    %242 = vmatprep.subr.mxu0 0.0
    %243 = vmatpush2.msra.mxu0 0.0
    %244 = vmatprep.subr.mxu0 0.0
    %245 = vmatpush2.msra.mxu0 0.0
    %246 = vmatprep.subr.mxu0 0.0
    %247 = vmatpush2.msra.mxu0 0.0
    %248 = vmatprep.subr.mxu0 0.0
    %249 = vmatpush2.msra.mxu0 0.0
    %250 = vmatprep.subr.mxu0 0.0
    %251 = vmatpush2.msra.mxu0 0.0
    %252 = vmatprep.subr.mxu0 0.0
    %253 = vmatpush2.msra.mxu0 0.0
    %254 = vmatprep.subr.mxu0 0.0
    %255 = vmatpush2.msra.mxu0 0.0
    %256 = vmatprep.subr.mxu0 0.0
    %257 = vmatpush2.msra.mxu0 0.0
    %258 = vmatprep.subr.mxu0 0.0
    %259 = vmatpush2.msra.mxu0 0.0
    %260 = vmatprep.subr.mxu0 0.0
    %261 = vmatpush2.msra.mxu0 0.0
    %262 = vmatprep.subr.mxu0 0.0
    %263 = vmatpush2.msra.mxu0 0.0
    %264 = vmatprep.mubr.f32.mxu0 0.0
    %v265 = vand.u32 %v180, 4294901760
    %v266 = vsub.f32 %v180, %v265
    %v267 = vand.u32 %v266, 4294901760
    %v268 = vsub.f32 %v266, %v267
    %v269 = vand.u32 %v268, 4294901760
    %270 = vmatmul.mubr.f32.gmra.mxu0 %v269
    %v271 = vpop.f32.mrf.mxu0
    %v272 = vadd.f32 0.0, %v271
    %v273 = vpop.f32.mrf.mxu0
    %274 = vmatprep.mubr.f32.mxu0 0.0
    %v275 = vand.u32 %v181, 4294901760
    %v276 = vsub.f32 %v181, %v275
    %v277 = vand.u32 %v276, 4294901760
    %v278 = vsub.f32 %v276, %v277
    %v279 = vand.u32 %v278, 4294901760
    %280 = vmatmul.mubr.f32.gmra.mxu0 %v279
    %v281 = vpop.f32.mrf.mxu0
    %v282 = vadd.f32 0.0, %v281
    %v283 = vpop.f32.mrf.mxu0
    %284 = vmatprep.mubr.f32.mxu0 0.0
    %v285 = vand.u32 %v182, 4294901760
    %v286 = vsub.f32 %v182, %v285
    %v287 = vand.u32 %v286, 4294901760
    %v288 = vsub.f32 %v286, %v287
    %v289 = vand.u32 %v288, 4294901760
    %290 = vmatmul.mubr.f32.gmra.mxu0 %v289
    %v291 = vpop.f32.mrf.mxu0
    %v292 = vadd.f32 0.0, %v291
    %v293 = vpop.f32.mrf.mxu0
    %294 = vmatprep.mubr.f32.mxu0 0.0
    %v295 = vand.u32 %v183, 4294901760
    %v296 = vsub.f32 %v183, %v295
    %v297 = vand.u32 %v296, 4294901760
    %v298 = vsub.f32 %v296, %v297
    %v299 = vand.u32 %v298, 4294901760
    %300 = vmatmul.mubr.f32.gmra.mxu0 %v299
    %v301 = vpop.f32.mrf.mxu0
    %v302 = vadd.f32 0.0, %v301
    %v303 = vpop.f32.mrf.mxu0
    %304 = vdwg.mxu0
    %305 = vmatprep.subr.mxu0 0.0
    %v306 = vand.u32 %v127, 4294901760
    %v307 = vsub.f32 %v127, %v306
    %v308 = vand.u32 %v307, 4294901760
    %v309 = vsub.f32 %v307, %v308
    %v310 = vand.u32 %v309, 4294901760
    %311 = vmatpush1.msra.mxu0 %v310
    %312 = vmatprep.subr.mxu0 0.0
    %v313 = vand.u32 %v126, 4294901760
    %v314 = vsub.f32 %v126, %v313
    %v315 = vand.u32 %v314, 4294901760
    %v316 = vsub.f32 %v314, %v315
    %v317 = vand.u32 %v316, 4294901760
    %318 = vmatpush1.msra.mxu0 %v317
    %319 = vmatprep.subr.mxu0 0.0
    %v320 = vand.u32 %v125, 4294901760
    %v321 = vsub.f32 %v125, %v320
    %v322 = vand.u32 %v321, 4294901760
    %v323 = vsub.f32 %v321, %v322
    %v324 = vand.u32 %v323, 4294901760
    %325 = vmatpush1.msra.mxu0 %v324
    %326 = vmatprep.subr.mxu0 0.0
    %v327 = vand.u32 %v124, 4294901760
    %v328 = vsub.f32 %v124, %v327
    %v329 = vand.u32 %v328, 4294901760
    %v330 = vsub.f32 %v328, %v329
    %v331 = vand.u32 %v330, 4294901760
    %332 = vmatpush1.msra.mxu0 %v331
    %333 = vmatprep.subr.mxu0 0.0
    %v334 = vand.u32 %v123, 4294901760
    %v335 = vsub.f32 %v123, %v334
    %v336 = vand.u32 %v335, 4294901760
    %v337 = vsub.f32 %v335, %v336
    %v338 = vand.u32 %v337, 4294901760
    %339 = vmatpush1.msra.mxu0 %v338
    %340 = vmatprep.subr.mxu0 0.0
    %v341 = vand.u32 %v122, 4294901760
    %v342 = vsub.f32 %v122, %v341
    %v343 = vand.u32 %v342, 4294901760
    %v344 = vsub.f32 %v342, %v343
    %v345 = vand.u32 %v344, 4294901760
    %346 = vmatpush1.msra.mxu0 %v345
    %347 = vmatprep.subr.mxu0 0.0
    %v348 = vand.u32 %v121, 4294901760
    %v349 = vsub.f32 %v121, %v348
    %v350 = vand.u32 %v349, 4294901760
    %v351 = vsub.f32 %v349, %v350
    %v352 = vand.u32 %v351, 4294901760
    %353 = vmatpush1.msra.mxu0 %v352
    %354 = vmatprep.subr.mxu0 0.0
    %v355 = vand.u32 %v120, 4294901760
    %v356 = vsub.f32 %v120, %v355
    %v357 = vand.u32 %v356, 4294901760
    %v358 = vsub.f32 %v356, %v357
    %v359 = vand.u32 %v358, 4294901760
    %360 = vmatpush1.msra.mxu0 %v359
    %361 = vmatprep.subr.mxu0 0.0
    %v362 = vand.u32 %v119, 4294901760
    %v363 = vsub.f32 %v119, %v362
    %v364 = vand.u32 %v363, 4294901760
    %v365 = vsub.f32 %v363, %v364
    %v366 = vand.u32 %v365, 4294901760
    %367 = vmatpush1.msra.mxu0 %v366
    %368 = vmatprep.subr.mxu0 0.0
    %v369 = vand.u32 %v118, 4294901760
    %v370 = vsub.f32 %v118, %v369
    %v371 = vand.u32 %v370, 4294901760
    %v372 = vsub.f32 %v370, %v371
    %v373 = vand.u32 %v372, 4294901760
    %374 = vmatpush1.msra.mxu0 %v373
    %375 = vmatprep.subr.mxu0 0.0
    %v376 = vand.u32 %v117, 4294901760
    %v377 = vsub.f32 %v117, %v376
    %v378 = vand.u32 %v377, 4294901760
    %v379 = vsub.f32 %v377, %v378
    %v380 = vand.u32 %v379, 4294901760
    %381 = vmatpush1.msra.mxu0 %v380
    %382 = vmatprep.subr.mxu0 0.0
    %v383 = vand.u32 %v116, 4294901760
    %v384 = vsub.f32 %v116, %v383
    %v385 = vand.u32 %v384, 4294901760
    %v386 = vsub.f32 %v384, %v385
    %v387 = vand.u32 %v386, 4294901760
    %388 = vmatpush1.msra.mxu0 %v387
    %389 = vmatprep.subr.mxu0 0.0
    %v390 = vand.u32 %v115, 4294901760
    %v391 = vsub.f32 %v115, %v390
    %v392 = vand.u32 %v391, 4294901760
    %v393 = vsub.f32 %v391, %v392
    %v394 = vand.u32 %v393, 4294901760
    %395 = vmatpush1.msra.mxu0 %v394
    %396 = vmatprep.subr.mxu0 0.0
    %v397 = vand.u32 %v114, 4294901760
    %v398 = vsub.f32 %v114, %v397
    %v399 = vand.u32 %v398, 4294901760
    %v400 = vsub.f32 %v398, %v399
    %v401 = vand.u32 %v400, 4294901760
    %402 = vmatpush1.msra.mxu0 %v401
    %403 = vmatprep.subr.mxu0 0.0
    %v404 = vand.u32 %v113, 4294901760
    %v405 = vsub.f32 %v113, %v404
    %v406 = vand.u32 %v405, 4294901760
    %v407 = vsub.f32 %v405, %v406
    %v408 = vand.u32 %v407, 4294901760
    %409 = vmatpush1.msra.mxu0 %v408
    %410 = vmatprep.subr.mxu0 0.0
    %v411 = vand.u32 %v112, 4294901760
    %v412 = vsub.f32 %v112, %v411
    %v413 = vand.u32 %v412, 4294901760
    %v414 = vsub.f32 %v412, %v413
    %v415 = vand.u32 %v414, 4294901760
    %416 = vmatpush1.msra.mxu0 %v415
    %417 = vmatprep.subr.mxu0 0.0
    %418 = vmatpush2.msra.mxu0 0.0
    %419 = vmatprep.subr.mxu0 0.0
    %420 = vmatpush2.msra.mxu0 0.0
    %421 = vmatprep.subr.mxu0 0.0
    %422 = vmatpush2.msra.mxu0 0.0
    %423 = vmatprep.subr.mxu0 0.0
    %424 = vmatpush2.msra.mxu0 0.0
    %425 = vmatprep.subr.mxu0 0.0
    %426 = vmatpush2.msra.mxu0 0.0
    %427 = vmatprep.subr.mxu0 0.0
    %428 = vmatpush2.msra.mxu0 0.0
    %429 = vmatprep.subr.mxu0 0.0
    %430 = vmatpush2.msra.mxu0 0.0
    %431 = vmatprep.subr.mxu0 0.0
    %432 = vmatpush2.msra.mxu0 0.0
    %433 = vmatprep.subr.mxu0 0.0
    %434 = vmatpush2.msra.mxu0 0.0
    %435 = vmatprep.subr.mxu0 0.0
    %436 = vmatpush2.msra.mxu0 0.0
    %437 = vmatprep.subr.mxu0 0.0
    %438 = vmatpush2.msra.mxu0 0.0
    %439 = vmatprep.subr.mxu0 0.0
    %440 = vmatpush2.msra.mxu0 0.0
    %441 = vmatprep.subr.mxu0 0.0
    %442 = vmatpush2.msra.mxu0 0.0
    %443 = vmatprep.subr.mxu0 0.0
    %444 = vmatpush2.msra.mxu0 0.0
    %445 = vmatprep.subr.mxu0 0.0
    %446 = vmatpush2.msra.mxu0 0.0
    %447 = vmatprep.subr.mxu0 0.0
    %448 = vmatpush2.msra.mxu0 0.0
    %449 = vmatprep.mubr.f32.mxu0 0.0
    %v450 = vand.u32 %v180, 4294901760
    %451 = vmatmul.mubr.f32.gmra.mxu0 %v450
    %v452 = vpop.f32.mrf.mxu0
    %v453 = vadd.f32 %v272, %v452
    %v454 = vpop.f32.mrf.mxu0
    %455 = vmatprep.mubr.f32.mxu0 0.0
    %v456 = vand.u32 %v181, 4294901760
    %457 = vmatmul.mubr.f32.gmra.mxu0 %v456
    %v458 = vpop.f32.mrf.mxu0
    %v459 = vadd.f32 %v282, %v458
    %v460 = vpop.f32.mrf.mxu0
    %461 = vmatprep.mubr.f32.mxu0 0.0
    %v462 = vand.u32 %v182, 4294901760
    %463 = vmatmul.mubr.f32.gmra.mxu0 %v462
    %v464 = vpop.f32.mrf.mxu0
    %v465 = vadd.f32 %v292, %v464
    %v466 = vpop.f32.mrf.mxu0
    %467 = vmatprep.mubr.f32.mxu0 0.0
    %v468 = vand.u32 %v183, 4294901760
    %469 = vmatmul.mubr.f32.gmra.mxu0 %v468
    %v470 = vpop.f32.mrf.mxu0
    %v471 = vadd.f32 %v302, %v470
    %v472 = vpop.f32.mrf.mxu0
    %473 = vdwg.mxu0
    %474 = vmatprep.subr.mxu0 0.0
    %v475 = vand.u32 %v127, 4294901760
    %v476 = vsub.f32 %v127, %v475
    %477 = vmatpush1.msra.mxu0 %v476
    %478 = vmatprep.subr.mxu0 0.0
    %v479 = vand.u32 %v126, 4294901760
    %v480 = vsub.f32 %v126, %v479
    %481 = vmatpush1.msra.mxu0 %v480
    %482 = vmatprep.subr.mxu0 0.0
    %v483 = vand.u32 %v125, 4294901760
    %v484 = vsub.f32 %v125, %v483
    %485 = vmatpush1.msra.mxu0 %v484
    %486 = vmatprep.subr.mxu0 0.0
    %v487 = vand.u32 %v124, 4294901760
    %v488 = vsub.f32 %v124, %v487
    %489 = vmatpush1.msra.mxu0 %v488
    %490 = vmatprep.subr.mxu0 0.0
    %v491 = vand.u32 %v123, 4294901760
    %v492 = vsub.f32 %v123, %v491
    %493 = vmatpush1.msra.mxu0 %v492
    %494 = vmatprep.subr.mxu0 0.0
    %v495 = vand.u32 %v122, 4294901760
    %v496 = vsub.f32 %v122, %v495
    %497 = vmatpush1.msra.mxu0 %v496
    %498 = vmatprep.subr.mxu0 0.0
    %v499 = vand.u32 %v121, 4294901760
    %v500 = vsub.f32 %v121, %v499
    %501 = vmatpush1.msra.mxu0 %v500
    %502 = vmatprep.subr.mxu0 0.0
    %v503 = vand.u32 %v120, 4294901760
    %v504 = vsub.f32 %v120, %v503
    %505 = vmatpush1.msra.mxu0 %v504
    %506 = vmatprep.subr.mxu0 0.0
    %v507 = vand.u32 %v119, 4294901760
    %v508 = vsub.f32 %v119, %v507
    %509 = vmatpush1.msra.mxu0 %v508
    %510 = vmatprep.subr.mxu0 0.0
    %v511 = vand.u32 %v118, 4294901760
    %v512 = vsub.f32 %v118, %v511
    %513 = vmatpush1.msra.mxu0 %v512
    %514 = vmatprep.subr.mxu0 0.0
    %v515 = vand.u32 %v117, 4294901760
    %v516 = vsub.f32 %v117, %v515
    %517 = vmatpush1.msra.mxu0 %v516
    %518 = vmatprep.subr.mxu0 0.0
    %v519 = vand.u32 %v116, 4294901760
    %v520 = vsub.f32 %v116, %v519
    %521 = vmatpush1.msra.mxu0 %v520
    %522 = vmatprep.subr.mxu0 0.0
    %v523 = vand.u32 %v115, 4294901760
    %v524 = vsub.f32 %v115, %v523
    %525 = vmatpush1.msra.mxu0 %v524
    %526 = vmatprep.subr.mxu0 0.0
    %v527 = vand.u32 %v114, 4294901760
    %v528 = vsub.f32 %v114, %v527
    %529 = vmatpush1.msra.mxu0 %v528
    %530 = vmatprep.subr.mxu0 0.0
    %v531 = vand.u32 %v113, 4294901760
    %v532 = vsub.f32 %v113, %v531
    %533 = vmatpush1.msra.mxu0 %v532
    %534 = vmatprep.subr.mxu0 0.0
    %v535 = vand.u32 %v112, 4294901760
    %v536 = vsub.f32 %v112, %v535
    %537 = vmatpush1.msra.mxu0 %v536
    %538 = vmatprep.subr.mxu0 0.0
    %539 = vmatpush2.msra.mxu0 0.0
    %540 = vmatprep.subr.mxu0 0.0
    %541 = vmatpush2.msra.mxu0 0.0
    %542 = vmatprep.subr.mxu0 0.0
    %543 = vmatpush2.msra.mxu0 0.0
    %544 = vmatprep.subr.mxu0 0.0
    %545 = vmatpush2.msra.mxu0 0.0
    %546 = vmatprep.subr.mxu0 0.0
    %547 = vmatpush2.msra.mxu0 0.0
    %548 = vmatprep.subr.mxu0 0.0
    %549 = vmatpush2.msra.mxu0 0.0
    %550 = vmatprep.subr.mxu0 0.0
    %551 = vmatpush2.msra.mxu0 0.0
    %552 = vmatprep.subr.mxu0 0.0
    %553 = vmatpush2.msra.mxu0 0.0
    %554 = vmatprep.subr.mxu0 0.0
    %555 = vmatpush2.msra.mxu0 0.0
    %556 = vmatprep.subr.mxu0 0.0
    %557 = vmatpush2.msra.mxu0 0.0
    %558 = vmatprep.subr.mxu0 0.0
    %559 = vmatpush2.msra.mxu0 0.0
    %560 = vmatprep.subr.mxu0 0.0
    %561 = vmatpush2.msra.mxu0 0.0
    %562 = vmatprep.subr.mxu0 0.0
    %563 = vmatpush2.msra.mxu0 0.0
    %564 = vmatprep.subr.mxu0 0.0
    %565 = vmatpush2.msra.mxu0 0.0
    %566 = vmatprep.subr.mxu0 0.0
    %567 = vmatpush2.msra.mxu0 0.0
    %568 = vmatprep.subr.mxu0 0.0
    %569 = vmatpush2.msra.mxu0 0.0
    %570 = vmatprep.mubr.f32.mxu0 0.0
    %v571 = vand.u32 %v180, 4294901760
    %v572 = vsub.f32 %v180, %v571
    %573 = vmatmul.mubr.f32.gmra.mxu0 %v572
    %v574 = vpop.f32.mrf.mxu0
    %v575 = vadd.f32 %v453, %v574
    %v576 = vpop.f32.mrf.mxu0
    %577 = vmatprep.mubr.f32.mxu0 0.0
    %v578 = vand.u32 %v181, 4294901760
    %v579 = vsub.f32 %v181, %v578
    %580 = vmatmul.mubr.f32.gmra.mxu0 %v579
    %v581 = vpop.f32.mrf.mxu0
    %v582 = vadd.f32 %v459, %v581
    %v583 = vpop.f32.mrf.mxu0
    %584 = vmatprep.mubr.f32.mxu0 0.0
    %v585 = vand.u32 %v182, 4294901760
    %v586 = vsub.f32 %v182, %v585
    %587 = vmatmul.mubr.f32.gmra.mxu0 %v586
    %v588 = vpop.f32.mrf.mxu0
    %v589 = vadd.f32 %v465, %v588
    %v590 = vpop.f32.mrf.mxu0
    %591 = vmatprep.mubr.f32.mxu0 0.0
    %v592 = vand.u32 %v183, 4294901760
    %v593 = vsub.f32 %v183, %v592
    %594 = vmatmul.mubr.f32.gmra.mxu0 %v593
    %v595 = vpop.f32.mrf.mxu0
    %v596 = vadd.f32 %v471, %v595
    %v597 = vpop.f32.mrf.mxu0
    %598 = vdwg.mxu0
    %599 = vmatprep.subr.mxu0 0.0
    %v600 = vand.u32 %v127, 4294901760
    %601 = vmatpush1.msra.mxu0 %v600
    %602 = vmatprep.subr.mxu0 0.0
    %v603 = vand.u32 %v126, 4294901760
    %604 = vmatpush1.msra.mxu0 %v603
    %605 = vmatprep.subr.mxu0 0.0
    %v606 = vand.u32 %v125, 4294901760
    %607 = vmatpush1.msra.mxu0 %v606
    %608 = vmatprep.subr.mxu0 0.0
    %v609 = vand.u32 %v124, 4294901760
    %610 = vmatpush1.msra.mxu0 %v609
    %611 = vmatprep.subr.mxu0 0.0
    %v612 = vand.u32 %v123, 4294901760
    %613 = vmatpush1.msra.mxu0 %v612
    %614 = vmatprep.subr.mxu0 0.0
    %v615 = vand.u32 %v122, 4294901760
    %616 = vmatpush1.msra.mxu0 %v615
    %617 = vmatprep.subr.mxu0 0.0
    %v618 = vand.u32 %v121, 4294901760
    %619 = vmatpush1.msra.mxu0 %v618
    %620 = vmatprep.subr.mxu0 0.0
    %v621 = vand.u32 %v120, 4294901760
    %622 = vmatpush1.msra.mxu0 %v621
    %623 = vmatprep.subr.mxu0 0.0
    %v624 = vand.u32 %v119, 4294901760
    %625 = vmatpush1.msra.mxu0 %v624
    %626 = vmatprep.subr.mxu0 0.0
    %v627 = vand.u32 %v118, 4294901760
    %628 = vmatpush1.msra.mxu0 %v627
    %629 = vmatprep.subr.mxu0 0.0
    %v630 = vand.u32 %v117, 4294901760
    %631 = vmatpush1.msra.mxu0 %v630
    %632 = vmatprep.subr.mxu0 0.0
    %v633 = vand.u32 %v116, 4294901760
    %634 = vmatpush1.msra.mxu0 %v633
    %635 = vmatprep.subr.mxu0 0.0
    %v636 = vand.u32 %v115, 4294901760
    %637 = vmatpush1.msra.mxu0 %v636
    %638 = vmatprep.subr.mxu0 0.0
    %v639 = vand.u32 %v114, 4294901760
    %640 = vmatpush1.msra.mxu0 %v639
    %641 = vmatprep.subr.mxu0 0.0
    %v642 = vand.u32 %v113, 4294901760
    %643 = vmatpush1.msra.mxu0 %v642
    %644 = vmatprep.subr.mxu0 0.0
    %v645 = vand.u32 %v112, 4294901760
    %646 = vmatpush1.msra.mxu0 %v645
    %647 = vmatprep.subr.mxu0 0.0
    %648 = vmatpush2.msra.mxu0 0.0
    %649 = vmatprep.subr.mxu0 0.0
    %650 = vmatpush2.msra.mxu0 0.0
    %651 = vmatprep.subr.mxu0 0.0
    %652 = vmatpush2.msra.mxu0 0.0
    %653 = vmatprep.subr.mxu0 0.0
    %654 = vmatpush2.msra.mxu0 0.0
    %655 = vmatprep.subr.mxu0 0.0
    %656 = vmatpush2.msra.mxu0 0.0
    %657 = vmatprep.subr.mxu0 0.0
    %658 = vmatpush2.msra.mxu0 0.0
    %659 = vmatprep.subr.mxu0 0.0
    %660 = vmatpush2.msra.mxu0 0.0
    %661 = vmatprep.subr.mxu0 0.0
    %662 = vmatpush2.msra.mxu0 0.0
    %663 = vmatprep.subr.mxu0 0.0
    %664 = vmatpush2.msra.mxu0 0.0
    %665 = vmatprep.subr.mxu0 0.0
    %666 = vmatpush2.msra.mxu0 0.0
    %667 = vmatprep.subr.mxu0 0.0
    %668 = vmatpush2.msra.mxu0 0.0
    %669 = vmatprep.subr.mxu0 0.0
    %670 = vmatpush2.msra.mxu0 0.0
    %671 = vmatprep.subr.mxu0 0.0
    %672 = vmatpush2.msra.mxu0 0.0
    %673 = vmatprep.subr.mxu0 0.0
    %674 = vmatpush2.msra.mxu0 0.0
    %675 = vmatprep.subr.mxu0 0.0
    %676 = vmatpush2.msra.mxu0 0.0
    %677 = vmatprep.subr.mxu0 0.0
    %678 = vmatpush2.msra.mxu0 0.0
    %679 = vmatprep.mubr.f32.mxu0 0.0
    %v680 = vand.u32 %v180, 4294901760
    %v681 = vsub.f32 %v180, %v680
    %v682 = vand.u32 %v681, 4294901760
    %683 = vmatmul.mubr.f32.gmra.mxu0 %v682
    %v684 = vpop.f32.mrf.mxu0
    %v685 = vadd.f32 %v575, %v684
    %v686 = vpop.f32.mrf.mxu0
    %687 = vmatprep.mubr.f32.mxu0 0.0
    %v688 = vand.u32 %v181, 4294901760
    %v689 = vsub.f32 %v181, %v688
    %v690 = vand.u32 %v689, 4294901760
    %691 = vmatmul.mubr.f32.gmra.mxu0 %v690
    %v692 = vpop.f32.mrf.mxu0
    %v693 = vadd.f32 %v582, %v692
    %v694 = vpop.f32.mrf.mxu0
    %695 = vmatprep.mubr.f32.mxu0 0.0
    %v696 = vand.u32 %v182, 4294901760
    %v697 = vsub.f32 %v182, %v696
    %v698 = vand.u32 %v697, 4294901760
    %699 = vmatmul.mubr.f32.gmra.mxu0 %v698
    %v700 = vpop.f32.mrf.mxu0
    %v701 = vadd.f32 %v589, %v700
    %v702 = vpop.f32.mrf.mxu0
    %703 = vmatprep.mubr.f32.mxu0 0.0
    %v704 = vand.u32 %v183, 4294901760
    %v705 = vsub.f32 %v183, %v704
    %v706 = vand.u32 %v705, 4294901760
    %707 = vmatmul.mubr.f32.gmra.mxu0 %v706
    %v708 = vpop.f32.mrf.mxu0
    %v709 = vadd.f32 %v596, %v708
    %v710 = vpop.f32.mrf.mxu0
    %711 = vdwg.mxu0
    %712 = vmatprep.subr.mxu0 0.0
    %v713 = vand.u32 %v127, 4294901760
    %v714 = vsub.f32 %v127, %v713
    %v715 = vand.u32 %v714, 4294901760
    %716 = vmatpush1.msra.mxu0 %v715
    %717 = vmatprep.subr.mxu0 0.0
    %v718 = vand.u32 %v126, 4294901760
    %v719 = vsub.f32 %v126, %v718
    %v720 = vand.u32 %v719, 4294901760
    %721 = vmatpush1.msra.mxu0 %v720
    %722 = vmatprep.subr.mxu0 0.0
    %v723 = vand.u32 %v125, 4294901760
    %v724 = vsub.f32 %v125, %v723
    %v725 = vand.u32 %v724, 4294901760
    %726 = vmatpush1.msra.mxu0 %v725
    %727 = vmatprep.subr.mxu0 0.0
    %v728 = vand.u32 %v124, 4294901760
    %v729 = vsub.f32 %v124, %v728
    %v730 = vand.u32 %v729, 4294901760
    %731 = vmatpush1.msra.mxu0 %v730
    %732 = vmatprep.subr.mxu0 0.0
    %v733 = vand.u32 %v123, 4294901760
    %v734 = vsub.f32 %v123, %v733
    %v735 = vand.u32 %v734, 4294901760
    %736 = vmatpush1.msra.mxu0 %v735
    %737 = vmatprep.subr.mxu0 0.0
    %v738 = vand.u32 %v122, 4294901760
    %v739 = vsub.f32 %v122, %v738
    %v740 = vand.u32 %v739, 4294901760
    %741 = vmatpush1.msra.mxu0 %v740
    %742 = vmatprep.subr.mxu0 0.0
    %v743 = vand.u32 %v121, 4294901760
    %v744 = vsub.f32 %v121, %v743
    %v745 = vand.u32 %v744, 4294901760
    %746 = vmatpush1.msra.mxu0 %v745
    %747 = vmatprep.subr.mxu0 0.0
    %v748 = vand.u32 %v120, 4294901760
    %v749 = vsub.f32 %v120, %v748
    %v750 = vand.u32 %v749, 4294901760
    %751 = vmatpush1.msra.mxu0 %v750
    %752 = vmatprep.subr.mxu0 0.0
    %v753 = vand.u32 %v119, 4294901760
    %v754 = vsub.f32 %v119, %v753
    %v755 = vand.u32 %v754, 4294901760
    %756 = vmatpush1.msra.mxu0 %v755
    %757 = vmatprep.subr.mxu0 0.0
    %v758 = vand.u32 %v118, 4294901760
    %v759 = vsub.f32 %v118, %v758
    %v760 = vand.u32 %v759, 4294901760
    %761 = vmatpush1.msra.mxu0 %v760
    %762 = vmatprep.subr.mxu0 0.0
    %v763 = vand.u32 %v117, 4294901760
    %v764 = vsub.f32 %v117, %v763
    %v765 = vand.u32 %v764, 4294901760
    %766 = vmatpush1.msra.mxu0 %v765
    %767 = vmatprep.subr.mxu0 0.0
    %v768 = vand.u32 %v116, 4294901760
    %v769 = vsub.f32 %v116, %v768
    %v770 = vand.u32 %v769, 4294901760
    %771 = vmatpush1.msra.mxu0 %v770
    %772 = vmatprep.subr.mxu0 0.0
    %v773 = vand.u32 %v115, 4294901760
    %v774 = vsub.f32 %v115, %v773
    %v775 = vand.u32 %v774, 4294901760
    %776 = vmatpush1.msra.mxu0 %v775
    %777 = vmatprep.subr.mxu0 0.0
    %v778 = vand.u32 %v114, 4294901760
    %v779 = vsub.f32 %v114, %v778
    %v780 = vand.u32 %v779, 4294901760
    %781 = vmatpush1.msra.mxu0 %v780
    %782 = vmatprep.subr.mxu0 0.0
    %v783 = vand.u32 %v113, 4294901760
    %v784 = vsub.f32 %v113, %v783
    %v785 = vand.u32 %v784, 4294901760
    %786 = vmatpush1.msra.mxu0 %v785
    %787 = vmatprep.subr.mxu0 0.0
    %v788 = vand.u32 %v112, 4294901760
    %v789 = vsub.f32 %v112, %v788
    %v790 = vand.u32 %v789, 4294901760
    %791 = vmatpush1.msra.mxu0 %v790
    %792 = vmatprep.subr.mxu0 0.0
    %793 = vmatpush2.msra.mxu0 0.0
    %794 = vmatprep.subr.mxu0 0.0
    %795 = vmatpush2.msra.mxu0 0.0
    %796 = vmatprep.subr.mxu0 0.0
    %797 = vmatpush2.msra.mxu0 0.0
    %798 = vmatprep.subr.mxu0 0.0
    %799 = vmatpush2.msra.mxu0 0.0
    %800 = vmatprep.subr.mxu0 0.0
    %801 = vmatpush2.msra.mxu0 0.0
    %802 = vmatprep.subr.mxu0 0.0
    %803 = vmatpush2.msra.mxu0 0.0
    %804 = vmatprep.subr.mxu0 0.0
    %805 = vmatpush2.msra.mxu0 0.0
    %806 = vmatprep.subr.mxu0 0.0
    %807 = vmatpush2.msra.mxu0 0.0
    %808 = vmatprep.subr.mxu0 0.0
    %809 = vmatpush2.msra.mxu0 0.0
    %810 = vmatprep.subr.mxu0 0.0
    %811 = vmatpush2.msra.mxu0 0.0
    %812 = vmatprep.subr.mxu0 0.0
    %813 = vmatpush2.msra.mxu0 0.0
    %814 = vmatprep.subr.mxu0 0.0
    %815 = vmatpush2.msra.mxu0 0.0
    %816 = vmatprep.subr.mxu0 0.0
    %817 = vmatpush2.msra.mxu0 0.0
    %818 = vmatprep.subr.mxu0 0.0
    %819 = vmatpush2.msra.mxu0 0.0
    %820 = vmatprep.subr.mxu0 0.0
    %821 = vmatpush2.msra.mxu0 0.0
    %822 = vmatprep.subr.mxu0 0.0
    %823 = vmatpush2.msra.mxu0 0.0
    %824 = vmatprep.mubr.f32.mxu0 0.0
    %v825 = vand.u32 %v180, 4294901760
    %826 = vmatmul.mubr.f32.gmra.mxu0 %v825
    %v827 = vpop.f32.mrf.mxu0
    %v828 = vadd.f32 %v685, %v827
    %v829 = vpop.f32.mrf.mxu0
    %830 = vmatprep.mubr.f32.mxu0 0.0
    %v831 = vand.u32 %v181, 4294901760
    %832 = vmatmul.mubr.f32.gmra.mxu0 %v831
    %v833 = vpop.f32.mrf.mxu0
    %v834 = vadd.f32 %v693, %v833
    %v835 = vpop.f32.mrf.mxu0
    %836 = vmatprep.mubr.f32.mxu0 0.0
    %v837 = vand.u32 %v182, 4294901760
    %838 = vmatmul.mubr.f32.gmra.mxu0 %v837
    %v839 = vpop.f32.mrf.mxu0
    %v840 = vadd.f32 %v701, %v839
    %v841 = vpop.f32.mrf.mxu0
    %842 = vmatprep.mubr.f32.mxu0 0.0
    %v843 = vand.u32 %v183, 4294901760
    %844 = vmatmul.mubr.f32.gmra.mxu0 %v843
    %v845 = vpop.f32.mrf.mxu0
    %v846 = vadd.f32 %v709, %v845
    %v847 = vpop.f32.mrf.mxu0
    %848 = vdwg.mxu0
    %849 = vmatprep.subr.mxu0 0.0
    %v850 = vand.u32 %v127, 4294901760
    %851 = vmatpush1.msra.mxu0 %v850
    %852 = vmatprep.subr.mxu0 0.0
    %v853 = vand.u32 %v126, 4294901760
    %854 = vmatpush1.msra.mxu0 %v853
    %855 = vmatprep.subr.mxu0 0.0
    %v856 = vand.u32 %v125, 4294901760
    %857 = vmatpush1.msra.mxu0 %v856
    %858 = vmatprep.subr.mxu0 0.0
    %v859 = vand.u32 %v124, 4294901760
    %860 = vmatpush1.msra.mxu0 %v859
    %861 = vmatprep.subr.mxu0 0.0
    %v862 = vand.u32 %v123, 4294901760
    %863 = vmatpush1.msra.mxu0 %v862
    %864 = vmatprep.subr.mxu0 0.0
    %v865 = vand.u32 %v122, 4294901760
    %866 = vmatpush1.msra.mxu0 %v865
    %867 = vmatprep.subr.mxu0 0.0
    %v868 = vand.u32 %v121, 4294901760
    %869 = vmatpush1.msra.mxu0 %v868
    %870 = vmatprep.subr.mxu0 0.0
    %v871 = vand.u32 %v120, 4294901760
    %872 = vmatpush1.msra.mxu0 %v871
    %873 = vmatprep.subr.mxu0 0.0
    %v874 = vand.u32 %v119, 4294901760
    %875 = vmatpush1.msra.mxu0 %v874
    %876 = vmatprep.subr.mxu0 0.0
    %v877 = vand.u32 %v118, 4294901760
    %878 = vmatpush1.msra.mxu0 %v877
    %879 = vmatprep.subr.mxu0 0.0
    %v880 = vand.u32 %v117, 4294901760
    %881 = vmatpush1.msra.mxu0 %v880
    %882 = vmatprep.subr.mxu0 0.0
    %v883 = vand.u32 %v116, 4294901760
    %884 = vmatpush1.msra.mxu0 %v883
    %885 = vmatprep.subr.mxu0 0.0
    %v886 = vand.u32 %v115, 4294901760
    %887 = vmatpush1.msra.mxu0 %v886
    %888 = vmatprep.subr.mxu0 0.0
    %v889 = vand.u32 %v114, 4294901760
    %890 = vmatpush1.msra.mxu0 %v889
    %891 = vmatprep.subr.mxu0 0.0
    %v892 = vand.u32 %v113, 4294901760
    %893 = vmatpush1.msra.mxu0 %v892
    %894 = vmatprep.subr.mxu0 0.0
    %v895 = vand.u32 %v112, 4294901760
    %896 = vmatpush1.msra.mxu0 %v895
    %897 = vmatprep.subr.mxu0 0.0
    %898 = vmatpush2.msra.mxu0 0.0
    %899 = vmatprep.subr.mxu0 0.0
    %900 = vmatpush2.msra.mxu0 0.0
    %901 = vmatprep.subr.mxu0 0.0
    %902 = vmatpush2.msra.mxu0 0.0
    %903 = vmatprep.subr.mxu0 0.0
    %904 = vmatpush2.msra.mxu0 0.0
    %905 = vmatprep.subr.mxu0 0.0
    %906 = vmatpush2.msra.mxu0 0.0
    %907 = vmatprep.subr.mxu0 0.0
    %908 = vmatpush2.msra.mxu0 0.0
    %909 = vmatprep.subr.mxu0 0.0
    %910 = vmatpush2.msra.mxu0 0.0
    %911 = vmatprep.subr.mxu0 0.0
    %912 = vmatpush2.msra.mxu0 0.0
    %913 = vmatprep.subr.mxu0 0.0
    %914 = vmatpush2.msra.mxu0 0.0
    %915 = vmatprep.subr.mxu0 0.0
    %916 = vmatpush2.msra.mxu0 0.0
    %917 = vmatprep.subr.mxu0 0.0
    %918 = vmatpush2.msra.mxu0 0.0
    %919 = vmatprep.subr.mxu0 0.0
    %920 = vmatpush2.msra.mxu0 0.0
    %921 = vmatprep.subr.mxu0 0.0
    %922 = vmatpush2.msra.mxu0 0.0
    %923 = vmatprep.subr.mxu0 0.0
    %924 = vmatpush2.msra.mxu0 0.0
    %925 = vmatprep.subr.mxu0 0.0
    %926 = vmatpush2.msra.mxu0 0.0
    %927 = vmatprep.subr.mxu0 0.0
    %928 = vmatpush2.msra.mxu0 0.0
    %929 = vmatprep.mubr.f32.mxu0 0.0
    %v930 = vand.u32 %v180, 4294901760
    %931 = vmatmul.mubr.f32.gmra.mxu0 %v930
    %v932 = vpop.f32.mrf.mxu0
    %v933 = vadd.f32 %v828, %v932
    %v934 = vpop.f32.mrf.mxu0
    %935 = vmatprep.mubr.f32.mxu0 0.0
    %v936 = vand.u32 %v181, 4294901760
    %937 = vmatmul.mubr.f32.gmra.mxu0 %v936
    %v938 = vpop.f32.mrf.mxu0
    %v939 = vadd.f32 %v834, %v938
    %v940 = vpop.f32.mrf.mxu0
    %941 = vmatprep.mubr.f32.mxu0 0.0
    %v942 = vand.u32 %v182, 4294901760
    %943 = vmatmul.mubr.f32.gmra.mxu0 %v942
    %v944 = vpop.f32.mrf.mxu0
    %v945 = vadd.f32 %v840, %v944
    %v946 = vpop.f32.mrf.mxu0
    %947 = vmatprep.mubr.f32.mxu0 0.0
    %v948 = vand.u32 %v183, 4294901760
    %949 = vmatmul.mubr.f32.gmra.mxu0 %v948
    %v950 = vpop.f32.mrf.mxu0
    %v951 = vadd.f32 %v846, %v950
    %v952 = vpop.f32.mrf.mxu0
    %953 = vdwg.mxu0
    %v954 = vld [vmem:[#allocation7] sm:$0xff]
    %v955 = vld [vmem:[#allocation7 + $0x8] sm:$0xff]
    %v956 = vld [vmem:[#allocation7 + $0x10] sm:$0xff]
    %v957 = vld [vmem:[#allocation7 + $0x18] sm:$0xff]
    %958 = vmatprep.subr.mxu0 0.0
    %v959 = vand.u32 %v179, 4294901760
    %960 = vmatpush1.msra.mxu0 %v959
    %961 = vmatprep.subr.mxu0 0.0
    %v962 = vand.u32 %v178, 4294901760
    %963 = vmatpush1.msra.mxu0 %v962
    %964 = vmatprep.subr.mxu0 0.0
    %v965 = vand.u32 %v177, 4294901760
    %966 = vmatpush1.msra.mxu0 %v965
    %967 = vmatprep.subr.mxu0 0.0
    %v968 = vand.u32 %v176, 4294901760
    %969 = vmatpush1.msra.mxu0 %v968
    %970 = vmatprep.subr.mxu0 0.0
    %v971 = vand.u32 %v175, 4294901760
    %972 = vmatpush1.msra.mxu0 %v971
    %973 = vmatprep.subr.mxu0 0.0
    %v974 = vand.u32 %v174, 4294901760
    %975 = vmatpush1.msra.mxu0 %v974
    %976 = vmatprep.subr.mxu0 0.0
    %v977 = vand.u32 %v173, 4294901760
    %978 = vmatpush1.msra.mxu0 %v977
    %979 = vmatprep.subr.mxu0 0.0
    %v980 = vand.u32 %v172, 4294901760
    %981 = vmatpush1.msra.mxu0 %v980
    %982 = vmatprep.subr.mxu0 0.0
    %v983 = vand.u32 %v171, 4294901760
    %984 = vmatpush1.msra.mxu0 %v983
    %985 = vmatprep.subr.mxu0 0.0
    %v986 = vand.u32 %v170, 4294901760
    %987 = vmatpush1.msra.mxu0 %v986
    %988 = vmatprep.subr.mxu0 0.0
    %v989 = vand.u32 %v169, 4294901760
    %990 = vmatpush1.msra.mxu0 %v989
    %991 = vmatprep.subr.mxu0 0.0
    %v992 = vand.u32 %v168, 4294901760
    %993 = vmatpush1.msra.mxu0 %v992
    %994 = vmatprep.subr.mxu0 0.0
    %v995 = vand.u32 %v167, 4294901760
    %996 = vmatpush1.msra.mxu0 %v995
    %997 = vmatprep.subr.mxu0 0.0
    %v998 = vand.u32 %v166, 4294901760
    %999 = vmatpush1.msra.mxu0 %v998
    %1000 = vmatprep.subr.mxu0 0.0
    %v1001 = vand.u32 %v165, 4294901760
    %1002 = vmatpush1.msra.mxu0 %v1001
    %1003 = vmatprep.subr.mxu0 0.0
    %v1004 = vand.u32 %v164, 4294901760
    %1005 = vmatpush1.msra.mxu0 %v1004
    %1006 = vmatprep.subr.mxu0 0.0
    %1007 = vmatpush2.msra.mxu0 0.0
    %1008 = vmatprep.subr.mxu0 0.0
    %1009 = vmatpush2.msra.mxu0 0.0
    %1010 = vmatprep.subr.mxu0 0.0
    %1011 = vmatpush2.msra.mxu0 0.0
    %1012 = vmatprep.subr.mxu0 0.0
    %1013 = vmatpush2.msra.mxu0 0.0
    %1014 = vmatprep.subr.mxu0 0.0
    %1015 = vmatpush2.msra.mxu0 0.0
    %1016 = vmatprep.subr.mxu0 0.0
    %1017 = vmatpush2.msra.mxu0 0.0
    %1018 = vmatprep.subr.mxu0 0.0
    %1019 = vmatpush2.msra.mxu0 0.0
    %1020 = vmatprep.subr.mxu0 0.0
    %1021 = vmatpush2.msra.mxu0 0.0
    %1022 = vmatprep.subr.mxu0 0.0
    %1023 = vmatpush2.msra.mxu0 0.0
    %1024 = vmatprep.subr.mxu0 0.0
    %1025 = vmatpush2.msra.mxu0 0.0
    %1026 = vmatprep.subr.mxu0 0.0
    %1027 = vmatpush2.msra.mxu0 0.0
    %1028 = vmatprep.subr.mxu0 0.0
    %1029 = vmatpush2.msra.mxu0 0.0
    %1030 = vmatprep.subr.mxu0 0.0
    %1031 = vmatpush2.msra.mxu0 0.0
    %1032 = vmatprep.subr.mxu0 0.0
    %1033 = vmatpush2.msra.mxu0 0.0
    %1034 = vmatprep.subr.mxu0 0.0
    %1035 = vmatpush2.msra.mxu0 0.0
    %1036 = vmatprep.subr.mxu0 0.0
    %1037 = vmatpush2.msra.mxu0 0.0
    %1038 = vmatprep.mubr.f32.mxu0 0.0
    %v1039 = vand.u32 %v954, 4294901760
    %v1040 = vsub.f32 %v954, %v1039
    %v1041 = vand.u32 %v1040, 4294901760
    %v1042 = vsub.f32 %v1040, %v1041
    %v1043 = vand.u32 %v1042, 4294901760
    %1044 = vmatmul.mubr.f32.gmra.mxu0 %v1043
    %v1045 = vpop.f32.mrf.mxu0
    %v1046 = vadd.f32 0.0, %v1045
    %v1047 = vpop.f32.mrf.mxu0
    %1048 = vmatprep.mubr.f32.mxu0 0.0
    %v1049 = vand.u32 %v955, 4294901760
    %v1050 = vsub.f32 %v955, %v1049
    %v1051 = vand.u32 %v1050, 4294901760
    %v1052 = vsub.f32 %v1050, %v1051
    %v1053 = vand.u32 %v1052, 4294901760
    %1054 = vmatmul.mubr.f32.gmra.mxu0 %v1053
    %v1055 = vpop.f32.mrf.mxu0
    %v1056 = vadd.f32 0.0, %v1055
    %v1057 = vpop.f32.mrf.mxu0
    %1058 = vmatprep.mubr.f32.mxu0 0.0
    %v1059 = vand.u32 %v956, 4294901760
    %v1060 = vsub.f32 %v956, %v1059
    %v1061 = vand.u32 %v1060, 4294901760
    %v1062 = vsub.f32 %v1060, %v1061
    %v1063 = vand.u32 %v1062, 4294901760
    %1064 = vmatmul.mubr.f32.gmra.mxu0 %v1063
    %v1065 = vpop.f32.mrf.mxu0
    %v1066 = vadd.f32 0.0, %v1065
    %v1067 = vpop.f32.mrf.mxu0
    %1068 = vmatprep.mubr.f32.mxu0 0.0
    %v1069 = vand.u32 %v957, 4294901760
    %v1070 = vsub.f32 %v957, %v1069
    %v1071 = vand.u32 %v1070, 4294901760
    %v1072 = vsub.f32 %v1070, %v1071
    %v1073 = vand.u32 %v1072, 4294901760
    %1074 = vmatmul.mubr.f32.gmra.mxu0 %v1073
    %v1075 = vpop.f32.mrf.mxu0
    %v1076 = vadd.f32 0.0, %v1075
    %v1077 = vpop.f32.mrf.mxu0
    %1078 = vdwg.mxu0
    %1079 = vmatprep.subr.mxu0 0.0
    %v1080 = vand.u32 %v179, 4294901760
    %v1081 = vsub.f32 %v179, %v1080
    %v1082 = vand.u32 %v1081, 4294901760
    %v1083 = vsub.f32 %v1081, %v1082
    %v1084 = vand.u32 %v1083, 4294901760
    %1085 = vmatpush1.msra.mxu0 %v1084
    %1086 = vmatprep.subr.mxu0 0.0
    %v1087 = vand.u32 %v178, 4294901760
    %v1088 = vsub.f32 %v178, %v1087
    %v1089 = vand.u32 %v1088, 4294901760
    %v1090 = vsub.f32 %v1088, %v1089
    %v1091 = vand.u32 %v1090, 4294901760
    %1092 = vmatpush1.msra.mxu0 %v1091
    %1093 = vmatprep.subr.mxu0 0.0
    %v1094 = vand.u32 %v177, 4294901760
    %v1095 = vsub.f32 %v177, %v1094
    %v1096 = vand.u32 %v1095, 4294901760
    %v1097 = vsub.f32 %v1095, %v1096
    %v1098 = vand.u32 %v1097, 4294901760
    %1099 = vmatpush1.msra.mxu0 %v1098
    %1100 = vmatprep.subr.mxu0 0.0
    %v1101 = vand.u32 %v176, 4294901760
    %v1102 = vsub.f32 %v176, %v1101
    %v1103 = vand.u32 %v1102, 4294901760
    %v1104 = vsub.f32 %v1102, %v1103
    %v1105 = vand.u32 %v1104, 4294901760
    %1106 = vmatpush1.msra.mxu0 %v1105
    %1107 = vmatprep.subr.mxu0 0.0
    %v1108 = vand.u32 %v175, 4294901760
    %v1109 = vsub.f32 %v175, %v1108
    %v1110 = vand.u32 %v1109, 4294901760
    %v1111 = vsub.f32 %v1109, %v1110
    %v1112 = vand.u32 %v1111, 4294901760
    %1113 = vmatpush1.msra.mxu0 %v1112
    %1114 = vmatprep.subr.mxu0 0.0
    %v1115 = vand.u32 %v174, 4294901760
    %v1116 = vsub.f32 %v174, %v1115
    %v1117 = vand.u32 %v1116, 4294901760
    %v1118 = vsub.f32 %v1116, %v1117
    %v1119 = vand.u32 %v1118, 4294901760
    %1120 = vmatpush1.msra.mxu0 %v1119
    %1121 = vmatprep.subr.mxu0 0.0
    %v1122 = vand.u32 %v173, 4294901760
    %v1123 = vsub.f32 %v173, %v1122
    %v1124 = vand.u32 %v1123, 4294901760
    %v1125 = vsub.f32 %v1123, %v1124
    %v1126 = vand.u32 %v1125, 4294901760
    %1127 = vmatpush1.msra.mxu0 %v1126
    %1128 = vmatprep.subr.mxu0 0.0
    %v1129 = vand.u32 %v172, 4294901760
    %v1130 = vsub.f32 %v172, %v1129
    %v1131 = vand.u32 %v1130, 4294901760
    %v1132 = vsub.f32 %v1130, %v1131
    %v1133 = vand.u32 %v1132, 4294901760
    %1134 = vmatpush1.msra.mxu0 %v1133
    %1135 = vmatprep.subr.mxu0 0.0
    %v1136 = vand.u32 %v171, 4294901760
    %v1137 = vsub.f32 %v171, %v1136
    %v1138 = vand.u32 %v1137, 4294901760
    %v1139 = vsub.f32 %v1137, %v1138
    %v1140 = vand.u32 %v1139, 4294901760
    %1141 = vmatpush1.msra.mxu0 %v1140
    %1142 = vmatprep.subr.mxu0 0.0
    %v1143 = vand.u32 %v170, 4294901760
    %v1144 = vsub.f32 %v170, %v1143
    %v1145 = vand.u32 %v1144, 4294901760
    %v1146 = vsub.f32 %v1144, %v1145
    %v1147 = vand.u32 %v1146, 4294901760
    %1148 = vmatpush1.msra.mxu0 %v1147
    %1149 = vmatprep.subr.mxu0 0.0
    %v1150 = vand.u32 %v169, 4294901760
    %v1151 = vsub.f32 %v169, %v1150
    %v1152 = vand.u32 %v1151, 4294901760
    %v1153 = vsub.f32 %v1151, %v1152
    %v1154 = vand.u32 %v1153, 4294901760
    %1155 = vmatpush1.msra.mxu0 %v1154
    %1156 = vmatprep.subr.mxu0 0.0
    %v1157 = vand.u32 %v168, 4294901760
    %v1158 = vsub.f32 %v168, %v1157
    %v1159 = vand.u32 %v1158, 4294901760
    %v1160 = vsub.f32 %v1158, %v1159
    %v1161 = vand.u32 %v1160, 4294901760
    %1162 = vmatpush1.msra.mxu0 %v1161
    %1163 = vmatprep.subr.mxu0 0.0
    %v1164 = vand.u32 %v167, 4294901760
    %v1165 = vsub.f32 %v167, %v1164
    %v1166 = vand.u32 %v1165, 4294901760
    %v1167 = vsub.f32 %v1165, %v1166
    %v1168 = vand.u32 %v1167, 4294901760
    %1169 = vmatpush1.msra.mxu0 %v1168
    %1170 = vmatprep.subr.mxu0 0.0
    %v1171 = vand.u32 %v166, 4294901760
    %v1172 = vsub.f32 %v166, %v1171
    %v1173 = vand.u32 %v1172, 4294901760
    %v1174 = vsub.f32 %v1172, %v1173
    %v1175 = vand.u32 %v1174, 4294901760
    %1176 = vmatpush1.msra.mxu0 %v1175
    %1177 = vmatprep.subr.mxu0 0.0
    %v1178 = vand.u32 %v165, 4294901760
    %v1179 = vsub.f32 %v165, %v1178
    %v1180 = vand.u32 %v1179, 4294901760
    %v1181 = vsub.f32 %v1179, %v1180
    %v1182 = vand.u32 %v1181, 4294901760
    %1183 = vmatpush1.msra.mxu0 %v1182
    %1184 = vmatprep.subr.mxu0 0.0
    %v1185 = vand.u32 %v164, 4294901760
    %v1186 = vsub.f32 %v164, %v1185
    %v1187 = vand.u32 %v1186, 4294901760
    %v1188 = vsub.f32 %v1186, %v1187
    %v1189 = vand.u32 %v1188, 4294901760
    %1190 = vmatpush1.msra.mxu0 %v1189
    %1191 = vmatprep.subr.mxu0 0.0
    %1192 = vmatpush2.msra.mxu0 0.0
    %1193 = vmatprep.subr.mxu0 0.0
    %1194 = vmatpush2.msra.mxu0 0.0
    %1195 = vmatprep.subr.mxu0 0.0
    %1196 = vmatpush2.msra.mxu0 0.0
    %1197 = vmatprep.subr.mxu0 0.0
    %1198 = vmatpush2.msra.mxu0 0.0
    %1199 = vmatprep.subr.mxu0 0.0
    %1200 = vmatpush2.msra.mxu0 0.0
    %1201 = vmatprep.subr.mxu0 0.0
    %1202 = vmatpush2.msra.mxu0 0.0
    %1203 = vmatprep.subr.mxu0 0.0
    %1204 = vmatpush2.msra.mxu0 0.0
    %1205 = vmatprep.subr.mxu0 0.0
    %1206 = vmatpush2.msra.mxu0 0.0
    %1207 = vmatprep.subr.mxu0 0.0
    %1208 = vmatpush2.msra.mxu0 0.0
    %1209 = vmatprep.subr.mxu0 0.0
    %1210 = vmatpush2.msra.mxu0 0.0
    %1211 = vmatprep.subr.mxu0 0.0
    %1212 = vmatpush2.msra.mxu0 0.0
    %1213 = vmatprep.subr.mxu0 0.0
    %1214 = vmatpush2.msra.mxu0 0.0
    %1215 = vmatprep.subr.mxu0 0.0
    %1216 = vmatpush2.msra.mxu0 0.0
    %1217 = vmatprep.subr.mxu0 0.0
    %1218 = vmatpush2.msra.mxu0 0.0
    %1219 = vmatprep.subr.mxu0 0.0
    %1220 = vmatpush2.msra.mxu0 0.0
    %1221 = vmatprep.subr.mxu0 0.0
    %1222 = vmatpush2.msra.mxu0 0.0
    %1223 = vmatprep.mubr.f32.mxu0 0.0
    %v1224 = vand.u32 %v954, 4294901760
    %1225 = vmatmul.mubr.f32.gmra.mxu0 %v1224
    %v1226 = vpop.f32.mrf.mxu0
    %v1227 = vadd.f32 %v1046, %v1226
    %v1228 = vpop.f32.mrf.mxu0
    %1229 = vmatprep.mubr.f32.mxu0 0.0
    %v1230 = vand.u32 %v955, 4294901760
    %1231 = vmatmul.mubr.f32.gmra.mxu0 %v1230
    %v1232 = vpop.f32.mrf.mxu0
    %v1233 = vadd.f32 %v1056, %v1232
    %v1234 = vpop.f32.mrf.mxu0
    %1235 = vmatprep.mubr.f32.mxu0 0.0
    %v1236 = vand.u32 %v956, 4294901760
    %1237 = vmatmul.mubr.f32.gmra.mxu0 %v1236
    %v1238 = vpop.f32.mrf.mxu0
    %v1239 = vadd.f32 %v1066, %v1238
    %v1240 = vpop.f32.mrf.mxu0
    %1241 = vmatprep.mubr.f32.mxu0 0.0
    %v1242 = vand.u32 %v957, 4294901760
    %1243 = vmatmul.mubr.f32.gmra.mxu0 %v1242
    %v1244 = vpop.f32.mrf.mxu0
    %v1245 = vadd.f32 %v1076, %v1244
    %v1246 = vpop.f32.mrf.mxu0
    %1247 = vdwg.mxu0
    %1248 = vmatprep.subr.mxu0 0.0
    %v1249 = vand.u32 %v179, 4294901760
    %v1250 = vsub.f32 %v179, %v1249
    %1251 = vmatpush1.msra.mxu0 %v1250
    %1252 = vmatprep.subr.mxu0 0.0
    %v1253 = vand.u32 %v178, 4294901760
    %v1254 = vsub.f32 %v178, %v1253
    %1255 = vmatpush1.msra.mxu0 %v1254
    %1256 = vmatprep.subr.mxu0 0.0
    %v1257 = vand.u32 %v177, 4294901760
    %v1258 = vsub.f32 %v177, %v1257
    %1259 = vmatpush1.msra.mxu0 %v1258
    %1260 = vmatprep.subr.mxu0 0.0
    %v1261 = vand.u32 %v176, 4294901760
    %v1262 = vsub.f32 %v176, %v1261
    %1263 = vmatpush1.msra.mxu0 %v1262
    %1264 = vmatprep.subr.mxu0 0.0
    %v1265 = vand.u32 %v175, 4294901760
    %v1266 = vsub.f32 %v175, %v1265
    %1267 = vmatpush1.msra.mxu0 %v1266
    %1268 = vmatprep.subr.mxu0 0.0
    %v1269 = vand.u32 %v174, 4294901760
    %v1270 = vsub.f32 %v174, %v1269
    %1271 = vmatpush1.msra.mxu0 %v1270
    %1272 = vmatprep.subr.mxu0 0.0
    %v1273 = vand.u32 %v173, 4294901760
    %v1274 = vsub.f32 %v173, %v1273
    %1275 = vmatpush1.msra.mxu0 %v1274
    %1276 = vmatprep.subr.mxu0 0.0
    %v1277 = vand.u32 %v172, 4294901760
    %v1278 = vsub.f32 %v172, %v1277
    %1279 = vmatpush1.msra.mxu0 %v1278
    %1280 = vmatprep.subr.mxu0 0.0
    %v1281 = vand.u32 %v171, 4294901760
    %v1282 = vsub.f32 %v171, %v1281
    %1283 = vmatpush1.msra.mxu0 %v1282
    %1284 = vmatprep.subr.mxu0 0.0
    %v1285 = vand.u32 %v170, 4294901760
    %v1286 = vsub.f32 %v170, %v1285
    %1287 = vmatpush1.msra.mxu0 %v1286
    %1288 = vmatprep.subr.mxu0 0.0
    %v1289 = vand.u32 %v169, 4294901760
    %v1290 = vsub.f32 %v169, %v1289
    %1291 = vmatpush1.msra.mxu0 %v1290
    %1292 = vmatprep.subr.mxu0 0.0
    %v1293 = vand.u32 %v168, 4294901760
    %v1294 = vsub.f32 %v168, %v1293
    %1295 = vmatpush1.msra.mxu0 %v1294
    %1296 = vmatprep.subr.mxu0 0.0
    %v1297 = vand.u32 %v167, 4294901760
    %v1298 = vsub.f32 %v167, %v1297
    %1299 = vmatpush1.msra.mxu0 %v1298
    %1300 = vmatprep.subr.mxu0 0.0
    %v1301 = vand.u32 %v166, 4294901760
    %v1302 = vsub.f32 %v166, %v1301
    %1303 = vmatpush1.msra.mxu0 %v1302
    %1304 = vmatprep.subr.mxu0 0.0
    %v1305 = vand.u32 %v165, 4294901760
    %v1306 = vsub.f32 %v165, %v1305
    %1307 = vmatpush1.msra.mxu0 %v1306
    %1308 = vmatprep.subr.mxu0 0.0
    %v1309 = vand.u32 %v164, 4294901760
    %v1310 = vsub.f32 %v164, %v1309
    %1311 = vmatpush1.msra.mxu0 %v1310
    %1312 = vmatprep.subr.mxu0 0.0
    %1313 = vmatpush2.msra.mxu0 0.0
    %1314 = vmatprep.subr.mxu0 0.0
    %1315 = vmatpush2.msra.mxu0 0.0
    %1316 = vmatprep.subr.mxu0 0.0
    %1317 = vmatpush2.msra.mxu0 0.0
    %1318 = vmatprep.subr.mxu0 0.0
    %1319 = vmatpush2.msra.mxu0 0.0
    %1320 = vmatprep.subr.mxu0 0.0
    %1321 = vmatpush2.msra.mxu0 0.0
    %1322 = vmatprep.subr.mxu0 0.0
    %1323 = vmatpush2.msra.mxu0 0.0
    %1324 = vmatprep.subr.mxu0 0.0
    %1325 = vmatpush2.msra.mxu0 0.0
    %1326 = vmatprep.subr.mxu0 0.0
    %1327 = vmatpush2.msra.mxu0 0.0
    %1328 = vmatprep.subr.mxu0 0.0
    %1329 = vmatpush2.msra.mxu0 0.0
    %1330 = vmatprep.subr.mxu0 0.0
    %1331 = vmatpush2.msra.mxu0 0.0
    %1332 = vmatprep.subr.mxu0 0.0
    %1333 = vmatpush2.msra.mxu0 0.0
    %1334 = vmatprep.subr.mxu0 0.0
    %1335 = vmatpush2.msra.mxu0 0.0
    %1336 = vmatprep.subr.mxu0 0.0
    %1337 = vmatpush2.msra.mxu0 0.0
    %1338 = vmatprep.subr.mxu0 0.0
    %1339 = vmatpush2.msra.mxu0 0.0
    %1340 = vmatprep.subr.mxu0 0.0
    %1341 = vmatpush2.msra.mxu0 0.0
    %1342 = vmatprep.subr.mxu0 0.0
    %1343 = vmatpush2.msra.mxu0 0.0
    %1344 = vmatprep.mubr.f32.mxu0 0.0
    %v1345 = vand.u32 %v954, 4294901760
    %v1346 = vsub.f32 %v954, %v1345
    %1347 = vmatmul.mubr.f32.gmra.mxu0 %v1346
    %v1348 = vpop.f32.mrf.mxu0
    %v1349 = vadd.f32 %v1227, %v1348
    %v1350 = vpop.f32.mrf.mxu0
    %1351 = vmatprep.mubr.f32.mxu0 0.0
    %v1352 = vand.u32 %v955, 4294901760
    %v1353 = vsub.f32 %v955, %v1352
    %1354 = vmatmul.mubr.f32.gmra.mxu0 %v1353
    %v1355 = vpop.f32.mrf.mxu0
    %v1356 = vadd.f32 %v1233, %v1355
    %v1357 = vpop.f32.mrf.mxu0
    %1358 = vmatprep.mubr.f32.mxu0 0.0
    %v1359 = vand.u32 %v956, 4294901760
    %v1360 = vsub.f32 %v956, %v1359
    %1361 = vmatmul.mubr.f32.gmra.mxu0 %v1360
    %v1362 = vpop.f32.mrf.mxu0
    %v1363 = vadd.f32 %v1239, %v1362
    %v1364 = vpop.f32.mrf.mxu0
    %1365 = vmatprep.mubr.f32.mxu0 0.0
    %v1366 = vand.u32 %v957, 4294901760
    %v1367 = vsub.f32 %v957, %v1366
    %1368 = vmatmul.mubr.f32.gmra.mxu0 %v1367
    %v1369 = vpop.f32.mrf.mxu0
    %v1370 = vadd.f32 %v1245, %v1369
    %v1371 = vpop.f32.mrf.mxu0
    %1372 = vdwg.mxu0
    %1373 = vmatprep.subr.mxu0 0.0
    %v1374 = vand.u32 %v179, 4294901760
    %1375 = vmatpush1.msra.mxu0 %v1374
    %1376 = vmatprep.subr.mxu0 0.0
    %v1377 = vand.u32 %v178, 4294901760
    %1378 = vmatpush1.msra.mxu0 %v1377
    %1379 = vmatprep.subr.mxu0 0.0
    %v1380 = vand.u32 %v177, 4294901760
    %1381 = vmatpush1.msra.mxu0 %v1380
    %1382 = vmatprep.subr.mxu0 0.0
    %v1383 = vand.u32 %v176, 4294901760
    %1384 = vmatpush1.msra.mxu0 %v1383
    %1385 = vmatprep.subr.mxu0 0.0
    %v1386 = vand.u32 %v175, 4294901760
    %1387 = vmatpush1.msra.mxu0 %v1386
    %1388 = vmatprep.subr.mxu0 0.0
    %v1389 = vand.u32 %v174, 4294901760
    %1390 = vmatpush1.msra.mxu0 %v1389
    %1391 = vmatprep.subr.mxu0 0.0
    %v1392 = vand.u32 %v173, 4294901760
    %1393 = vmatpush1.msra.mxu0 %v1392
    %1394 = vmatprep.subr.mxu0 0.0
    %v1395 = vand.u32 %v172, 4294901760
    %1396 = vmatpush1.msra.mxu0 %v1395
    %1397 = vmatprep.subr.mxu0 0.0
    %v1398 = vand.u32 %v171, 4294901760
    %1399 = vmatpush1.msra.mxu0 %v1398
    %1400 = vmatprep.subr.mxu0 0.0
    %v1401 = vand.u32 %v170, 4294901760
    %1402 = vmatpush1.msra.mxu0 %v1401
    %1403 = vmatprep.subr.mxu0 0.0
    %v1404 = vand.u32 %v169, 4294901760
    %1405 = vmatpush1.msra.mxu0 %v1404
    %1406 = vmatprep.subr.mxu0 0.0
    %v1407 = vand.u32 %v168, 4294901760
    %1408 = vmatpush1.msra.mxu0 %v1407
    %1409 = vmatprep.subr.mxu0 0.0
    %v1410 = vand.u32 %v167, 4294901760
    %1411 = vmatpush1.msra.mxu0 %v1410
    %1412 = vmatprep.subr.mxu0 0.0
    %v1413 = vand.u32 %v166, 4294901760
    %1414 = vmatpush1.msra.mxu0 %v1413
    %1415 = vmatprep.subr.mxu0 0.0
    %v1416 = vand.u32 %v165, 4294901760
    %1417 = vmatpush1.msra.mxu0 %v1416
    %1418 = vmatprep.subr.mxu0 0.0
    %v1419 = vand.u32 %v164, 4294901760
    %1420 = vmatpush1.msra.mxu0 %v1419
    %1421 = vmatprep.subr.mxu0 0.0
    %1422 = vmatpush2.msra.mxu0 0.0
    %1423 = vmatprep.subr.mxu0 0.0
    %1424 = vmatpush2.msra.mxu0 0.0
    %1425 = vmatprep.subr.mxu0 0.0
    %1426 = vmatpush2.msra.mxu0 0.0
    %1427 = vmatprep.subr.mxu0 0.0
    %1428 = vmatpush2.msra.mxu0 0.0
    %1429 = vmatprep.subr.mxu0 0.0
    %1430 = vmatpush2.msra.mxu0 0.0
    %1431 = vmatprep.subr.mxu0 0.0
    %1432 = vmatpush2.msra.mxu0 0.0
    %1433 = vmatprep.subr.mxu0 0.0
    %1434 = vmatpush2.msra.mxu0 0.0
    %1435 = vmatprep.subr.mxu0 0.0
    %1436 = vmatpush2.msra.mxu0 0.0
    %1437 = vmatprep.subr.mxu0 0.0
    %1438 = vmatpush2.msra.mxu0 0.0
    %1439 = vmatprep.subr.mxu0 0.0
    %1440 = vmatpush2.msra.mxu0 0.0
    %1441 = vmatprep.subr.mxu0 0.0
    %1442 = vmatpush2.msra.mxu0 0.0
    %1443 = vmatprep.subr.mxu0 0.0
    %1444 = vmatpush2.msra.mxu0 0.0
    %1445 = vmatprep.subr.mxu0 0.0
    %1446 = vmatpush2.msra.mxu0 0.0
    %1447 = vmatprep.subr.mxu0 0.0
    %1448 = vmatpush2.msra.mxu0 0.0
    %1449 = vmatprep.subr.mxu0 0.0
    %1450 = vmatpush2.msra.mxu0 0.0
    %1451 = vmatprep.subr.mxu0 0.0
    %1452 = vmatpush2.msra.mxu0 0.0
    %1453 = vmatprep.mubr.f32.mxu0 0.0
    %v1454 = vand.u32 %v954, 4294901760
    %v1455 = vsub.f32 %v954, %v1454
    %v1456 = vand.u32 %v1455, 4294901760
    %1457 = vmatmul.mubr.f32.gmra.mxu0 %v1456
    %v1458 = vpop.f32.mrf.mxu0
    %v1459 = vadd.f32 %v1349, %v1458
    %v1460 = vpop.f32.mrf.mxu0
    %1461 = vmatprep.mubr.f32.mxu0 0.0
    %v1462 = vand.u32 %v955, 4294901760
    %v1463 = vsub.f32 %v955, %v1462
    %v1464 = vand.u32 %v1463, 4294901760
    %1465 = vmatmul.mubr.f32.gmra.mxu0 %v1464
    %v1466 = vpop.f32.mrf.mxu0
    %v1467 = vadd.f32 %v1356, %v1466
    %v1468 = vpop.f32.mrf.mxu0
    %1469 = vmatprep.mubr.f32.mxu0 0.0
    %v1470 = vand.u32 %v956, 4294901760
    %v1471 = vsub.f32 %v956, %v1470
    %v1472 = vand.u32 %v1471, 4294901760
    %1473 = vmatmul.mubr.f32.gmra.mxu0 %v1472
    %v1474 = vpop.f32.mrf.mxu0
    %v1475 = vadd.f32 %v1363, %v1474
    %v1476 = vpop.f32.mrf.mxu0
    %1477 = vmatprep.mubr.f32.mxu0 0.0
    %v1478 = vand.u32 %v957, 4294901760
    %v1479 = vsub.f32 %v957, %v1478
    %v1480 = vand.u32 %v1479, 4294901760
    %1481 = vmatmul.mubr.f32.gmra.mxu0 %v1480
    %v1482 = vpop.f32.mrf.mxu0
    %v1483 = vadd.f32 %v1370, %v1482
    %v1484 = vpop.f32.mrf.mxu0
    %1485 = vdwg.mxu0
    %1486 = vmatprep.subr.mxu0 0.0
    %v1487 = vand.u32 %v179, 4294901760
    %v1488 = vsub.f32 %v179, %v1487
    %v1489 = vand.u32 %v1488, 4294901760
    %1490 = vmatpush1.msra.mxu0 %v1489
    %1491 = vmatprep.subr.mxu0 0.0
    %v1492 = vand.u32 %v178, 4294901760
    %v1493 = vsub.f32 %v178, %v1492
    %v1494 = vand.u32 %v1493, 4294901760
    %1495 = vmatpush1.msra.mxu0 %v1494
    %1496 = vmatprep.subr.mxu0 0.0
    %v1497 = vand.u32 %v177, 4294901760
    %v1498 = vsub.f32 %v177, %v1497
    %v1499 = vand.u32 %v1498, 4294901760
    %1500 = vmatpush1.msra.mxu0 %v1499
    %1501 = vmatprep.subr.mxu0 0.0
    %v1502 = vand.u32 %v176, 4294901760
    %v1503 = vsub.f32 %v176, %v1502
    %v1504 = vand.u32 %v1503, 4294901760
    %1505 = vmatpush1.msra.mxu0 %v1504
    %1506 = vmatprep.subr.mxu0 0.0
    %v1507 = vand.u32 %v175, 4294901760
    %v1508 = vsub.f32 %v175, %v1507
    %v1509 = vand.u32 %v1508, 4294901760
    %1510 = vmatpush1.msra.mxu0 %v1509
    %1511 = vmatprep.subr.mxu0 0.0
    %v1512 = vand.u32 %v174, 4294901760
    %v1513 = vsub.f32 %v174, %v1512
    %v1514 = vand.u32 %v1513, 4294901760
    %1515 = vmatpush1.msra.mxu0 %v1514
    %1516 = vmatprep.subr.mxu0 0.0
    %v1517 = vand.u32 %v173, 4294901760
    %v1518 = vsub.f32 %v173, %v1517
    %v1519 = vand.u32 %v1518, 4294901760
    %1520 = vmatpush1.msra.mxu0 %v1519
    %1521 = vmatprep.subr.mxu0 0.0
    %v1522 = vand.u32 %v172, 4294901760
    %v1523 = vsub.f32 %v172, %v1522
    %v1524 = vand.u32 %v1523, 4294901760
    %1525 = vmatpush1.msra.mxu0 %v1524
    %1526 = vmatprep.subr.mxu0 0.0
    %v1527 = vand.u32 %v171, 4294901760
    %v1528 = vsub.f32 %v171, %v1527
    %v1529 = vand.u32 %v1528, 4294901760
    %1530 = vmatpush1.msra.mxu0 %v1529
    %1531 = vmatprep.subr.mxu0 0.0
    %v1532 = vand.u32 %v170, 4294901760
    %v1533 = vsub.f32 %v170, %v1532
    %v1534 = vand.u32 %v1533, 4294901760
    %1535 = vmatpush1.msra.mxu0 %v1534
    %1536 = vmatprep.subr.mxu0 0.0
    %v1537 = vand.u32 %v169, 4294901760
    %v1538 = vsub.f32 %v169, %v1537
    %v1539 = vand.u32 %v1538, 4294901760
    %1540 = vmatpush1.msra.mxu0 %v1539
    %1541 = vmatprep.subr.mxu0 0.0
    %v1542 = vand.u32 %v168, 4294901760
    %v1543 = vsub.f32 %v168, %v1542
    %v1544 = vand.u32 %v1543, 4294901760
    %1545 = vmatpush1.msra.mxu0 %v1544
    %1546 = vmatprep.subr.mxu0 0.0
    %v1547 = vand.u32 %v167, 4294901760
    %v1548 = vsub.f32 %v167, %v1547
    %v1549 = vand.u32 %v1548, 4294901760
    %1550 = vmatpush1.msra.mxu0 %v1549
    %1551 = vmatprep.subr.mxu0 0.0
    %v1552 = vand.u32 %v166, 4294901760
    %v1553 = vsub.f32 %v166, %v1552
    %v1554 = vand.u32 %v1553, 4294901760
    %1555 = vmatpush1.msra.mxu0 %v1554
    %1556 = vmatprep.subr.mxu0 0.0
    %v1557 = vand.u32 %v165, 4294901760
    %v1558 = vsub.f32 %v165, %v1557
    %v1559 = vand.u32 %v1558, 4294901760
    %1560 = vmatpush1.msra.mxu0 %v1559
    %1561 = vmatprep.subr.mxu0 0.0
    %v1562 = vand.u32 %v164, 4294901760
    %v1563 = vsub.f32 %v164, %v1562
    %v1564 = vand.u32 %v1563, 4294901760
    %1565 = vmatpush1.msra.mxu0 %v1564
    %1566 = vmatprep.subr.mxu0 0.0
    %1567 = vmatpush2.msra.mxu0 0.0
    %1568 = vmatprep.subr.mxu0 0.0
    %1569 = vmatpush2.msra.mxu0 0.0
    %1570 = vmatprep.subr.mxu0 0.0
    %1571 = vmatpush2.msra.mxu0 0.0
    %1572 = vmatprep.subr.mxu0 0.0
    %1573 = vmatpush2.msra.mxu0 0.0
    %1574 = vmatprep.subr.mxu0 0.0
    %1575 = vmatpush2.msra.mxu0 0.0
    %1576 = vmatprep.subr.mxu0 0.0
    %1577 = vmatpush2.msra.mxu0 0.0
    %1578 = vmatprep.subr.mxu0 0.0
    %1579 = vmatpush2.msra.mxu0 0.0
    %1580 = vmatprep.subr.mxu0 0.0
    %1581 = vmatpush2.msra.mxu0 0.0
    %1582 = vmatprep.subr.mxu0 0.0
    %1583 = vmatpush2.msra.mxu0 0.0
    %1584 = vmatprep.subr.mxu0 0.0
    %1585 = vmatpush2.msra.mxu0 0.0
    %1586 = vmatprep.subr.mxu0 0.0
    %1587 = vmatpush2.msra.mxu0 0.0
    %1588 = vmatprep.subr.mxu0 0.0
    %1589 = vmatpush2.msra.mxu0 0.0
    %1590 = vmatprep.subr.mxu0 0.0
    %1591 = vmatpush2.msra.mxu0 0.0
    %1592 = vmatprep.subr.mxu0 0.0
    %1593 = vmatpush2.msra.mxu0 0.0
    %1594 = vmatprep.subr.mxu0 0.0
    %1595 = vmatpush2.msra.mxu0 0.0
    %1596 = vmatprep.subr.mxu0 0.0
    %1597 = vmatpush2.msra.mxu0 0.0
    %1598 = vmatprep.mubr.f32.mxu0 0.0
    %v1599 = vand.u32 %v954, 4294901760
    %1600 = vmatmul.mubr.f32.gmra.mxu0 %v1599
    %v1601 = vpop.f32.mrf.mxu0
    %v1602 = vadd.f32 %v1459, %v1601
    %v1603 = vpop.f32.mrf.mxu0
    %1604 = vmatprep.mubr.f32.mxu0 0.0
    %v1605 = vand.u32 %v955, 4294901760
    %1606 = vmatmul.mubr.f32.gmra.mxu0 %v1605
    %v1607 = vpop.f32.mrf.mxu0
    %v1608 = vadd.f32 %v1467, %v1607
    %v1609 = vpop.f32.mrf.mxu0
    %1610 = vmatprep.mubr.f32.mxu0 0.0
    %v1611 = vand.u32 %v956, 4294901760
    %1612 = vmatmul.mubr.f32.gmra.mxu0 %v1611
    %v1613 = vpop.f32.mrf.mxu0
    %v1614 = vadd.f32 %v1475, %v1613
    %v1615 = vpop.f32.mrf.mxu0
    %1616 = vmatprep.mubr.f32.mxu0 0.0
    %v1617 = vand.u32 %v957, 4294901760
    %1618 = vmatmul.mubr.f32.gmra.mxu0 %v1617
    %v1619 = vpop.f32.mrf.mxu0
    %v1620 = vadd.f32 %v1483, %v1619
    %v1621 = vpop.f32.mrf.mxu0
    %1622 = vdwg.mxu0
    %1623 = vmatprep.subr.mxu0 0.0
    %v1624 = vand.u32 %v179, 4294901760
    %1625 = vmatpush1.msra.mxu0 %v1624
    %1626 = vmatprep.subr.mxu0 0.0
    %v1627 = vand.u32 %v178, 4294901760
    %1628 = vmatpush1.msra.mxu0 %v1627
    %1629 = vmatprep.subr.mxu0 0.0
    %v1630 = vand.u32 %v177, 4294901760
    %1631 = vmatpush1.msra.mxu0 %v1630
    %1632 = vmatprep.subr.mxu0 0.0
    %v1633 = vand.u32 %v176, 4294901760
    %1634 = vmatpush1.msra.mxu0 %v1633
    %1635 = vmatprep.subr.mxu0 0.0
    %v1636 = vand.u32 %v175, 4294901760
    %1637 = vmatpush1.msra.mxu0 %v1636
    %1638 = vmatprep.subr.mxu0 0.0
    %v1639 = vand.u32 %v174, 4294901760
    %1640 = vmatpush1.msra.mxu0 %v1639
    %1641 = vmatprep.subr.mxu0 0.0
    %v1642 = vand.u32 %v173, 4294901760
    %1643 = vmatpush1.msra.mxu0 %v1642
    %1644 = vmatprep.subr.mxu0 0.0
    %v1645 = vand.u32 %v172, 4294901760
    %1646 = vmatpush1.msra.mxu0 %v1645
    %1647 = vmatprep.subr.mxu0 0.0
    %v1648 = vand.u32 %v171, 4294901760
    %1649 = vmatpush1.msra.mxu0 %v1648
    %1650 = vmatprep.subr.mxu0 0.0
    %v1651 = vand.u32 %v170, 4294901760
    %1652 = vmatpush1.msra.mxu0 %v1651
    %1653 = vmatprep.subr.mxu0 0.0
    %v1654 = vand.u32 %v169, 4294901760
    %1655 = vmatpush1.msra.mxu0 %v1654
    %1656 = vmatprep.subr.mxu0 0.0
    %v1657 = vand.u32 %v168, 4294901760
    %1658 = vmatpush1.msra.mxu0 %v1657
    %1659 = vmatprep.subr.mxu0 0.0
    %v1660 = vand.u32 %v167, 4294901760
    %1661 = vmatpush1.msra.mxu0 %v1660
    %1662 = vmatprep.subr.mxu0 0.0
    %v1663 = vand.u32 %v166, 4294901760
    %1664 = vmatpush1.msra.mxu0 %v1663
    %1665 = vmatprep.subr.mxu0 0.0
    %v1666 = vand.u32 %v165, 4294901760
    %1667 = vmatpush1.msra.mxu0 %v1666
    %1668 = vmatprep.subr.mxu0 0.0
    %v1669 = vand.u32 %v164, 4294901760
    %1670 = vmatpush1.msra.mxu0 %v1669
    %1671 = vmatprep.subr.mxu0 0.0
    %1672 = vmatpush2.msra.mxu0 0.0
    %1673 = vmatprep.subr.mxu0 0.0
    %1674 = vmatpush2.msra.mxu0 0.0
    %1675 = vmatprep.subr.mxu0 0.0
    %1676 = vmatpush2.msra.mxu0 0.0
    %1677 = vmatprep.subr.mxu0 0.0
    %1678 = vmatpush2.msra.mxu0 0.0
    %1679 = vmatprep.subr.mxu0 0.0
    %1680 = vmatpush2.msra.mxu0 0.0
    %1681 = vmatprep.subr.mxu0 0.0
    %1682 = vmatpush2.msra.mxu0 0.0
    %1683 = vmatprep.subr.mxu0 0.0
    %1684 = vmatpush2.msra.mxu0 0.0
    %1685 = vmatprep.subr.mxu0 0.0
    %1686 = vmatpush2.msra.mxu0 0.0
    %1687 = vmatprep.subr.mxu0 0.0
    %1688 = vmatpush2.msra.mxu0 0.0
    %1689 = vmatprep.subr.mxu0 0.0
    %1690 = vmatpush2.msra.mxu0 0.0
    %1691 = vmatprep.subr.mxu0 0.0
    %1692 = vmatpush2.msra.mxu0 0.0
    %1693 = vmatprep.subr.mxu0 0.0
    %1694 = vmatpush2.msra.mxu0 0.0
    %1695 = vmatprep.subr.mxu0 0.0
    %1696 = vmatpush2.msra.mxu0 0.0
    %1697 = vmatprep.subr.mxu0 0.0
    %1698 = vmatpush2.msra.mxu0 0.0
    %1699 = vmatprep.subr.mxu0 0.0
    %1700 = vmatpush2.msra.mxu0 0.0
    %1701 = vmatprep.subr.mxu0 0.0
    %1702 = vmatpush2.msra.mxu0 0.0
    %1703 = vmatprep.mubr.f32.mxu0 0.0
    %v1704 = vand.u32 %v954, 4294901760
    %1705 = vmatmul.mubr.f32.gmra.mxu0 %v1704
    %v1706 = vpop.f32.mrf.mxu0
    %v1707 = vadd.f32 %v1602, %v1706
    %v1708 = vpop.f32.mrf.mxu0
    %1709 = vmatprep.mubr.f32.mxu0 0.0
    %v1710 = vand.u32 %v955, 4294901760
    %1711 = vmatmul.mubr.f32.gmra.mxu0 %v1710
    %v1712 = vpop.f32.mrf.mxu0
    %v1713 = vadd.f32 %v1608, %v1712
    %v1714 = vpop.f32.mrf.mxu0
    %1715 = vmatprep.mubr.f32.mxu0 0.0
    %v1716 = vand.u32 %v956, 4294901760
    %1717 = vmatmul.mubr.f32.gmra.mxu0 %v1716
    %v1718 = vpop.f32.mrf.mxu0
    %v1719 = vadd.f32 %v1614, %v1718
    %v1720 = vpop.f32.mrf.mxu0
    %1721 = vmatprep.mubr.f32.mxu0 0.0
    %v1722 = vand.u32 %v957, 4294901760
    %1723 = vmatmul.mubr.f32.gmra.mxu0 %v1722
    %v1724 = vpop.f32.mrf.mxu0
    %v1725 = vadd.f32 %v1620, %v1724
    %v1726 = vpop.f32.mrf.mxu0
    %1727 = vdwg.mxu0
    %v1728 = vmul.f32 %v933, %v1707
    %v1729 = vmul.f32 %v939, %v1713
    %v1730 = vmul.f32 %v945, %v1719
    %v1731 = vmul.f32 %v951, %v1725
    %v1732 = vadd.f32 %v1728, %v1729
    %v1733 = vadd.f32 %v1732, %v1730
    %v1734 = vadd.f32 %v1733, %v1731
    %v1735 = vrot.slane %v1734, 4
    %v1736 = vadd.f32 %v1734, %v1735
    %v1737 = vrot.slane %v1736, 2
    %v1738 = vadd.f32 %v1736, %v1737
    %v1739 = vrot.slane %v1738, 1
    %v1740 = vadd.f32 %v1738, %v1739
    %1741 = vst [vmem:[#allocation8] sm:$0x1] %v1740
    // Predicated region
    $region30: #{tpu_custom_call.1} parent=1 // pred_check
      _
    $region31: #{tpu_custom_call.1} parent=1 // pred_check_branch
      %1743 = sbr.rel (0) target = $region33
    $region32: #{tpu_custom_call.1} parent=1 // pred_region
      %s1745 = ssub.s32 16, 16
      %1746 = vsyncadd [#allocation4], %s1745
      %s1748 = sshll.u32 [#allocation8], 4
      %s1749 = int_to_ptr.vmem [resolvable:$true] %s1748
      %1751 = dma.vmem_to_hbm [thread:$0]  %s1749, 16, %s4, [#allocation4]
    $region33: #{tpu_custom_call.1} parent=1 // pred_fallthru
      _
    // Predicated region
    $region34: #{tpu_custom_call.1} parent=1 // pred_check
      _
    $region35: #{tpu_custom_call.1} parent=1 // pred_check_branch
      %1753 = sbr.rel (0) target = $region37
    $region36: #{tpu_custom_call.1} parent=1 // pred_region
      %1754 = dma.done [#allocation4], 16
    $region37: #{tpu_custom_call.1} parent=1 // pred_fallthru
      _
    %1755 = vsyncpa [#allocation3], 1
    %1756 = vsyncpa [#allocation6], 1
    %1757 = vsyncpa [#allocation4], 1

// kernel: tpu_custom_call.1
$region0: #{tpu_custom_call.1}
  #allocation0 [shape = 'u32[]', space=smem, size = 0x4, offset = 0x4, fixed_abs, tag = 'smem constant byte address 0x4 - core index']
  #allocation1 [shape = 'u32[144,128]{1,0:T(1,128)}', space=vmem, size = 0x12000, scoped, tag = 'internal scratch']
  %s0 = inlined_call_operand.hbm [shape: s32[1,1,128], index: 0, kind: input, shape index: {}]
  %s1 = inlined_call_operand.vmem [shape: s32[1,1,128], index: 1, kind: input, shape index: {}]
  %s2 = inlined_call_operand.hbm [shape: f32[32,128], index: 2, kind: input, shape index: {}]
  %s3 = inlined_call_operand.hbm [shape: f32[32,128], index: 3, kind: input, shape index: {}]
  %s4 = inlined_call_operand.hbm [shape: f32[1,1,128], index: 4, kind: output, shape index: {}]
  %s5 = sld [smem:[#allocation0]]
  $region38: #{tpu_custom_call.1} parent=0
    _
  %s7 = ssub.s32 1, %s5
  %s8 = scalar_select 0, %s7, %s5
  $region1: #{tpu_custom_call.1} parent=0
    #allocation2 [shape = 'u8[512]{0}', space=vmem, size = 0x400, scoped, tag = 'input window, operand 0, single buffered']
    #allocation3 [shape = 's32[1]{0}', space=sflag, size = 0x4, scoped, tag = 'scoped memory for tpu_custom_call.1']
    #allocation4 [shape = 's32[1]{0}', space=sflag, size = 0x4, scoped, tag = 'scoped memory for tpu_custom_call.1']
    #allocation5 [shape = 'u8[16384]{0}', space=vmem, size = 0x4000, scoped, tag = 'input window, operand 2, single buffered']
    #allocation6 [shape = 's32[1]{0}', space=sflag, size = 0x4, scoped, tag = 'scoped memory for tpu_custom_call.1']
    #allocation7 [shape = 'u8[16384]{0}', space=vmem, size = 0x4000, scoped, tag = 'input window, operand 3, single buffered']
    #allocation8 [shape = 'u8[512]{0}', space=vmem, size = 0x400, scoped, tag = 'output window, operand 0, single buffered']
    %9 = vsyncpa [#allocation3], 0
    %10 = vsyncpa [#allocation6], 0
    %11 = vsyncpa [#allocation4], 0
    // Predicated region
    $region2: #{tpu_custom_call.1} parent=1 // pred_check
      _
    $region3: #{tpu_custom_call.1} parent=1 // pred_check_branch
      %13 = sbr.rel (0) target = $region5
    $region4: #{tpu_custom_call.1} parent=1 // pred_region
      %s15 = ssub.s32 16, 16
      %16 = vsyncadd [#allocation3], %s15
      %s18 = sshll.u32 [#allocation2], 4
      %s19 = int_to_ptr.vmem [resolvable:$true] %s18
      %21 = dma.hbm_to_vmem [thread:$0]  %s0, 16, %s19, [#allocation3]
    $region5: #{tpu_custom_call.1} parent=1 // pred_fallthru
      _
    // Predicated region
    $region6: #{tpu_custom_call.1} parent=1 // pred_check
      _
    $region7: #{tpu_custom_call.1} parent=1 // pred_check_branch
      %23 = sbr.rel (0) target = $region9
    $region8: #{tpu_custom_call.1} parent=1 // pred_region
      _
    $region9: #{tpu_custom_call.1} parent=1 // pred_fallthru
      _
    // Predicated region
    $region10: #{tpu_custom_call.1} parent=1 // pred_check
      _
    $region11: #{tpu_custom_call.1} parent=1 // pred_check_branch
      %25 = sbr.rel (0) target = $region13
    $region12: #{tpu_custom_call.1} parent=1 // pred_region
      %s27 = ssub.s32 512, 512
      %28 = vsyncadd [#allocation6], %s27
      %s29 = sshll.u32 [#allocation5], 4
      %s30 = int_to_ptr.vmem [resolvable:$true] %s29
      %35 = dma.hbm_to_vmem [thread:$0]  %s2, 512, %s30, [#allocation6], 128, 128, 8
    $region13: #{tpu_custom_call.1} parent=1 // pred_fallthru
      _
    // Predicated region
    $region14: #{tpu_custom_call.1} parent=1 // pred_check
      _
    $region15: #{tpu_custom_call.1} parent=1 // pred_check_branch
      %37 = sbr.rel (0) target = $region17
    $region16: #{tpu_custom_call.1} parent=1 // pred_region
      %s39 = ssub.s32 512, 512
      %40 = vsyncadd [#allocation6], %s39
      %s41 = sshll.u32 [#allocation7], 4
      %s42 = int_to_ptr.vmem [resolvable:$true] %s41
      %47 = dma.hbm_to_vmem [thread:$0]  %s3, 512, %s42, [#allocation6], 128, 128, 8
    $region17: #{tpu_custom_call.1} parent=1 // pred_fallthru
      _
    // Predicated region
    $region18: #{tpu_custom_call.1} parent=1 // pred_check
      _
    $region19: #{tpu_custom_call.1} parent=1 // pred_check_branch
      %49 = sbr.rel (0) target = $region21
    $region20: #{tpu_custom_call.1} parent=1 // pred_region
      %50 = dma.done [#allocation3], 16
    $region21: #{tpu_custom_call.1} parent=1 // pred_fallthru
      _
    // Predicated region
    $region22: #{tpu_custom_call.1} parent=1 // pred_check
      _
    $region23: #{tpu_custom_call.1} parent=1 // pred_check_branch
      %52 = sbr.rel (0) target = $region25
    $region24: #{tpu_custom_call.1} parent=1 // pred_region
      %53 = dma.done [#allocation6], 512
    $region25: #{tpu_custom_call.1} parent=1 // pred_fallthru
      _
    // Predicated region
    $region26: #{tpu_custom_call.1} parent=1 // pred_check
      _
    $region27: #{tpu_custom_call.1} parent=1 // pred_check_branch
      %55 = sbr.rel (0) target = $region29
    $region28: #{tpu_custom_call.1} parent=1 // pred_region
      %56 = dma.done [#allocation6], 512
    $region29: #{tpu_custom_call.1} parent=1 // pred_fallthru
      _
    %v57 = vld [vmem:[#allocation2] sm:$0x1]
    %v58 = vld [vmem:[%s1] sm:$0x1]
    %v59 = vlaneseq
    %v60 = vshrl.u32 %v59, 7
    %v61 = vadd.s32 %v60, 8
    %v62 = vadd.s32 %v60, 16
    %v63 = vadd.s32 %v60, 24
    %v64 = vadd.s32 %v60, 32
    %v65 = vadd.s32 %v60, 40
    %v66 = vadd.s32 %v60, 48
    %v67 = vadd.s32 %v60, 56
    %v68 = vadd.s32 %v60, 64
    %v69 = vadd.s32 %v60, 72
    %v70 = vadd.s32 %v60, 80
    %v71 = vadd.s32 %v60, 88
    %v72 = vadd.s32 %v60, 96
    %v73 = vadd.s32 %v60, 104
    %v74 = vadd.s32 %v60, 112
    %v75 = vadd.s32 %v60, 120
    %v76 = vlaneseq
    %v77 = vshrl.u32 %v76, 7
    %v78 = vsub.s32 0, %v77
    %v79 = vrot.slane %v57, %v78
    %vm80 = vcmp.eq.s32.totalorder %v60, %v79
    %vm81 = vcmp.eq.s32.totalorder %v61, %v79
    %vm82 = vcmp.eq.s32.totalorder %v62, %v79
    %vm83 = vcmp.eq.s32.totalorder %v63, %v79
    %vm84 = vcmp.eq.s32.totalorder %v64, %v79
    %vm85 = vcmp.eq.s32.totalorder %v65, %v79
    %vm86 = vcmp.eq.s32.totalorder %v66, %v79
    %vm87 = vcmp.eq.s32.totalorder %v67, %v79
    %vm88 = vcmp.eq.s32.totalorder %v68, %v79
    %vm89 = vcmp.eq.s32.totalorder %v69, %v79
    %vm90 = vcmp.eq.s32.totalorder %v70, %v79
    %vm91 = vcmp.eq.s32.totalorder %v71, %v79
    %vm92 = vcmp.eq.s32.totalorder %v72, %v79
    %vm93 = vcmp.eq.s32.totalorder %v73, %v79
    %vm94 = vcmp.eq.s32.totalorder %v74, %v79
    %vm95 = vcmp.eq.s32.totalorder %v75, %v79
    %v96 = vsel %vm80, 1, 0
    %v97 = vsel %vm81, 1, 0
    %v98 = vsel %vm82, 1, 0
    %v99 = vsel %vm83, 1, 0
    %v100 = vsel %vm84, 1, 0
    %v101 = vsel %vm85, 1, 0
    %v102 = vsel %vm86, 1, 0
    %v103 = vsel %vm87, 1, 0
    %v104 = vsel %vm88, 1, 0
    %v105 = vsel %vm89, 1, 0
    %v106 = vsel %vm90, 1, 0
    %v107 = vsel %vm91, 1, 0
    %v108 = vsel %vm92, 1, 0
    %v109 = vsel %vm93, 1, 0
    %v110 = vsel %vm94, 1, 0
    %v111 = vsel %vm95, 1, 0
    %v112 = vcvt.s32.f32 %v96
    %v113 = vcvt.s32.f32 %v97
    %v114 = vcvt.s32.f32 %v98
    %v115 = vcvt.s32.f32 %v99
    %v116 = vcvt.s32.f32 %v100
    %v117 = vcvt.s32.f32 %v101
    %v118 = vcvt.s32.f32 %v102
    %v119 = vcvt.s32.f32 %v103
    %v120 = vcvt.s32.f32 %v104
    %v121 = vcvt.s32.f32 %v105
    %v122 = vcvt.s32.f32 %v106
    %v123 = vcvt.s32.f32 %v107
    %v124 = vcvt.s32.f32 %v108
    %v125 = vcvt.s32.f32 %v109
    %v126 = vcvt.s32.f32 %v110
    %v127 = vcvt.s32.f32 %v111
    %v128 = vlaneseq
    %v129 = vshrl.u32 %v128, 7
    %v130 = vsub.s32 0, %v129
    %v131 = vrot.slane %v58, %v130
    %vm132 = vcmp.eq.s32.totalorder %v60, %v131
    %vm133 = vcmp.eq.s32.totalorder %v61, %v131
    %vm134 = vcmp.eq.s32.totalorder %v62, %v131
    %vm135 = vcmp.eq.s32.totalorder %v63, %v131
    %vm136 = vcmp.eq.s32.totalorder %v64, %v131
    %vm137 = vcmp.eq.s32.totalorder %v65, %v131
    %vm138 = vcmp.eq.s32.totalorder %v66, %v131
    %vm139 = vcmp.eq.s32.totalorder %v67, %v131
    %vm140 = vcmp.eq.s32.totalorder %v68, %v131
    %vm141 = vcmp.eq.s32.totalorder %v69, %v131
    %vm142 = vcmp.eq.s32.totalorder %v70, %v131
    %vm143 = vcmp.eq.s32.totalorder %v71, %v131
    %vm144 = vcmp.eq.s32.totalorder %v72, %v131
    %vm145 = vcmp.eq.s32.totalorder %v73, %v131
    %vm146 = vcmp.eq.s32.totalorder %v74, %v131
    %vm147 = vcmp.eq.s32.totalorder %v75, %v131
    %v148 = vsel %vm132, 1, 0
    %v149 = vsel %vm133, 1, 0
    %v150 = vsel %vm134, 1, 0
    %v151 = vsel %vm135, 1, 0
    %v152 = vsel %vm136, 1, 0
    %v153 = vsel %vm137, 1, 0
    %v154 = vsel %vm138, 1, 0
    %v155 = vsel %vm139, 1, 0
    %v156 = vsel %vm140, 1, 0
    %v157 = vsel %vm141, 1, 0
    %v158 = vsel %vm142, 1, 0
    %v159 = vsel %vm143, 1, 0
    %v160 = vsel %vm144, 1, 0
    %v161 = vsel %vm145, 1, 0
    %v162 = vsel %vm146, 1, 0
    %v163 = vsel %vm147, 1, 0
    %v164 = vcvt.s32.f32 %v148
    %v165 = vcvt.s32.f32 %v149
    %v166 = vcvt.s32.f32 %v150
    %v167 = vcvt.s32.f32 %v151
    %v168 = vcvt.s32.f32 %v152
    %v169 = vcvt.s32.f32 %v153
    %v170 = vcvt.s32.f32 %v154
    %v171 = vcvt.s32.f32 %v155
    %v172 = vcvt.s32.f32 %v156
    %v173 = vcvt.s32.f32 %v157
    %v174 = vcvt.s32.f32 %v158
    %v175 = vcvt.s32.f32 %v159
    %v176 = vcvt.s32.f32 %v160
    %v177 = vcvt.s32.f32 %v161
    %v178 = vcvt.s32.f32 %v162
    %v179 = vcvt.s32.f32 %v163
    %v180 = vld [vmem:[#allocation5] sm:$0xff]
    %v181 = vld [vmem:[#allocation5 + $0x8] sm:$0xff]
    %v182 = vld [vmem:[#allocation5 + $0x10] sm:$0xff]
    %v183 = vld [vmem:[#allocation5 + $0x18] sm:$0xff]
    %184 = vmatprep.subr.mxu0 0.0
    %v185 = vand.u32 %v127, 4294901760
    %186 = vmatpush1.msra.mxu0 %v185
    %187 = vmatprep.subr.mxu0 0.0
    %v188 = vand.u32 %v126, 4294901760
    %189 = vmatpush1.msra.mxu0 %v188
    %190 = vmatprep.subr.mxu0 0.0
    %v191 = vand.u32 %v125, 4294901760
    %192 = vmatpush1.msra.mxu0 %v191
    %193 = vmatprep.subr.mxu0 0.0
    %v194 = vand.u32 %v124, 4294901760
    %195 = vmatpush1.msra.mxu0 %v194
    %196 = vmatprep.subr.mxu0 0.0
    %v197 = vand.u32 %v123, 4294901760
    %198 = vmatpush1.msra.mxu0 %v197
    %199 = vmatprep.subr.mxu0 0.0
    %v200 = vand.u32 %v122, 4294901760
    %201 = vmatpush1.msra.mxu0 %v200
    %202 = vmatprep.subr.mxu0 0.0
    %v203 = vand.u32 %v121, 4294901760
    %204 = vmatpush1.msra.mxu0 %v203
    %205 = vmatprep.subr.mxu0 0.0
    %v206 = vand.u32 %v120, 4294901760
    %207 = vmatpush1.msra.mxu0 %v206
    %208 = vmatprep.subr.mxu0 0.0
    %v209 = vand.u32 %v119, 4294901760
    %210 = vmatpush1.msra.mxu0 %v209
    %211 = vmatprep.subr.mxu0 0.0
    %v212 = vand.u32 %v118, 4294901760
    %213 = vmatpush1.msra.mxu0 %v212
    %214 = vmatprep.subr.mxu0 0.0
    %v215 = vand.u32 %v117, 4294901760
    %216 = vmatpush1.msra.mxu0 %v215
    %217 = vmatprep.subr.mxu0 0.0
    %v218 = vand.u32 %v116, 4294901760
    %219 = vmatpush1.msra.mxu0 %v218
    %220 = vmatprep.subr.mxu0 0.0
    %v221 = vand.u32 %v115, 4294901760
    %222 = vmatpush1.msra.mxu0 %v221
    %223 = vmatprep.subr.mxu0 0.0
    %v224 = vand.u32 %v114, 4294901760
    %225 = vmatpush1.msra.mxu0 %v224
    %226 = vmatprep.subr.mxu0 0.0
    %v227 = vand.u32 %v113, 4294901760
    %228 = vmatpush1.msra.mxu0 %v227
    %229 = vmatprep.subr.mxu0 0.0
    %v230 = vand.u32 %v112, 4294901760
    %231 = vmatpush1.msra.mxu0 %v230
    %232 = vmatprep.subr.mxu0 0.0
    %233 = vmatpush2.msra.mxu0 0.0
    %234 = vmatprep.subr.mxu0 0.0
    %235 = vmatpush2.msra.mxu0 0.0
    %236 = vmatprep.subr.mxu0 0.0
    %237 = vmatpush2.msra.mxu0 0.0
    %238 = vmatprep.subr.mxu0 0.0
    %239 = vmatpush2.msra.mxu0 0.0
    %240 = vmatprep.subr.mxu0 0.0
    %241 = vmatpush2.msra.mxu0 0.0
    %242 = vmatprep.subr.mxu0 0.0
    %243 = vmatpush2.msra.mxu0 0.0
    %244 = vmatprep.subr.mxu0 0.0
    %245 = vmatpush2.msra.mxu0 0.0
    %246 = vmatprep.subr.mxu0 0.0
    %247 = vmatpush2.msra.mxu0 0.0
    %248 = vmatprep.subr.mxu0 0.0
    %249 = vmatpush2.msra.mxu0 0.0
    %250 = vmatprep.subr.mxu0 0.0
    %251 = vmatpush2.msra.mxu0 0.0
    %252 = vmatprep.subr.mxu0 0.0
    %253 = vmatpush2.msra.mxu0 0.0
    %254 = vmatprep.subr.mxu0 0.0
    %255 = vmatpush2.msra.mxu0 0.0
    %256 = vmatprep.subr.mxu0 0.0
    %257 = vmatpush2.msra.mxu0 0.0
    %258 = vmatprep.subr.mxu0 0.0
    %259 = vmatpush2.msra.mxu0 0.0
    %260 = vmatprep.subr.mxu0 0.0
    %261 = vmatpush2.msra.mxu0 0.0
    %262 = vmatprep.subr.mxu0 0.0
    %263 = vmatpush2.msra.mxu0 0.0
    %264 = vmatprep.mubr.f32.mxu0 0.0
    %v265 = vand.u32 %v180, 4294901760
    %v266 = vsub.f32 %v180, %v265
    %v267 = vand.u32 %v266, 4294901760
    %v268 = vsub.f32 %v266, %v267
    %v269 = vand.u32 %v268, 4294901760
    %270 = vmatmul.mubr.f32.gmra.mxu0 %v269
    %v271 = vpop.f32.mrf.mxu0
    %v272 = vadd.f32 0.0, %v271
    %v273 = vpop.f32.mrf.mxu0
    %274 = vmatprep.mubr.f32.mxu0 0.0
    %v275 = vand.u32 %v181, 4294901760
    %v276 = vsub.f32 %v181, %v275
    %v277 = vand.u32 %v276, 4294901760
    %v278 = vsub.f32 %v276, %v277
    %v279 = vand.u32 %v278, 4294901760
    %280 = vmatmul.mubr.f32.gmra.mxu0 %v279
    %v281 = vpop.f32.mrf.mxu0
    %v282 = vadd.f32 0.0, %v281
    %v283 = vpop.f32.mrf.mxu0
    %284 = vmatprep.mubr.f32.mxu0 0.0
    %v285 = vand.u32 %v182, 4294901760
    %v286 = vsub.f32 %v182, %v285
    %v287 = vand.u32 %v286, 4294901760
    %v288 = vsub.f32 %v286, %v287
    %v289 = vand.u32 %v288, 4294901760
    %290 = vmatmul.mubr.f32.gmra.mxu0 %v289
    %v291 = vpop.f32.mrf.mxu0
    %v292 = vadd.f32 0.0, %v291
    %v293 = vpop.f32.mrf.mxu0
    %294 = vmatprep.mubr.f32.mxu0 0.0
    %v295 = vand.u32 %v183, 4294901760
    %v296 = vsub.f32 %v183, %v295
    %v297 = vand.u32 %v296, 4294901760
    %v298 = vsub.f32 %v296, %v297
    %v299 = vand.u32 %v298, 4294901760
    %300 = vmatmul.mubr.f32.gmra.mxu0 %v299
    %v301 = vpop.f32.mrf.mxu0
    %v302 = vadd.f32 0.0, %v301
    %v303 = vpop.f32.mrf.mxu0
    %304 = vdwg.mxu0
    %305 = vmatprep.subr.mxu0 0.0
    %v306 = vand.u32 %v127, 4294901760
    %v307 = vsub.f32 %v127, %v306
    %v308 = vand.u32 %v307, 4294901760
    %v309 = vsub.f32 %v307, %v308
    %v310 = vand.u32 %v309, 4294901760
    %311 = vmatpush1.msra.mxu0 %v310
    %312 = vmatprep.subr.mxu0 0.0
    %v313 = vand.u32 %v126, 4294901760
    %v314 = vsub.f32 %v126, %v313
    %v315 = vand.u32 %v314, 4294901760
    %v316 = vsub.f32 %v314, %v315
    %v317 = vand.u32 %v316, 4294901760
    %318 = vmatpush1.msra.mxu0 %v317
    %319 = vmatprep.subr.mxu0 0.0
    %v320 = vand.u32 %v125, 4294901760
    %v321 = vsub.f32 %v125, %v320
    %v322 = vand.u32 %v321, 4294901760
    %v323 = vsub.f32 %v321, %v322
    %v324 = vand.u32 %v323, 4294901760
    %325 = vmatpush1.msra.mxu0 %v324
    %326 = vmatprep.subr.mxu0 0.0
    %v327 = vand.u32 %v124, 4294901760
    %v328 = vsub.f32 %v124, %v327
    %v329 = vand.u32 %v328, 4294901760
    %v330 = vsub.f32 %v328, %v329
    %v331 = vand.u32 %v330, 4294901760
    %332 = vmatpush1.msra.mxu0 %v331
    %333 = vmatprep.subr.mxu0 0.0
    %v334 = vand.u32 %v123, 4294901760
    %v335 = vsub.f32 %v123, %v334
    %v336 = vand.u32 %v335, 4294901760
    %v337 = vsub.f32 %v335, %v336
    %v338 = vand.u32 %v337, 4294901760
    %339 = vmatpush1.msra.mxu0 %v338
    %340 = vmatprep.subr.mxu0 0.0
    %v341 = vand.u32 %v122, 4294901760
    %v342 = vsub.f32 %v122, %v341
    %v343 = vand.u32 %v342, 4294901760
    %v344 = vsub.f32 %v342, %v343
    %v345 = vand.u32 %v344, 4294901760
    %346 = vmatpush1.msra.mxu0 %v345
    %347 = vmatprep.subr.mxu0 0.0
    %v348 = vand.u32 %v121, 4294901760
    %v349 = vsub.f32 %v121, %v348
    %v350 = vand.u32 %v349, 4294901760
    %v351 = vsub.f32 %v349, %v350
    %v352 = vand.u32 %v351, 4294901760
    %353 = vmatpush1.msra.mxu0 %v352
    %354 = vmatprep.subr.mxu0 0.0
    %v355 = vand.u32 %v120, 4294901760
    %v356 = vsub.f32 %v120, %v355
    %v357 = vand.u32 %v356, 4294901760
    %v358 = vsub.f32 %v356, %v357
    %v359 = vand.u32 %v358, 4294901760
    %360 = vmatpush1.msra.mxu0 %v359
    %361 = vmatprep.subr.mxu0 0.0
    %v362 = vand.u32 %v119, 4294901760
    %v363 = vsub.f32 %v119, %v362
    %v364 = vand.u32 %v363, 4294901760
    %v365 = vsub.f32 %v363, %v364
    %v366 = vand.u32 %v365, 4294901760
    %367 = vmatpush1.msra.mxu0 %v366
    %368 = vmatprep.subr.mxu0 0.0
    %v369 = vand.u32 %v118, 4294901760
    %v370 = vsub.f32 %v118, %v369
    %v371 = vand.u32 %v370, 4294901760
    %v372 = vsub.f32 %v370, %v371
    %v373 = vand.u32 %v372, 4294901760
    %374 = vmatpush1.msra.mxu0 %v373
    %375 = vmatprep.subr.mxu0 0.0
    %v376 = vand.u32 %v117, 4294901760
    %v377 = vsub.f32 %v117, %v376
    %v378 = vand.u32 %v377, 4294901760
    %v379 = vsub.f32 %v377, %v378
    %v380 = vand.u32 %v379, 4294901760
    %381 = vmatpush1.msra.mxu0 %v380
    %382 = vmatprep.subr.mxu0 0.0
    %v383 = vand.u32 %v116, 4294901760
    %v384 = vsub.f32 %v116, %v383
    %v385 = vand.u32 %v384, 4294901760
    %v386 = vsub.f32 %v384, %v385
    %v387 = vand.u32 %v386, 4294901760
    %388 = vmatpush1.msra.mxu0 %v387
    %389 = vmatprep.subr.mxu0 0.0
    %v390 = vand.u32 %v115, 4294901760
    %v391 = vsub.f32 %v115, %v390
    %v392 = vand.u32 %v391, 4294901760
    %v393 = vsub.f32 %v391, %v392
    %v394 = vand.u32 %v393, 4294901760
    %395 = vmatpush1.msra.mxu0 %v394
    %396 = vmatprep.subr.mxu0 0.0
    %v397 = vand.u32 %v114, 4294901760
    %v398 = vsub.f32 %v114, %v397
    %v399 = vand.u32 %v398, 4294901760
    %v400 = vsub.f32 %v398, %v399
    %v401 = vand.u32 %v400, 4294901760
    %402 = vmatpush1.msra.mxu0 %v401
    %403 = vmatprep.subr.mxu0 0.0
    %v404 = vand.u32 %v113, 4294901760
    %v405 = vsub.f32 %v113, %v404
    %v406 = vand.u32 %v405, 4294901760
    %v407 = vsub.f32 %v405, %v406
    %v408 = vand.u32 %v407, 4294901760
    %409 = vmatpush1.msra.mxu0 %v408
    %410 = vmatprep.subr.mxu0 0.0
    %v411 = vand.u32 %v112, 4294901760
    %v412 = vsub.f32 %v112, %v411
    %v413 = vand.u32 %v412, 4294901760
    %v414 = vsub.f32 %v412, %v413
    %v415 = vand.u32 %v414, 4294901760
    %416 = vmatpush1.msra.mxu0 %v415
    %417 = vmatprep.subr.mxu0 0.0
    %418 = vmatpush2.msra.mxu0 0.0
    %419 = vmatprep.subr.mxu0 0.0
    %420 = vmatpush2.msra.mxu0 0.0
    %421 = vmatprep.subr.mxu0 0.0
    %422 = vmatpush2.msra.mxu0 0.0
    %423 = vmatprep.subr.mxu0 0.0
    %424 = vmatpush2.msra.mxu0 0.0
    %425 = vmatprep.subr.mxu0 0.0
    %426 = vmatpush2.msra.mxu0 0.0
    %427 = vmatprep.subr.mxu0 0.0
    %428 = vmatpush2.msra.mxu0 0.0
    %429 = vmatprep.subr.mxu0 0.0
    %430 = vmatpush2.msra.mxu0 0.0
    %431 = vmatprep.subr.mxu0 0.0
    %432 = vmatpush2.msra.mxu0 0.0
    %433 = vmatprep.subr.mxu0 0.0
    %434 = vmatpush2.msra.mxu0 0.0
    %435 = vmatprep.subr.mxu0 0.0
    %436 = vmatpush2.msra.mxu0 0.0
    %437 = vmatprep.subr.mxu0 0.0
    %438 = vmatpush2.msra.mxu0 0.0
    %439 = vmatprep.subr.mxu0 0.0
    %440 = vmatpush2.msra.mxu0 0.0
    %441 = vmatprep.subr.mxu0 0.0
    %442 = vmatpush2.msra.mxu0 0.0
    %443 = vmatprep.subr.mxu0 0.0
    %444 = vmatpush2.msra.mxu0 0.0
    %445 = vmatprep.subr.mxu0 0.0
    %446 = vmatpush2.msra.mxu0 0.0
    %447 = vmatprep.subr.mxu0 0.0
    %448 = vmatpush2.msra.mxu0 0.0
    %449 = vmatprep.mubr.f32.mxu0 0.0
    %v450 = vand.u32 %v180, 4294901760
    %451 = vmatmul.mubr.f32.gmra.mxu0 %v450
    %v452 = vpop.f32.mrf.mxu0
    %v453 = vadd.f32 %v272, %v452
    %v454 = vpop.f32.mrf.mxu0
    %455 = vmatprep.mubr.f32.mxu0 0.0
    %v456 = vand.u32 %v181, 4294901760
    %457 = vmatmul.mubr.f32.gmra.mxu0 %v456
    %v458 = vpop.f32.mrf.mxu0
    %v459 = vadd.f32 %v282, %v458
    %v460 = vpop.f32.mrf.mxu0
    %461 = vmatprep.mubr.f32.mxu0 0.0
    %v462 = vand.u32 %v182, 4294901760
    %463 = vmatmul.mubr.f32.gmra.mxu0 %v462
    %v464 = vpop.f32.mrf.mxu0
    %v465 = vadd.f32 %v292, %v464
    %v466 = vpop.f32.mrf.mxu0
    %467 = vmatprep.mubr.f32.mxu0 0.0
    %v468 = vand.u32 %v183, 4294901760
    %469 = vmatmul.mubr.f32.gmra.mxu0 %v468
    %v470 = vpop.f32.mrf.mxu0
    %v471 = vadd.f32 %v302, %v470
    %v472 = vpop.f32.mrf.mxu0
    %473 = vdwg.mxu0
    %474 = vmatprep.subr.mxu0 0.0
    %v475 = vand.u32 %v127, 4294901760
    %v476 = vsub.f32 %v127, %v475
    %477 = vmatpush1.msra.mxu0 %v476
    %478 = vmatprep.subr.mxu0 0.0
    %v479 = vand.u32 %v126, 4294901760
    %v480 = vsub.f32 %v126, %v479
    %481 = vmatpush1.msra.mxu0 %v480
    %482 = vmatprep.subr.mxu0 0.0
    %v483 = vand.u32 %v125, 4294901760
    %v484 = vsub.f32 %v125, %v483
    %485 = vmatpush1.msra.mxu0 %v484
    %486 = vmatprep.subr.mxu0 0.0
    %v487 = vand.u32 %v124, 4294901760
    %v488 = vsub.f32 %v124, %v487
    %489 = vmatpush1.msra.mxu0 %v488
    %490 = vmatprep.subr.mxu0 0.0
    %v491 = vand.u32 %v123, 4294901760
    %v492 = vsub.f32 %v123, %v491
    %493 = vmatpush1.msra.mxu0 %v492
    %494 = vmatprep.subr.mxu0 0.0
    %v495 = vand.u32 %v122, 4294901760
    %v496 = vsub.f32 %v122, %v495
    %497 = vmatpush1.msra.mxu0 %v496
    %498 = vmatprep.subr.mxu0 0.0
    %v499 = vand.u32 %v121, 4294901760
    %v500 = vsub.f32 %v121, %v499
    %501 = vmatpush1.msra.mxu0 %v500
    %502 = vmatprep.subr.mxu0 0.0
    %v503 = vand.u32 %v120, 4294901760
    %v504 = vsub.f32 %v120, %v503
    %505 = vmatpush1.msra.mxu0 %v504
    %506 = vmatprep.subr.mxu0 0.0
    %v507 = vand.u32 %v119, 4294901760
    %v508 = vsub.f32 %v119, %v507
    %509 = vmatpush1.msra.mxu0 %v508
    %510 = vmatprep.subr.mxu0 0.0
    %v511 = vand.u32 %v118, 4294901760
    %v512 = vsub.f32 %v118, %v511
    %513 = vmatpush1.msra.mxu0 %v512
    %514 = vmatprep.subr.mxu0 0.0
    %v515 = vand.u32 %v117, 4294901760
    %v516 = vsub.f32 %v117, %v515
    %517 = vmatpush1.msra.mxu0 %v516
    %518 = vmatprep.subr.mxu0 0.0
    %v519 = vand.u32 %v116, 4294901760
    %v520 = vsub.f32 %v116, %v519
    %521 = vmatpush1.msra.mxu0 %v520
    %522 = vmatprep.subr.mxu0 0.0
    %v523 = vand.u32 %v115, 4294901760
    %v524 = vsub.f32 %v115, %v523
    %525 = vmatpush1.msra.mxu0 %v524
    %526 = vmatprep.subr.mxu0 0.0
    %v527 = vand.u32 %v114, 4294901760
    %v528 = vsub.f32 %v114, %v527
    %529 = vmatpush1.msra.mxu0 %v528
    %530 = vmatprep.subr.mxu0 0.0
    %v531 = vand.u32 %v113, 4294901760
    %v532 = vsub.f32 %v113, %v531
    %533 = vmatpush1.msra.mxu0 %v532
    %534 = vmatprep.subr.mxu0 0.0
    %v535 = vand.u32 %v112, 4294901760
    %v536 = vsub.f32 %v112, %v535
    %537 = vmatpush1.msra.mxu0 %v536
    %538 = vmatprep.subr.mxu0 0.0
    %539 = vmatpush2.msra.mxu0 0.0
    %540 = vmatprep.subr.mxu0 0.0
    %541 = vmatpush2.msra.mxu0 0.0
    %542 = vmatprep.subr.mxu0 0.0
    %543 = vmatpush2.msra.mxu0 0.0
    %544 = vmatprep.subr.mxu0 0.0
    %545 = vmatpush2.msra.mxu0 0.0
    %546 = vmatprep.subr.mxu0 0.0
    %547 = vmatpush2.msra.mxu0 0.0
    %548 = vmatprep.subr.mxu0 0.0
    %549 = vmatpush2.msra.mxu0 0.0
    %550 = vmatprep.subr.mxu0 0.0
    %551 = vmatpush2.msra.mxu0 0.0
    %552 = vmatprep.subr.mxu0 0.0
    %553 = vmatpush2.msra.mxu0 0.0
    %554 = vmatprep.subr.mxu0 0.0
    %555 = vmatpush2.msra.mxu0 0.0
    %556 = vmatprep.subr.mxu0 0.0
    %557 = vmatpush2.msra.mxu0 0.0
    %558 = vmatprep.subr.mxu0 0.0
    %559 = vmatpush2.msra.mxu0 0.0
    %560 = vmatprep.subr.mxu0 0.0
    %561 = vmatpush2.msra.mxu0 0.0
    %562 = vmatprep.subr.mxu0 0.0
    %563 = vmatpush2.msra.mxu0 0.0
    %564 = vmatprep.subr.mxu0 0.0
    %565 = vmatpush2.msra.mxu0 0.0
    %566 = vmatprep.subr.mxu0 0.0
    %567 = vmatpush2.msra.mxu0 0.0
    %568 = vmatprep.subr.mxu0 0.0
    %569 = vmatpush2.msra.mxu0 0.0
    %570 = vmatprep.mubr.f32.mxu0 0.0
    %v571 = vand.u32 %v180, 4294901760
    %v572 = vsub.f32 %v180, %v571
    %573 = vmatmul.mubr.f32.gmra.mxu0 %v572
    %v574 = vpop.f32.mrf.mxu0
    %v575 = vadd.f32 %v453, %v574
    %v576 = vpop.f32.mrf.mxu0
    %577 = vmatprep.mubr.f32.mxu0 0.0
    %v578 = vand.u32 %v181, 4294901760
    %v579 = vsub.f32 %v181, %v578
    %580 = vmatmul.mubr.f32.gmra.mxu0 %v579
    %v581 = vpop.f32.mrf.mxu0
    %v582 = vadd.f32 %v459, %v581
    %v583 = vpop.f32.mrf.mxu0
    %584 = vmatprep.mubr.f32.mxu0 0.0
    %v585 = vand.u32 %v182, 4294901760
    %v586 = vsub.f32 %v182, %v585
    %587 = vmatmul.mubr.f32.gmra.mxu0 %v586
    %v588 = vpop.f32.mrf.mxu0
    %v589 = vadd.f32 %v465, %v588
    %v590 = vpop.f32.mrf.mxu0
    %591 = vmatprep.mubr.f32.mxu0 0.0
    %v592 = vand.u32 %v183, 4294901760
    %v593 = vsub.f32 %v183, %v592
    %594 = vmatmul.mubr.f32.gmra.mxu0 %v593
    %v595 = vpop.f32.mrf.mxu0
    %v596 = vadd.f32 %v471, %v595
    %v597 = vpop.f32.mrf.mxu0
    %598 = vdwg.mxu0
    %599 = vmatprep.subr.mxu0 0.0
    %v600 = vand.u32 %v127, 4294901760
    %601 = vmatpush1.msra.mxu0 %v600
    %602 = vmatprep.subr.mxu0 0.0
    %v603 = vand.u32 %v126, 4294901760
    %604 = vmatpush1.msra.mxu0 %v603
    %605 = vmatprep.subr.mxu0 0.0
    %v606 = vand.u32 %v125, 4294901760
    %607 = vmatpush1.msra.mxu0 %v606
    %608 = vmatprep.subr.mxu0 0.0
    %v609 = vand.u32 %v124, 4294901760
    %610 = vmatpush1.msra.mxu0 %v609
    %611 = vmatprep.subr.mxu0 0.0
    %v612 = vand.u32 %v123, 4294901760
    %613 = vmatpush1.msra.mxu0 %v612
    %614 = vmatprep.subr.mxu0 0.0
    %v615 = vand.u32 %v122, 4294901760
    %616 = vmatpush1.msra.mxu0 %v615
    %617 = vmatprep.subr.mxu0 0.0
    %v618 = vand.u32 %v121, 4294901760
    %619 = vmatpush1.msra.mxu0 %v618
    %620 = vmatprep.subr.mxu0 0.0
    %v621 = vand.u32 %v120, 4294901760
    %622 = vmatpush1.msra.mxu0 %v621
    %623 = vmatprep.subr.mxu0 0.0
    %v624 = vand.u32 %v119, 4294901760
    %625 = vmatpush1.msra.mxu0 %v624
    %626 = vmatprep.subr.mxu0 0.0
    %v627 = vand.u32 %v118, 4294901760
    %628 = vmatpush1.msra.mxu0 %v627
    %629 = vmatprep.subr.mxu0 0.0
    %v630 = vand.u32 %v117, 4294901760
    %631 = vmatpush1.msra.mxu0 %v630
    %632 = vmatprep.subr.mxu0 0.0
    %v633 = vand.u32 %v116, 4294901760
    %634 = vmatpush1.msra.mxu0 %v633
    %635 = vmatprep.subr.mxu0 0.0
    %v636 = vand.u32 %v115, 4294901760
    %637 = vmatpush1.msra.mxu0 %v636
    %638 = vmatprep.subr.mxu0 0.0
    %v639 = vand.u32 %v114, 4294901760
    %640 = vmatpush1.msra.mxu0 %v639
    %641 = vmatprep.subr.mxu0 0.0
    %v642 = vand.u32 %v113, 4294901760
    %643 = vmatpush1.msra.mxu0 %v642
    %644 = vmatprep.subr.mxu0 0.0
    %v645 = vand.u32 %v112, 4294901760
    %646 = vmatpush1.msra.mxu0 %v645
    %647 = vmatprep.subr.mxu0 0.0
    %648 = vmatpush2.msra.mxu0 0.0
    %649 = vmatprep.subr.mxu0 0.0
    %650 = vmatpush2.msra.mxu0 0.0
    %651 = vmatprep.subr.mxu0 0.0
    %652 = vmatpush2.msra.mxu0 0.0
    %653 = vmatprep.subr.mxu0 0.0
    %654 = vmatpush2.msra.mxu0 0.0
    %655 = vmatprep.subr.mxu0 0.0
    %656 = vmatpush2.msra.mxu0 0.0
    %657 = vmatprep.subr.mxu0 0.0
    %658 = vmatpush2.msra.mxu0 0.0
    %659 = vmatprep.subr.mxu0 0.0
    %660 = vmatpush2.msra.mxu0 0.0
    %661 = vmatprep.subr.mxu0 0.0
    %662 = vmatpush2.msra.mxu0 0.0
    %663 = vmatprep.subr.mxu0 0.0
    %664 = vmatpush2.msra.mxu0 0.0
    %665 = vmatprep.subr.mxu0 0.0
    %666 = vmatpush2.msra.mxu0 0.0
    %667 = vmatprep.subr.mxu0 0.0
    %668 = vmatpush2.msra.mxu0 0.0
    %669 = vmatprep.subr.mxu0 0.0
    %670 = vmatpush2.msra.mxu0 0.0
    %671 = vmatprep.subr.mxu0 0.0
    %672 = vmatpush2.msra.mxu0 0.0
    %673 = vmatprep.subr.mxu0 0.0
    %674 = vmatpush2.msra.mxu0 0.0
    %675 = vmatprep.subr.mxu0 0.0
    %676 = vmatpush2.msra.mxu0 0.0
    %677 = vmatprep.subr.mxu0 0.0
    %678 = vmatpush2.msra.mxu0 0.0
    %679 = vmatprep.mubr.f32.mxu0 0.0
    %v680 = vand.u32 %v180, 4294901760
    %v681 = vsub.f32 %v180, %v680
    %v682 = vand.u32 %v681, 4294901760
    %683 = vmatmul.mubr.f32.gmra.mxu0 %v682
    %v684 = vpop.f32.mrf.mxu0
    %v685 = vadd.f32 %v575, %v684
    %v686 = vpop.f32.mrf.mxu0
    %687 = vmatprep.mubr.f32.mxu0 0.0
    %v688 = vand.u32 %v181, 4294901760
    %v689 = vsub.f32 %v181, %v688
    %v690 = vand.u32 %v689, 4294901760
    %691 = vmatmul.mubr.f32.gmra.mxu0 %v690
    %v692 = vpop.f32.mrf.mxu0
    %v693 = vadd.f32 %v582, %v692
    %v694 = vpop.f32.mrf.mxu0
    %695 = vmatprep.mubr.f32.mxu0 0.0
    %v696 = vand.u32 %v182, 4294901760
    %v697 = vsub.f32 %v182, %v696
    %v698 = vand.u32 %v697, 4294901760
    %699 = vmatmul.mubr.f32.gmra.mxu0 %v698
    %v700 = vpop.f32.mrf.mxu0
    %v701 = vadd.f32 %v589, %v700
    %v702 = vpop.f32.mrf.mxu0
    %703 = vmatprep.mubr.f32.mxu0 0.0
    %v704 = vand.u32 %v183, 4294901760
    %v705 = vsub.f32 %v183, %v704
    %v706 = vand.u32 %v705, 4294901760
    %707 = vmatmul.mubr.f32.gmra.mxu0 %v706
    %v708 = vpop.f32.mrf.mxu0
    %v709 = vadd.f32 %v596, %v708
    %v710 = vpop.f32.mrf.mxu0
    %711 = vdwg.mxu0
    %712 = vmatprep.subr.mxu0 0.0
    %v713 = vand.u32 %v127, 4294901760
    %v714 = vsub.f32 %v127, %v713
    %v715 = vand.u32 %v714, 4294901760
    %716 = vmatpush1.msra.mxu0 %v715
    %717 = vmatprep.subr.mxu0 0.0
    %v718 = vand.u32 %v126, 4294901760
    %v719 = vsub.f32 %v126, %v718
    %v720 = vand.u32 %v719, 4294901760
    %721 = vmatpush1.msra.mxu0 %v720
    %722 = vmatprep.subr.mxu0 0.0
    %v723 = vand.u32 %v125, 4294901760
    %v724 = vsub.f32 %v125, %v723
    %v725 = vand.u32 %v724, 4294901760
    %726 = vmatpush1.msra.mxu0 %v725
    %727 = vmatprep.subr.mxu0 0.0
    %v728 = vand.u32 %v124, 4294901760
    %v729 = vsub.f32 %v124, %v728
    %v730 = vand.u32 %v729, 4294901760
    %731 = vmatpush1.msra.mxu0 %v730
    %732 = vmatprep.subr.mxu0 0.0
    %v733 = vand.u32 %v123, 4294901760
    %v734 = vsub.f32 %v123, %v733
    %v735 = vand.u32 %v734, 4294901760
    %736 = vmatpush1.msra.mxu0 %v735
    %737 = vmatprep.subr.mxu0 0.0
    %v738 = vand.u32 %v122, 4294901760
    %v739 = vsub.f32 %v122, %v738
    %v740 = vand.u32 %v739, 4294901760
    %741 = vmatpush1.msra.mxu0 %v740
    %742 = vmatprep.subr.mxu0 0.0
    %v743 = vand.u32 %v121, 4294901760
    %v744 = vsub.f32 %v121, %v743
    %v745 = vand.u32 %v744, 4294901760
    %746 = vmatpush1.msra.mxu0 %v745
    %747 = vmatprep.subr.mxu0 0.0
    %v748 = vand.u32 %v120, 4294901760
    %v749 = vsub.f32 %v120, %v748
    %v750 = vand.u32 %v749, 4294901760
    %751 = vmatpush1.msra.mxu0 %v750
    %752 = vmatprep.subr.mxu0 0.0
    %v753 = vand.u32 %v119, 4294901760
    %v754 = vsub.f32 %v119, %v753
    %v755 = vand.u32 %v754, 4294901760
    %756 = vmatpush1.msra.mxu0 %v755
    %757 = vmatprep.subr.mxu0 0.0
    %v758 = vand.u32 %v118, 4294901760
    %v759 = vsub.f32 %v118, %v758
    %v760 = vand.u32 %v759, 4294901760
    %761 = vmatpush1.msra.mxu0 %v760
    %762 = vmatprep.subr.mxu0 0.0
    %v763 = vand.u32 %v117, 4294901760
    %v764 = vsub.f32 %v117, %v763
    %v765 = vand.u32 %v764, 4294901760
    %766 = vmatpush1.msra.mxu0 %v765
    %767 = vmatprep.subr.mxu0 0.0
    %v768 = vand.u32 %v116, 4294901760
    %v769 = vsub.f32 %v116, %v768
    %v770 = vand.u32 %v769, 4294901760
    %771 = vmatpush1.msra.mxu0 %v770
    %772 = vmatprep.subr.mxu0 0.0
    %v773 = vand.u32 %v115, 4294901760
    %v774 = vsub.f32 %v115, %v773
    %v775 = vand.u32 %v774, 4294901760
    %776 = vmatpush1.msra.mxu0 %v775
    %777 = vmatprep.subr.mxu0 0.0
    %v778 = vand.u32 %v114, 4294901760
    %v779 = vsub.f32 %v114, %v778
    %v780 = vand.u32 %v779, 4294901760
    %781 = vmatpush1.msra.mxu0 %v780
    %782 = vmatprep.subr.mxu0 0.0
    %v783 = vand.u32 %v113, 4294901760
    %v784 = vsub.f32 %v113, %v783
    %v785 = vand.u32 %v784, 4294901760
    %786 = vmatpush1.msra.mxu0 %v785
    %787 = vmatprep.subr.mxu0 0.0
    %v788 = vand.u32 %v112, 4294901760
    %v789 = vsub.f32 %v112, %v788
    %v790 = vand.u32 %v789, 4294901760
    %791 = vmatpush1.msra.mxu0 %v790
    %792 = vmatprep.subr.mxu0 0.0
    %793 = vmatpush2.msra.mxu0 0.0
    %794 = vmatprep.subr.mxu0 0.0
    %795 = vmatpush2.msra.mxu0 0.0
    %796 = vmatprep.subr.mxu0 0.0
    %797 = vmatpush2.msra.mxu0 0.0
    %798 = vmatprep.subr.mxu0 0.0
    %799 = vmatpush2.msra.mxu0 0.0
    %800 = vmatprep.subr.mxu0 0.0
    %801 = vmatpush2.msra.mxu0 0.0
    %802 = vmatprep.subr.mxu0 0.0
    %803 = vmatpush2.msra.mxu0 0.0
    %804 = vmatprep.subr.mxu0 0.0
    %805 = vmatpush2.msra.mxu0 0.0
    %806 = vmatprep.subr.mxu0 0.0
    %807 = vmatpush2.msra.mxu0 0.0
    %808 = vmatprep.subr.mxu0 0.0
    %809 = vmatpush2.msra.mxu0 0.0
    %810 = vmatprep.subr.mxu0 0.0
    %811 = vmatpush2.msra.mxu0 0.0
    %812 = vmatprep.subr.mxu0 0.0
    %813 = vmatpush2.msra.mxu0 0.0
    %814 = vmatprep.subr.mxu0 0.0
    %815 = vmatpush2.msra.mxu0 0.0
    %816 = vmatprep.subr.mxu0 0.0
    %817 = vmatpush2.msra.mxu0 0.0
    %818 = vmatprep.subr.mxu0 0.0
    %819 = vmatpush2.msra.mxu0 0.0
    %820 = vmatprep.subr.mxu0 0.0
    %821 = vmatpush2.msra.mxu0 0.0
    %822 = vmatprep.subr.mxu0 0.0
    %823 = vmatpush2.msra.mxu0 0.0
    %824 = vmatprep.mubr.f32.mxu0 0.0
    %v825 = vand.u32 %v180, 4294901760
    %826 = vmatmul.mubr.f32.gmra.mxu0 %v825
    %v827 = vpop.f32.mrf.mxu0
    %v828 = vadd.f32 %v685, %v827
    %v829 = vpop.f32.mrf.mxu0
    %830 = vmatprep.mubr.f32.mxu0 0.0
    %v831 = vand.u32 %v181, 4294901760
    %832 = vmatmul.mubr.f32.gmra.mxu0 %v831
    %v833 = vpop.f32.mrf.mxu0
    %v834 = vadd.f32 %v693, %v833
    %v835 = vpop.f32.mrf.mxu0
    %836 = vmatprep.mubr.f32.mxu0 0.0
    %v837 = vand.u32 %v182, 4294901760
    %838 = vmatmul.mubr.f32.gmra.mxu0 %v837
    %v839 = vpop.f32.mrf.mxu0
    %v840 = vadd.f32 %v701, %v839
    %v841 = vpop.f32.mrf.mxu0
    %842 = vmatprep.mubr.f32.mxu0 0.0
    %v843 = vand.u32 %v183, 4294901760
    %844 = vmatmul.mubr.f32.gmra.mxu0 %v843
    %v845 = vpop.f32.mrf.mxu0
    %v846 = vadd.f32 %v709, %v845
    %v847 = vpop.f32.mrf.mxu0
    %848 = vdwg.mxu0
    %849 = vmatprep.subr.mxu0 0.0
    %v850 = vand.u32 %v127, 4294901760
    %851 = vmatpush1.msra.mxu0 %v850
    %852 = vmatprep.subr.mxu0 0.0
    %v853 = vand.u32 %v126, 4294901760
    %854 = vmatpush1.msra.mxu0 %v853
    %855 = vmatprep.subr.mxu0 0.0
    %v856 = vand.u32 %v125, 4294901760
    %857 = vmatpush1.msra.mxu0 %v856
    %858 = vmatprep.subr.mxu0 0.0
    %v859 = vand.u32 %v124, 4294901760
    %860 = vmatpush1.msra.mxu0 %v859
    %861 = vmatprep.subr.mxu0 0.0
    %v862 = vand.u32 %v123, 4294901760
    %863 = vmatpush1.msra.mxu0 %v862
    %864 = vmatprep.subr.mxu0 0.0
    %v865 = vand.u32 %v122, 4294901760
    %866 = vmatpush1.msra.mxu0 %v865
    %867 = vmatprep.subr.mxu0 0.0
    %v868 = vand.u32 %v121, 4294901760
    %869 = vmatpush1.msra.mxu0 %v868
    %870 = vmatprep.subr.mxu0 0.0
    %v871 = vand.u32 %v120, 4294901760
    %872 = vmatpush1.msra.mxu0 %v871
    %873 = vmatprep.subr.mxu0 0.0
    %v874 = vand.u32 %v119, 4294901760
    %875 = vmatpush1.msra.mxu0 %v874
    %876 = vmatprep.subr.mxu0 0.0
    %v877 = vand.u32 %v118, 4294901760
    %878 = vmatpush1.msra.mxu0 %v877
    %879 = vmatprep.subr.mxu0 0.0
    %v880 = vand.u32 %v117, 4294901760
    %881 = vmatpush1.msra.mxu0 %v880
    %882 = vmatprep.subr.mxu0 0.0
    %v883 = vand.u32 %v116, 4294901760
    %884 = vmatpush1.msra.mxu0 %v883
    %885 = vmatprep.subr.mxu0 0.0
    %v886 = vand.u32 %v115, 4294901760
    %887 = vmatpush1.msra.mxu0 %v886
    %888 = vmatprep.subr.mxu0 0.0
    %v889 = vand.u32 %v114, 4294901760
    %890 = vmatpush1.msra.mxu0 %v889
    %891 = vmatprep.subr.mxu0 0.0
    %v892 = vand.u32 %v113, 4294901760
    %893 = vmatpush1.msra.mxu0 %v892
    %894 = vmatprep.subr.mxu0 0.0
    %v895 = vand.u32 %v112, 4294901760
    %896 = vmatpush1.msra.mxu0 %v895
    %897 = vmatprep.subr.mxu0 0.0
    %898 = vmatpush2.msra.mxu0 0.0
    %899 = vmatprep.subr.mxu0 0.0
    %900 = vmatpush2.msra.mxu0 0.0
    %901 = vmatprep.subr.mxu0 0.0
    %902 = vmatpush2.msra.mxu0 0.0
    %903 = vmatprep.subr.mxu0 0.0
    %904 = vmatpush2.msra.mxu0 0.0
    %905 = vmatprep.subr.mxu0 0.0
    %906 = vmatpush2.msra.mxu0 0.0
    %907 = vmatprep.subr.mxu0 0.0
    %908 = vmatpush2.msra.mxu0 0.0
    %909 = vmatprep.subr.mxu0 0.0
    %910 = vmatpush2.msra.mxu0 0.0
    %911 = vmatprep.subr.mxu0 0.0
    %912 = vmatpush2.msra.mxu0 0.0
    %913 = vmatprep.subr.mxu0 0.0
    %914 = vmatpush2.msra.mxu0 0.0
    %915 = vmatprep.subr.mxu0 0.0
    %916 = vmatpush2.msra.mxu0 0.0
    %917 = vmatprep.subr.mxu0 0.0
    %918 = vmatpush2.msra.mxu0 0.0
    %919 = vmatprep.subr.mxu0 0.0
    %920 = vmatpush2.msra.mxu0 0.0
    %921 = vmatprep.subr.mxu0 0.0
    %922 = vmatpush2.msra.mxu0 0.0
    %923 = vmatprep.subr.mxu0 0.0
    %924 = vmatpush2.msra.mxu0 0.0
    %925 = vmatprep.subr.mxu0 0.0
    %926 = vmatpush2.msra.mxu0 0.0
    %927 = vmatprep.subr.mxu0 0.0
    %928 = vmatpush2.msra.mxu0 0.0
    %929 = vmatprep.mubr.f32.mxu0 0.0
    %v930 = vand.u32 %v180, 4294901760
    %931 = vmatmul.mubr.f32.gmra.mxu0 %v930
    %v932 = vpop.f32.mrf.mxu0
    %v933 = vadd.f32 %v828, %v932
    %v934 = vpop.f32.mrf.mxu0
    %935 = vmatprep.mubr.f32.mxu0 0.0
    %v936 = vand.u32 %v181, 4294901760
    %937 = vmatmul.mubr.f32.gmra.mxu0 %v936
    %v938 = vpop.f32.mrf.mxu0
    %v939 = vadd.f32 %v834, %v938
    %v940 = vpop.f32.mrf.mxu0
    %941 = vmatprep.mubr.f32.mxu0 0.0
    %v942 = vand.u32 %v182, 4294901760
    %943 = vmatmul.mubr.f32.gmra.mxu0 %v942
    %v944 = vpop.f32.mrf.mxu0
    %v945 = vadd.f32 %v840, %v944
    %v946 = vpop.f32.mrf.mxu0
    %947 = vmatprep.mubr.f32.mxu0 0.0
    %v948 = vand.u32 %v183, 4294901760
    %949 = vmatmul.mubr.f32.gmra.mxu0 %v948
    %v950 = vpop.f32.mrf.mxu0
    %v951 = vadd.f32 %v846, %v950
    %v952 = vpop.f32.mrf.mxu0
    %953 = vdwg.mxu0
    %v954 = vld [vmem:[#allocation7] sm:$0xff]
    %v955 = vld [vmem:[#allocation7 + $0x8] sm:$0xff]
    %v956 = vld [vmem:[#allocation7 + $0x10] sm:$0xff]
    %v957 = vld [vmem:[#allocation7 + $0x18] sm:$0xff]
    %958 = vmatprep.subr.mxu0 0.0
    %v959 = vand.u32 %v179, 4294901760
    %960 = vmatpush1.msra.mxu0 %v959
    %961 = vmatprep.subr.mxu0 0.0
    %v962 = vand.u32 %v178, 4294901760
    %963 = vmatpush1.msra.mxu0 %v962
    %964 = vmatprep.subr.mxu0 0.0
    %v965 = vand.u32 %v177, 4294901760
    %966 = vmatpush1.msra.mxu0 %v965
    %967 = vmatprep.subr.mxu0 0.0
    %v968 = vand.u32 %v176, 4294901760
    %969 = vmatpush1.msra.mxu0 %v968
    %970 = vmatprep.subr.mxu0 0.0
    %v971 = vand.u32 %v175, 4294901760
    %972 = vmatpush1.msra.mxu0 %v971
    %973 = vmatprep.subr.mxu0 0.0
    %v974 = vand.u32 %v174, 4294901760
    %975 = vmatpush1.msra.mxu0 %v974
    %976 = vmatprep.subr.mxu0 0.0
    %v977 = vand.u32 %v173, 4294901760
    %978 = vmatpush1.msra.mxu0 %v977
    %979 = vmatprep.subr.mxu0 0.0
    %v980 = vand.u32 %v172, 4294901760
    %981 = vmatpush1.msra.mxu0 %v980
    %982 = vmatprep.subr.mxu0 0.0
    %v983 = vand.u32 %v171, 4294901760
    %984 = vmatpush1.msra.mxu0 %v983
    %985 = vmatprep.subr.mxu0 0.0
    %v986 = vand.u32 %v170, 4294901760
    %987 = vmatpush1.msra.mxu0 %v986
    %988 = vmatprep.subr.mxu0 0.0
    %v989 = vand.u32 %v169, 4294901760
    %990 = vmatpush1.msra.mxu0 %v989
    %991 = vmatprep.subr.mxu0 0.0
    %v992 = vand.u32 %v168, 4294901760
    %993 = vmatpush1.msra.mxu0 %v992
    %994 = vmatprep.subr.mxu0 0.0
    %v995 = vand.u32 %v167, 4294901760
    %996 = vmatpush1.msra.mxu0 %v995
    %997 = vmatprep.subr.mxu0 0.0
    %v998 = vand.u32 %v166, 4294901760
    %999 = vmatpush1.msra.mxu0 %v998
    %1000 = vmatprep.subr.mxu0 0.0
    %v1001 = vand.u32 %v165, 4294901760
    %1002 = vmatpush1.msra.mxu0 %v1001
    %1003 = vmatprep.subr.mxu0 0.0
    %v1004 = vand.u32 %v164, 4294901760
    %1005 = vmatpush1.msra.mxu0 %v1004
    %1006 = vmatprep.subr.mxu0 0.0
    %1007 = vmatpush2.msra.mxu0 0.0
    %1008 = vmatprep.subr.mxu0 0.0
    %1009 = vmatpush2.msra.mxu0 0.0
    %1010 = vmatprep.subr.mxu0 0.0
    %1011 = vmatpush2.msra.mxu0 0.0
    %1012 = vmatprep.subr.mxu0 0.0
    %1013 = vmatpush2.msra.mxu0 0.0
    %1014 = vmatprep.subr.mxu0 0.0
    %1015 = vmatpush2.msra.mxu0 0.0
    %1016 = vmatprep.subr.mxu0 0.0
    %1017 = vmatpush2.msra.mxu0 0.0
    %1018 = vmatprep.subr.mxu0 0.0
    %1019 = vmatpush2.msra.mxu0 0.0
    %1020 = vmatprep.subr.mxu0 0.0
    %1021 = vmatpush2.msra.mxu0 0.0
    %1022 = vmatprep.subr.mxu0 0.0
    %1023 = vmatpush2.msra.mxu0 0.0
    %1024 = vmatprep.subr.mxu0 0.0
    %1025 = vmatpush2.msra.mxu0 0.0
    %1026 = vmatprep.subr.mxu0 0.0
    %1027 = vmatpush2.msra.mxu0 0.0
    %1028 = vmatprep.subr.mxu0 0.0
    %1029 = vmatpush2.msra.mxu0 0.0
    %1030 = vmatprep.subr.mxu0 0.0
    %1031 = vmatpush2.msra.mxu0 0.0
    %1032 = vmatprep.subr.mxu0 0.0
    %1033 = vmatpush2.msra.mxu0 0.0
    %1034 = vmatprep.subr.mxu0 0.0
    %1035 = vmatpush2.msra.mxu0 0.0
    %1036 = vmatprep.subr.mxu0 0.0
    %1037 = vmatpush2.msra.mxu0 0.0
    %1038 = vmatprep.mubr.f32.mxu0 0.0
    %v1039 = vand.u32 %v954, 4294901760
    %v1040 = vsub.f32 %v954, %v1039
    %v1041 = vand.u32 %v1040, 4294901760
    %v1042 = vsub.f32 %v1040, %v1041
    %v1043 = vand.u32 %v1042, 4294901760
    %1044 = vmatmul.mubr.f32.gmra.mxu0 %v1043
    %v1045 = vpop.f32.mrf.mxu0
    %v1046 = vadd.f32 0.0, %v1045
    %v1047 = vpop.f32.mrf.mxu0
    %1048 = vmatprep.mubr.f32.mxu0 0.0
    %v1049 = vand.u32 %v955, 4294901760
    %v1050 = vsub.f32 %v955, %v1049
    %v1051 = vand.u32 %v1050, 4294901760
    %v1052 = vsub.f32 %v1050, %v1051
    %v1053 = vand.u32 %v1052, 4294901760
    %1054 = vmatmul.mubr.f32.gmra.mxu0 %v1053
    %v1055 = vpop.f32.mrf.mxu0
    %v1056 = vadd.f32 0.0, %v1055
    %v1057 = vpop.f32.mrf.mxu0
    %1058 = vmatprep.mubr.f32.mxu0 0.0
    %v1059 = vand.u32 %v956, 4294901760
    %v1060 = vsub.f32 %v956, %v1059
    %v1061 = vand.u32 %v1060, 4294901760
    %v1062 = vsub.f32 %v1060, %v1061
    %v1063 = vand.u32 %v1062, 4294901760
    %1064 = vmatmul.mubr.f32.gmra.mxu0 %v1063
    %v1065 = vpop.f32.mrf.mxu0
    %v1066 = vadd.f32 0.0, %v1065
    %v1067 = vpop.f32.mrf.mxu0
    %1068 = vmatprep.mubr.f32.mxu0 0.0
    %v1069 = vand.u32 %v957, 4294901760
    %v1070 = vsub.f32 %v957, %v1069
    %v1071 = vand.u32 %v1070, 4294901760
    %v1072 = vsub.f32 %v1070, %v1071
    %v1073 = vand.u32 %v1072, 4294901760
    %1074 = vmatmul.mubr.f32.gmra.mxu0 %v1073
    %v1075 = vpop.f32.mrf.mxu0
    %v1076 = vadd.f32 0.0, %v1075
    %v1077 = vpop.f32.mrf.mxu0
    %1078 = vdwg.mxu0
    %1079 = vmatprep.subr.mxu0 0.0
    %v1080 = vand.u32 %v179, 4294901760
    %v1081 = vsub.f32 %v179, %v1080
    %v1082 = vand.u32 %v1081, 4294901760
    %v1083 = vsub.f32 %v1081, %v1082
    %v1084 = vand.u32 %v1083, 4294901760
    %1085 = vmatpush1.msra.mxu0 %v1084
    %1086 = vmatprep.subr.mxu0 0.0
    %v1087 = vand.u32 %v178, 4294901760
    %v1088 = vsub.f32 %v178, %v1087
    %v1089 = vand.u32 %v1088, 4294901760
    %v1090 = vsub.f32 %v1088, %v1089
    %v1091 = vand.u32 %v1090, 4294901760
    %1092 = vmatpush1.msra.mxu0 %v1091
    %1093 = vmatprep.subr.mxu0 0.0
    %v1094 = vand.u32 %v177, 4294901760
    %v1095 = vsub.f32 %v177, %v1094
    %v1096 = vand.u32 %v1095, 4294901760
    %v1097 = vsub.f32 %v1095, %v1096
    %v1098 = vand.u32 %v1097, 4294901760
    %1099 = vmatpush1.msra.mxu0 %v1098
    %1100 = vmatprep.subr.mxu0 0.0
    %v1101 = vand.u32 %v176, 4294901760
    %v1102 = vsub.f32 %v176, %v1101
    %v1103 = vand.u32 %v1102, 4294901760
    %v1104 = vsub.f32 %v1102, %v1103
    %v1105 = vand.u32 %v1104, 4294901760
    %1106 = vmatpush1.msra.mxu0 %v1105
    %1107 = vmatprep.subr.mxu0 0.0
    %v1108 = vand.u32 %v175, 4294901760
    %v1109 = vsub.f32 %v175, %v1108
    %v1110 = vand.u32 %v1109, 4294901760
    %v1111 = vsub.f32 %v1109, %v1110
    %v1112 = vand.u32 %v1111, 4294901760
    %1113 = vmatpush1.msra.mxu0 %v1112
    %1114 = vmatprep.subr.mxu0 0.0
    %v1115 = vand.u32 %v174, 4294901760
    %v1116 = vsub.f32 %v174, %v1115
    %v1117 = vand.u32 %v1116, 4294901760
    %v1118 = vsub.f32 %v1116, %v1117
    %v1119 = vand.u32 %v1118, 4294901760
    %1120 = vmatpush1.msra.mxu0 %v1119
    %1121 = vmatprep.subr.mxu0 0.0
    %v1122 = vand.u32 %v173, 4294901760
    %v1123 = vsub.f32 %v173, %v1122
    %v1124 = vand.u32 %v1123, 4294901760
    %v1125 = vsub.f32 %v1123, %v1124
    %v1126 = vand.u32 %v1125, 4294901760
    %1127 = vmatpush1.msra.mxu0 %v1126
    %1128 = vmatprep.subr.mxu0 0.0
    %v1129 = vand.u32 %v172, 4294901760
    %v1130 = vsub.f32 %v172, %v1129
    %v1131 = vand.u32 %v1130, 4294901760
    %v1132 = vsub.f32 %v1130, %v1131
    %v1133 = vand.u32 %v1132, 4294901760
    %1134 = vmatpush1.msra.mxu0 %v1133
    %1135 = vmatprep.subr.mxu0 0.0
    %v1136 = vand.u32 %v171, 4294901760
    %v1137 = vsub.f32 %v171, %v1136
    %v1138 = vand.u32 %v1137, 4294901760
    %v1139 = vsub.f32 %v1137, %v1138
    %v1140 = vand.u32 %v1139, 4294901760
    %1141 = vmatpush1.msra.mxu0 %v1140
    %1142 = vmatprep.subr.mxu0 0.0
    %v1143 = vand.u32 %v170, 4294901760
    %v1144 = vsub.f32 %v170, %v1143
    %v1145 = vand.u32 %v1144, 4294901760
    %v1146 = vsub.f32 %v1144, %v1145
    %v1147 = vand.u32 %v1146, 4294901760
    %1148 = vmatpush1.msra.mxu0 %v1147
    %1149 = vmatprep.subr.mxu0 0.0
    %v1150 = vand.u32 %v169, 4294901760
    %v1151 = vsub.f32 %v169, %v1150
    %v1152 = vand.u32 %v1151, 4294901760
    %v1153 = vsub.f32 %v1151, %v1152
    %v1154 = vand.u32 %v1153, 4294901760
    %1155 = vmatpush1.msra.mxu0 %v1154
    %1156 = vmatprep.subr.mxu0 0.0
    %v1157 = vand.u32 %v168, 4294901760
    %v1158 = vsub.f32 %v168, %v1157
    %v1159 = vand.u32 %v1158, 4294901760
    %v1160 = vsub.f32 %v1158, %v1159
    %v1161 = vand.u32 %v1160, 4294901760
    %1162 = vmatpush1.msra.mxu0 %v1161
    %1163 = vmatprep.subr.mxu0 0.0
    %v1164 = vand.u32 %v167, 4294901760
    %v1165 = vsub.f32 %v167, %v1164
    %v1166 = vand.u32 %v1165, 4294901760
    %v1167 = vsub.f32 %v1165, %v1166
    %v1168 = vand.u32 %v1167, 4294901760
    %1169 = vmatpush1.msra.mxu0 %v1168
    %1170 = vmatprep.subr.mxu0 0.0
    %v1171 = vand.u32 %v166, 4294901760
    %v1172 = vsub.f32 %v166, %v1171
    %v1173 = vand.u32 %v1172, 4294901760
    %v1174 = vsub.f32 %v1172, %v1173
    %v1175 = vand.u32 %v1174, 4294901760
    %1176 = vmatpush1.msra.mxu0 %v1175
    %1177 = vmatprep.subr.mxu0 0.0
    %v1178 = vand.u32 %v165, 4294901760
    %v1179 = vsub.f32 %v165, %v1178
    %v1180 = vand.u32 %v1179, 4294901760
    %v1181 = vsub.f32 %v1179, %v1180
    %v1182 = vand.u32 %v1181, 4294901760
    %1183 = vmatpush1.msra.mxu0 %v1182
    %1184 = vmatprep.subr.mxu0 0.0
    %v1185 = vand.u32 %v164, 4294901760
    %v1186 = vsub.f32 %v164, %v1185
    %v1187 = vand.u32 %v1186, 4294901760
    %v1188 = vsub.f32 %v1186, %v1187
    %v1189 = vand.u32 %v1188, 4294901760
    %1190 = vmatpush1.msra.mxu0 %v1189
    %1191 = vmatprep.subr.mxu0 0.0
    %1192 = vmatpush2.msra.mxu0 0.0
    %1193 = vmatprep.subr.mxu0 0.0
    %1194 = vmatpush2.msra.mxu0 0.0
    %1195 = vmatprep.subr.mxu0 0.0
    %1196 = vmatpush2.msra.mxu0 0.0
    %1197 = vmatprep.subr.mxu0 0.0
    %1198 = vmatpush2.msra.mxu0 0.0
    %1199 = vmatprep.subr.mxu0 0.0
    %1200 = vmatpush2.msra.mxu0 0.0
    %1201 = vmatprep.subr.mxu0 0.0
    %1202 = vmatpush2.msra.mxu0 0.0
    %1203 = vmatprep.subr.mxu0 0.0
    %1204 = vmatpush2.msra.mxu0 0.0
    %1205 = vmatprep.subr.mxu0 0.0
    %1206 = vmatpush2.msra.mxu0 0.0
    %1207 = vmatprep.subr.mxu0 0.0
    %1208 = vmatpush2.msra.mxu0 0.0
    %1209 = vmatprep.subr.mxu0 0.0
    %1210 = vmatpush2.msra.mxu0 0.0
    %1211 = vmatprep.subr.mxu0 0.0
    %1212 = vmatpush2.msra.mxu0 0.0
    %1213 = vmatprep.subr.mxu0 0.0
    %1214 = vmatpush2.msra.mxu0 0.0
    %1215 = vmatprep.subr.mxu0 0.0
    %1216 = vmatpush2.msra.mxu0 0.0
    %1217 = vmatprep.subr.mxu0 0.0
    %1218 = vmatpush2.msra.mxu0 0.0
    %1219 = vmatprep.subr.mxu0 0.0
    %1220 = vmatpush2.msra.mxu0 0.0
    %1221 = vmatprep.subr.mxu0 0.0
    %1222 = vmatpush2.msra.mxu0 0.0
    %1223 = vmatprep.mubr.f32.mxu0 0.0
    %v1224 = vand.u32 %v954, 4294901760
    %1225 = vmatmul.mubr.f32.gmra.mxu0 %v1224
    %v1226 = vpop.f32.mrf.mxu0
    %v1227 = vadd.f32 %v1046, %v1226
    %v1228 = vpop.f32.mrf.mxu0
    %1229 = vmatprep.mubr.f32.mxu0 0.0
    %v1230 = vand.u32 %v955, 4294901760
    %1231 = vmatmul.mubr.f32.gmra.mxu0 %v1230
    %v1232 = vpop.f32.mrf.mxu0
    %v1233 = vadd.f32 %v1056, %v1232
    %v1234 = vpop.f32.mrf.mxu0
    %1235 = vmatprep.mubr.f32.mxu0 0.0
    %v1236 = vand.u32 %v956, 4294901760
    %1237 = vmatmul.mubr.f32.gmra.mxu0 %v1236
    %v1238 = vpop.f32.mrf.mxu0
    %v1239 = vadd.f32 %v1066, %v1238
    %v1240 = vpop.f32.mrf.mxu0
    %1241 = vmatprep.mubr.f32.mxu0 0.0
    %v1242 = vand.u32 %v957, 4294901760
    %1243 = vmatmul.mubr.f32.gmra.mxu0 %v1242
    %v1244 = vpop.f32.mrf.mxu0
    %v1245 = vadd.f32 %v1076, %v1244
    %v1246 = vpop.f32.mrf.mxu0
    %1247 = vdwg.mxu0
    %1248 = vmatprep.subr.mxu0 0.0
    %v1249 = vand.u32 %v179, 4294901760
    %v1250 = vsub.f32 %v179, %v1249
    %1251 = vmatpush1.msra.mxu0 %v1250
    %1252 = vmatprep.subr.mxu0 0.0
    %v1253 = vand.u32 %v178, 4294901760
    %v1254 = vsub.f32 %v178, %v1253
    %1255 = vmatpush1.msra.mxu0 %v1254
    %1256 = vmatprep.subr.mxu0 0.0
    %v1257 = vand.u32 %v177, 4294901760
    %v1258 = vsub.f32 %v177, %v1257
    %1259 = vmatpush1.msra.mxu0 %v1258
    %1260 = vmatprep.subr.mxu0 0.0
    %v1261 = vand.u32 %v176, 4294901760
    %v1262 = vsub.f32 %v176, %v1261
    %1263 = vmatpush1.msra.mxu0 %v1262
    %1264 = vmatprep.subr.mxu0 0.0
    %v1265 = vand.u32 %v175, 4294901760
    %v1266 = vsub.f32 %v175, %v1265
    %1267 = vmatpush1.msra.mxu0 %v1266
    %1268 = vmatprep.subr.mxu0 0.0
    %v1269 = vand.u32 %v174, 4294901760
    %v1270 = vsub.f32 %v174, %v1269
    %1271 = vmatpush1.msra.mxu0 %v1270
    %1272 = vmatprep.subr.mxu0 0.0
    %v1273 = vand.u32 %v173, 4294901760
    %v1274 = vsub.f32 %v173, %v1273
    %1275 = vmatpush1.msra.mxu0 %v1274
    %1276 = vmatprep.subr.mxu0 0.0
    %v1277 = vand.u32 %v172, 4294901760
    %v1278 = vsub.f32 %v172, %v1277
    %1279 = vmatpush1.msra.mxu0 %v1278
    %1280 = vmatprep.subr.mxu0 0.0
    %v1281 = vand.u32 %v171, 4294901760
    %v1282 = vsub.f32 %v171, %v1281
    %1283 = vmatpush1.msra.mxu0 %v1282
    %1284 = vmatprep.subr.mxu0 0.0
    %v1285 = vand.u32 %v170, 4294901760
    %v1286 = vsub.f32 %v170, %v1285
    %1287 = vmatpush1.msra.mxu0 %v1286
    %1288 = vmatprep.subr.mxu0 0.0
    %v1289 = vand.u32 %v169, 4294901760
    %v1290 = vsub.f32 %v169, %v1289
    %1291 = vmatpush1.msra.mxu0 %v1290
    %1292 = vmatprep.subr.mxu0 0.0
    %v1293 = vand.u32 %v168, 4294901760
    %v1294 = vsub.f32 %v168, %v1293
    %1295 = vmatpush1.msra.mxu0 %v1294
    %1296 = vmatprep.subr.mxu0 0.0
    %v1297 = vand.u32 %v167, 4294901760
    %v1298 = vsub.f32 %v167, %v1297
    %1299 = vmatpush1.msra.mxu0 %v1298
    %1300 = vmatprep.subr.mxu0 0.0
    %v1301 = vand.u32 %v166, 4294901760
    %v1302 = vsub.f32 %v166, %v1301
    %1303 = vmatpush1.msra.mxu0 %v1302
    %1304 = vmatprep.subr.mxu0 0.0
    %v1305 = vand.u32 %v165, 4294901760
    %v1306 = vsub.f32 %v165, %v1305
    %1307 = vmatpush1.msra.mxu0 %v1306
    %1308 = vmatprep.subr.mxu0 0.0
    %v1309 = vand.u32 %v164, 4294901760
    %v1310 = vsub.f32 %v164, %v1309
    %1311 = vmatpush1.msra.mxu0 %v1310
    %1312 = vmatprep.subr.mxu0 0.0
    %1313 = vmatpush2.msra.mxu0 0.0
    %1314 = vmatprep.subr.mxu0 0.0
    %1315 = vmatpush2.msra.mxu0 0.0
    %1316 = vmatprep.subr.mxu0 0.0
    %1317 = vmatpush2.msra.mxu0 0.0
    %1318 = vmatprep.subr.mxu0 0.0
    %1319 = vmatpush2.msra.mxu0 0.0
    %1320 = vmatprep.subr.mxu0 0.0
    %1321 = vmatpush2.msra.mxu0 0.0
    %1322 = vmatprep.subr.mxu0 0.0
    %1323 = vmatpush2.msra.mxu0 0.0
    %1324 = vmatprep.subr.mxu0 0.0
    %1325 = vmatpush2.msra.mxu0 0.0
    %1326 = vmatprep.subr.mxu0 0.0
    %1327 = vmatpush2.msra.mxu0 0.0
    %1328 = vmatprep.subr.mxu0 0.0
    %1329 = vmatpush2.msra.mxu0 0.0
    %1330 = vmatprep.subr.mxu0 0.0
    %1331 = vmatpush2.msra.mxu0 0.0
    %1332 = vmatprep.subr.mxu0 0.0
    %1333 = vmatpush2.msra.mxu0 0.0
    %1334 = vmatprep.subr.mxu0 0.0
    %1335 = vmatpush2.msra.mxu0 0.0
    %1336 = vmatprep.subr.mxu0 0.0
    %1337 = vmatpush2.msra.mxu0 0.0
    %1338 = vmatprep.subr.mxu0 0.0
    %1339 = vmatpush2.msra.mxu0 0.0
    %1340 = vmatprep.subr.mxu0 0.0
    %1341 = vmatpush2.msra.mxu0 0.0
    %1342 = vmatprep.subr.mxu0 0.0
    %1343 = vmatpush2.msra.mxu0 0.0
    %1344 = vmatprep.mubr.f32.mxu0 0.0
    %v1345 = vand.u32 %v954, 4294901760
    %v1346 = vsub.f32 %v954, %v1345
    %1347 = vmatmul.mubr.f32.gmra.mxu0 %v1346
    %v1348 = vpop.f32.mrf.mxu0
    %v1349 = vadd.f32 %v1227, %v1348
    %v1350 = vpop.f32.mrf.mxu0
    %1351 = vmatprep.mubr.f32.mxu0 0.0
    %v1352 = vand.u32 %v955, 4294901760
    %v1353 = vsub.f32 %v955, %v1352
    %1354 = vmatmul.mubr.f32.gmra.mxu0 %v1353
    %v1355 = vpop.f32.mrf.mxu0
    %v1356 = vadd.f32 %v1233, %v1355
    %v1357 = vpop.f32.mrf.mxu0
    %1358 = vmatprep.mubr.f32.mxu0 0.0
    %v1359 = vand.u32 %v956, 4294901760
    %v1360 = vsub.f32 %v956, %v1359
    %1361 = vmatmul.mubr.f32.gmra.mxu0 %v1360
    %v1362 = vpop.f32.mrf.mxu0
    %v1363 = vadd.f32 %v1239, %v1362
    %v1364 = vpop.f32.mrf.mxu0
    %1365 = vmatprep.mubr.f32.mxu0 0.0
    %v1366 = vand.u32 %v957, 4294901760
    %v1367 = vsub.f32 %v957, %v1366
    %1368 = vmatmul.mubr.f32.gmra.mxu0 %v1367
    %v1369 = vpop.f32.mrf.mxu0
    %v1370 = vadd.f32 %v1245, %v1369
    %v1371 = vpop.f32.mrf.mxu0
    %1372 = vdwg.mxu0
    %1373 = vmatprep.subr.mxu0 0.0
    %v1374 = vand.u32 %v179, 4294901760
    %1375 = vmatpush1.msra.mxu0 %v1374
    %1376 = vmatprep.subr.mxu0 0.0
    %v1377 = vand.u32 %v178, 4294901760
    %1378 = vmatpush1.msra.mxu0 %v1377
    %1379 = vmatprep.subr.mxu0 0.0
    %v1380 = vand.u32 %v177, 4294901760
    %1381 = vmatpush1.msra.mxu0 %v1380
    %1382 = vmatprep.subr.mxu0 0.0
    %v1383 = vand.u32 %v176, 4294901760
    %1384 = vmatpush1.msra.mxu0 %v1383
    %1385 = vmatprep.subr.mxu0 0.0
    %v1386 = vand.u32 %v175, 4294901760
    %1387 = vmatpush1.msra.mxu0 %v1386
    %1388 = vmatprep.subr.mxu0 0.0
    %v1389 = vand.u32 %v174, 4294901760
    %1390 = vmatpush1.msra.mxu0 %v1389
    %1391 = vmatprep.subr.mxu0 0.0
    %v1392 = vand.u32 %v173, 4294901760
    %1393 = vmatpush1.msra.mxu0 %v1392
    %1394 = vmatprep.subr.mxu0 0.0
    %v1395 = vand.u32 %v172, 4294901760
    %1396 = vmatpush1.msra.mxu0 %v1395
    %1397 = vmatprep.subr.mxu0 0.0
    %v1398 = vand.u32 %v171, 4294901760
    %1399 = vmatpush1.msra.mxu0 %v1398
    %1400 = vmatprep.subr.mxu0 0.0
    %v1401 = vand.u32 %v170, 4294901760
    %1402 = vmatpush1.msra.mxu0 %v1401
    %1403 = vmatprep.subr.mxu0 0.0
    %v1404 = vand.u32 %v169, 4294901760
    %1405 = vmatpush1.msra.mxu0 %v1404
    %1406 = vmatprep.subr.mxu0 0.0
    %v1407 = vand.u32 %v168, 4294901760
    %1408 = vmatpush1.msra.mxu0 %v1407
    %1409 = vmatprep.subr.mxu0 0.0
    %v1410 = vand.u32 %v167, 4294901760
    %1411 = vmatpush1.msra.mxu0 %v1410
    %1412 = vmatprep.subr.mxu0 0.0
    %v1413 = vand.u32 %v166, 4294901760
    %1414 = vmatpush1.msra.mxu0 %v1413
    %1415 = vmatprep.subr.mxu0 0.0
    %v1416 = vand.u32 %v165, 4294901760
    %1417 = vmatpush1.msra.mxu0 %v1416
    %1418 = vmatprep.subr.mxu0 0.0
    %v1419 = vand.u32 %v164, 4294901760
    %1420 = vmatpush1.msra.mxu0 %v1419
    %1421 = vmatprep.subr.mxu0 0.0
    %1422 = vmatpush2.msra.mxu0 0.0
    %1423 = vmatprep.subr.mxu0 0.0
    %1424 = vmatpush2.msra.mxu0 0.0
    %1425 = vmatprep.subr.mxu0 0.0
    %1426 = vmatpush2.msra.mxu0 0.0
    %1427 = vmatprep.subr.mxu0 0.0
    %1428 = vmatpush2.msra.mxu0 0.0
    %1429 = vmatprep.subr.mxu0 0.0
    %1430 = vmatpush2.msra.mxu0 0.0
    %1431 = vmatprep.subr.mxu0 0.0
    %1432 = vmatpush2.msra.mxu0 0.0
    %1433 = vmatprep.subr.mxu0 0.0
    %1434 = vmatpush2.msra.mxu0 0.0
    %1435 = vmatprep.subr.mxu0 0.0
    %1436 = vmatpush2.msra.mxu0 0.0
    %1437 = vmatprep.subr.mxu0 0.0
    %1438 = vmatpush2.msra.mxu0 0.0
    %1439 = vmatprep.subr.mxu0 0.0
    %1440 = vmatpush2.msra.mxu0 0.0
    %1441 = vmatprep.subr.mxu0 0.0
    %1442 = vmatpush2.msra.mxu0 0.0
    %1443 = vmatprep.subr.mxu0 0.0
    %1444 = vmatpush2.msra.mxu0 0.0
    %1445 = vmatprep.subr.mxu0 0.0
    %1446 = vmatpush2.msra.mxu0 0.0
    %1447 = vmatprep.subr.mxu0 0.0
    %1448 = vmatpush2.msra.mxu0 0.0
    %1449 = vmatprep.subr.mxu0 0.0
    %1450 = vmatpush2.msra.mxu0 0.0
    %1451 = vmatprep.subr.mxu0 0.0
    %1452 = vmatpush2.msra.mxu0 0.0
    %1453 = vmatprep.mubr.f32.mxu0 0.0
    %v1454 = vand.u32 %v954, 4294901760
    %v1455 = vsub.f32 %v954, %v1454
    %v1456 = vand.u32 %v1455, 4294901760
    %1457 = vmatmul.mubr.f32.gmra.mxu0 %v1456
    %v1458 = vpop.f32.mrf.mxu0
    %v1459 = vadd.f32 %v1349, %v1458
    %v1460 = vpop.f32.mrf.mxu0
    %1461 = vmatprep.mubr.f32.mxu0 0.0
    %v1462 = vand.u32 %v955, 4294901760
    %v1463 = vsub.f32 %v955, %v1462
    %v1464 = vand.u32 %v1463, 4294901760
    %1465 = vmatmul.mubr.f32.gmra.mxu0 %v1464
    %v1466 = vpop.f32.mrf.mxu0
    %v1467 = vadd.f32 %v1356, %v1466
    %v1468 = vpop.f32.mrf.mxu0
    %1469 = vmatprep.mubr.f32.mxu0 0.0
    %v1470 = vand.u32 %v956, 4294901760
    %v1471 = vsub.f32 %v956, %v1470
    %v1472 = vand.u32 %v1471, 4294901760
    %1473 = vmatmul.mubr.f32.gmra.mxu0 %v1472
    %v1474 = vpop.f32.mrf.mxu0
    %v1475 = vadd.f32 %v1363, %v1474
    %v1476 = vpop.f32.mrf.mxu0
    %1477 = vmatprep.mubr.f32.mxu0 0.0
    %v1478 = vand.u32 %v957, 4294901760
    %v1479 = vsub.f32 %v957, %v1478
    %v1480 = vand.u32 %v1479, 4294901760
    %1481 = vmatmul.mubr.f32.gmra.mxu0 %v1480
    %v1482 = vpop.f32.mrf.mxu0
    %v1483 = vadd.f32 %v1370, %v1482
    %v1484 = vpop.f32.mrf.mxu0
    %1485 = vdwg.mxu0
    %1486 = vmatprep.subr.mxu0 0.0
    %v1487 = vand.u32 %v179, 4294901760
    %v1488 = vsub.f32 %v179, %v1487
    %v1489 = vand.u32 %v1488, 4294901760
    %1490 = vmatpush1.msra.mxu0 %v1489
    %1491 = vmatprep.subr.mxu0 0.0
    %v1492 = vand.u32 %v178, 4294901760
    %v1493 = vsub.f32 %v178, %v1492
    %v1494 = vand.u32 %v1493, 4294901760
    %1495 = vmatpush1.msra.mxu0 %v1494
    %1496 = vmatprep.subr.mxu0 0.0
    %v1497 = vand.u32 %v177, 4294901760
    %v1498 = vsub.f32 %v177, %v1497
    %v1499 = vand.u32 %v1498, 4294901760
    %1500 = vmatpush1.msra.mxu0 %v1499
    %1501 = vmatprep.subr.mxu0 0.0
    %v1502 = vand.u32 %v176, 4294901760
    %v1503 = vsub.f32 %v176, %v1502
    %v1504 = vand.u32 %v1503, 4294901760
    %1505 = vmatpush1.msra.mxu0 %v1504
    %1506 = vmatprep.subr.mxu0 0.0
    %v1507 = vand.u32 %v175, 4294901760
    %v1508 = vsub.f32 %v175, %v1507
    %v1509 = vand.u32 %v1508, 4294901760
    %1510 = vmatpush1.msra.mxu0 %v1509
    %1511 = vmatprep.subr.mxu0 0.0
    %v1512 = vand.u32 %v174, 4294901760
    %v1513 = vsub.f32 %v174, %v1512
    %v1514 = vand.u32 %v1513, 4294901760
    %1515 = vmatpush1.msra.mxu0 %v1514
    %1516 = vmatprep.subr.mxu0 0.0
    %v1517 = vand.u32 %v173, 4294901760
    %v1518 = vsub.f32 %v173, %v1517
    %v1519 = vand.u32 %v1518, 4294901760
    %1520 = vmatpush1.msra.mxu0 %v1519
    %1521 = vmatprep.subr.mxu0 0.0
    %v1522 = vand.u32 %v172, 4294901760
    %v1523 = vsub.f32 %v172, %v1522
    %v1524 = vand.u32 %v1523, 4294901760
    %1525 = vmatpush1.msra.mxu0 %v1524
    %1526 = vmatprep.subr.mxu0 0.0
    %v1527 = vand.u32 %v171, 4294901760
    %v1528 = vsub.f32 %v171, %v1527
    %v1529 = vand.u32 %v1528, 4294901760
    %1530 = vmatpush1.msra.mxu0 %v1529
    %1531 = vmatprep.subr.mxu0 0.0
    %v1532 = vand.u32 %v170, 4294901760
    %v1533 = vsub.f32 %v170, %v1532
    %v1534 = vand.u32 %v1533, 4294901760
    %1535 = vmatpush1.msra.mxu0 %v1534
    %1536 = vmatprep.subr.mxu0 0.0
    %v1537 = vand.u32 %v169, 4294901760
    %v1538 = vsub.f32 %v169, %v1537
    %v1539 = vand.u32 %v1538, 4294901760
    %1540 = vmatpush1.msra.mxu0 %v1539
    %1541 = vmatprep.subr.mxu0 0.0
    %v1542 = vand.u32 %v168, 4294901760
    %v1543 = vsub.f32 %v168, %v1542
    %v1544 = vand.u32 %v1543, 4294901760
    %1545 = vmatpush1.msra.mxu0 %v1544
    %1546 = vmatprep.subr.mxu0 0.0
    %v1547 = vand.u32 %v167, 4294901760
    %v1548 = vsub.f32 %v167, %v1547
    %v1549 = vand.u32 %v1548, 4294901760
    %1550 = vmatpush1.msra.mxu0 %v1549
    %1551 = vmatprep.subr.mxu0 0.0
    %v1552 = vand.u32 %v166, 4294901760
    %v1553 = vsub.f32 %v166, %v1552
    %v1554 = vand.u32 %v1553, 4294901760
    %1555 = vmatpush1.msra.mxu0 %v1554
    %1556 = vmatprep.subr.mxu0 0.0
    %v1557 = vand.u32 %v165, 4294901760
    %v1558 = vsub.f32 %v165, %v1557
    %v1559 = vand.u32 %v1558, 4294901760
    %1560 = vmatpush1.msra.mxu0 %v1559
    %1561 = vmatprep.subr.mxu0 0.0
    %v1562 = vand.u32 %v164, 4294901760
    %v1563 = vsub.f32 %v164, %v1562
    %v1564 = vand.u32 %v1563, 4294901760
    %1565 = vmatpush1.msra.mxu0 %v1564
    %1566 = vmatprep.subr.mxu0 0.0
    %1567 = vmatpush2.msra.mxu0 0.0
    %1568 = vmatprep.subr.mxu0 0.0
    %1569 = vmatpush2.msra.mxu0 0.0
    %1570 = vmatprep.subr.mxu0 0.0
    %1571 = vmatpush2.msra.mxu0 0.0
    %1572 = vmatprep.subr.mxu0 0.0
    %1573 = vmatpush2.msra.mxu0 0.0
    %1574 = vmatprep.subr.mxu0 0.0
    %1575 = vmatpush2.msra.mxu0 0.0
    %1576 = vmatprep.subr.mxu0 0.0
    %1577 = vmatpush2.msra.mxu0 0.0
    %1578 = vmatprep.subr.mxu0 0.0
    %1579 = vmatpush2.msra.mxu0 0.0
    %1580 = vmatprep.subr.mxu0 0.0
    %1581 = vmatpush2.msra.mxu0 0.0
    %1582 = vmatprep.subr.mxu0 0.0
    %1583 = vmatpush2.msra.mxu0 0.0
    %1584 = vmatprep.subr.mxu0 0.0
    %1585 = vmatpush2.msra.mxu0 0.0
    %1586 = vmatprep.subr.mxu0 0.0
    %1587 = vmatpush2.msra.mxu0 0.0
    %1588 = vmatprep.subr.mxu0 0.0
    %1589 = vmatpush2.msra.mxu0 0.0
    %1590 = vmatprep.subr.mxu0 0.0
    %1591 = vmatpush2.msra.mxu0 0.0
    %1592 = vmatprep.subr.mxu0 0.0
    %1593 = vmatpush2.msra.mxu0 0.0
    %1594 = vmatprep.subr.mxu0 0.0
    %1595 = vmatpush2.msra.mxu0 0.0
    %1596 = vmatprep.subr.mxu0 0.0
    %1597 = vmatpush2.msra.mxu0 0.0
    %1598 = vmatprep.mubr.f32.mxu0 0.0
    %v1599 = vand.u32 %v954, 4294901760
    %1600 = vmatmul.mubr.f32.gmra.mxu0 %v1599
    %v1601 = vpop.f32.mrf.mxu0
    %v1602 = vadd.f32 %v1459, %v1601
    %v1603 = vpop.f32.mrf.mxu0
    %1604 = vmatprep.mubr.f32.mxu0 0.0
    %v1605 = vand.u32 %v955, 4294901760
    %1606 = vmatmul.mubr.f32.gmra.mxu0 %v1605
    %v1607 = vpop.f32.mrf.mxu0
    %v1608 = vadd.f32 %v1467, %v1607
    %v1609 = vpop.f32.mrf.mxu0
    %1610 = vmatprep.mubr.f32.mxu0 0.0
    %v1611 = vand.u32 %v956, 4294901760
    %1612 = vmatmul.mubr.f32.gmra.mxu0 %v1611
    %v1613 = vpop.f32.mrf.mxu0
    %v1614 = vadd.f32 %v1475, %v1613
    %v1615 = vpop.f32.mrf.mxu0
    %1616 = vmatprep.mubr.f32.mxu0 0.0
    %v1617 = vand.u32 %v957, 4294901760
    %1618 = vmatmul.mubr.f32.gmra.mxu0 %v1617
    %v1619 = vpop.f32.mrf.mxu0
    %v1620 = vadd.f32 %v1483, %v1619
    %v1621 = vpop.f32.mrf.mxu0
    %1622 = vdwg.mxu0
    %1623 = vmatprep.subr.mxu0 0.0
    %v1624 = vand.u32 %v179, 4294901760
    %1625 = vmatpush1.msra.mxu0 %v1624
    %1626 = vmatprep.subr.mxu0 0.0
    %v1627 = vand.u32 %v178, 4294901760
    %1628 = vmatpush1.msra.mxu0 %v1627
    %1629 = vmatprep.subr.mxu0 0.0
    %v1630 = vand.u32 %v177, 4294901760
    %1631 = vmatpush1.msra.mxu0 %v1630
    %1632 = vmatprep.subr.mxu0 0.0
    %v1633 = vand.u32 %v176, 4294901760
    %1634 = vmatpush1.msra.mxu0 %v1633
    %1635 = vmatprep.subr.mxu0 0.0
    %v1636 = vand.u32 %v175, 4294901760
    %1637 = vmatpush1.msra.mxu0 %v1636
    %1638 = vmatprep.subr.mxu0 0.0
    %v1639 = vand.u32 %v174, 4294901760
    %1640 = vmatpush1.msra.mxu0 %v1639
    %1641 = vmatprep.subr.mxu0 0.0
    %v1642 = vand.u32 %v173, 4294901760
    %1643 = vmatpush1.msra.mxu0 %v1642
    %1644 = vmatprep.subr.mxu0 0.0
    %v1645 = vand.u32 %v172, 4294901760
    %1646 = vmatpush1.msra.mxu0 %v1645
    %1647 = vmatprep.subr.mxu0 0.0
    %v1648 = vand.u32 %v171, 4294901760
    %1649 = vmatpush1.msra.mxu0 %v1648
    %1650 = vmatprep.subr.mxu0 0.0
    %v1651 = vand.u32 %v170, 4294901760
    %1652 = vmatpush1.msra.mxu0 %v1651
    %1653 = vmatprep.subr.mxu0 0.0
    %v1654 = vand.u32 %v169, 4294901760
    %1655 = vmatpush1.msra.mxu0 %v1654
    %1656 = vmatprep.subr.mxu0 0.0
    %v1657 = vand.u32 %v168, 4294901760
    %1658 = vmatpush1.msra.mxu0 %v1657
    %1659 = vmatprep.subr.mxu0 0.0
    %v1660 = vand.u32 %v167, 4294901760
    %1661 = vmatpush1.msra.mxu0 %v1660
    %1662 = vmatprep.subr.mxu0 0.0
    %v1663 = vand.u32 %v166, 4294901760
    %1664 = vmatpush1.msra.mxu0 %v1663
    %1665 = vmatprep.subr.mxu0 0.0
    %v1666 = vand.u32 %v165, 4294901760
    %1667 = vmatpush1.msra.mxu0 %v1666
    %1668 = vmatprep.subr.mxu0 0.0
    %v1669 = vand.u32 %v164, 4294901760
    %1670 = vmatpush1.msra.mxu0 %v1669
    %1671 = vmatprep.subr.mxu0 0.0
    %1672 = vmatpush2.msra.mxu0 0.0
    %1673 = vmatprep.subr.mxu0 0.0
    %1674 = vmatpush2.msra.mxu0 0.0
    %1675 = vmatprep.subr.mxu0 0.0
    %1676 = vmatpush2.msra.mxu0 0.0
    %1677 = vmatprep.subr.mxu0 0.0
    %1678 = vmatpush2.msra.mxu0 0.0
    %1679 = vmatprep.subr.mxu0 0.0
    %1680 = vmatpush2.msra.mxu0 0.0
    %1681 = vmatprep.subr.mxu0 0.0
    %1682 = vmatpush2.msra.mxu0 0.0
    %1683 = vmatprep.subr.mxu0 0.0
    %1684 = vmatpush2.msra.mxu0 0.0
    %1685 = vmatprep.subr.mxu0 0.0
    %1686 = vmatpush2.msra.mxu0 0.0
    %1687 = vmatprep.subr.mxu0 0.0
    %1688 = vmatpush2.msra.mxu0 0.0
    %1689 = vmatprep.subr.mxu0 0.0
    %1690 = vmatpush2.msra.mxu0 0.0
    %1691 = vmatprep.subr.mxu0 0.0
    %1692 = vmatpush2.msra.mxu0 0.0
    %1693 = vmatprep.subr.mxu0 0.0
    %1694 = vmatpush2.msra.mxu0 0.0
    %1695 = vmatprep.subr.mxu0 0.0
    %1696 = vmatpush2.msra.mxu0 0.0
    %1697 = vmatprep.subr.mxu0 0.0
    %1698 = vmatpush2.msra.mxu0 0.0
    %1699 = vmatprep.subr.mxu0 0.0
    %1700 = vmatpush2.msra.mxu0 0.0
    %1701 = vmatprep.subr.mxu0 0.0
    %1702 = vmatpush2.msra.mxu0 0.0
    %1703 = vmatprep.mubr.f32.mxu0 0.0
    %v1704 = vand.u32 %v954, 4294901760
    %1705 = vmatmul.mubr.f32.gmra.mxu0 %v1704
    %v1706 = vpop.f32.mrf.mxu0
    %v1707 = vadd.f32 %v1602, %v1706
    %v1708 = vpop.f32.mrf.mxu0
    %1709 = vmatprep.mubr.f32.mxu0 0.0
    %v1710 = vand.u32 %v955, 4294901760
    %1711 = vmatmul.mubr.f32.gmra.mxu0 %v1710
    %v1712 = vpop.f32.mrf.mxu0
    %v1713 = vadd.f32 %v1608, %v1712
    %v1714 = vpop.f32.mrf.mxu0
    %1715 = vmatprep.mubr.f32.mxu0 0.0
    %v1716 = vand.u32 %v956, 4294901760
    %1717 = vmatmul.mubr.f32.gmra.mxu0 %v1716
    %v1718 = vpop.f32.mrf.mxu0
    %v1719 = vadd.f32 %v1614, %v1718
    %v1720 = vpop.f32.mrf.mxu0
    %1721 = vmatprep.mubr.f32.mxu0 0.0
    %v1722 = vand.u32 %v957, 4294901760
    %1723 = vmatmul.mubr.f32.gmra.mxu0 %v1722
    %v1724 = vpop.f32.mrf.mxu0
    %v1725 = vadd.f32 %v1620, %v1724
    %v1726 = vpop.f32.mrf.mxu0
    %1727 = vdwg.mxu0
    %v1728 = vmul.f32 %v933, %v1707
    %v1729 = vmul.f32 %v939, %v1713
    %v1730 = vmul.f32 %v945, %v1719
    %v1731 = vmul.f32 %v951, %v1725
    %v1732 = vadd.f32 %v1728, %v1729
    %v1733 = vadd.f32 %v1732, %v1730
    %v1734 = vadd.f32 %v1733, %v1731
    %v1735 = vrot.slane %v1734, 4
    %v1736 = vadd.f32 %v1734, %v1735
    %v1737 = vrot.slane %v1736, 2
    %v1738 = vadd.f32 %v1736, %v1737
    %v1739 = vrot.slane %v1738, 1
    %v1740 = vadd.f32 %v1738, %v1739
    %1741 = vst [vmem:[#allocation8] sm:$0x1] %v1740
    // Predicated region
    $region30: #{tpu_custom_call.1} parent=1 // pred_check
      _
    $region31: #{tpu_custom_call.1} parent=1 // pred_check_branch
      %1743 = sbr.rel (0) target = $region33
    $region32: #{tpu_custom_call.1} parent=1 // pred_region
      %s1745 = ssub.s32 16, 16
      %1746 = vsyncadd [#allocation4], %s1745
      %s1748 = sshll.u32 [#allocation8], 4
      %s1749 = int_to_ptr.vmem [resolvable:$true] %s1748
      %1751 = dma.vmem_to_hbm [thread:$0]  %s1749, 16, %s4, [#allocation4]
    $region33: #{tpu_custom_call.1} parent=1 // pred_fallthru
      _
    // Predicated region
    $region34: #{tpu_custom_call.1} parent=1 // pred_check
      _
    $region35: #{tpu_custom_call.1} parent=1 // pred_check_branch
      %1753 = sbr.rel (0) target = $region37
    $region36: #{tpu_custom_call.1} parent=1 // pred_region
      %1754 = dma.done [#allocation4], 16
    $region37: #{tpu_custom_call.1} parent=1 // pred_fallthru
      _
    %1755 = vsyncpa [#allocation3], 1
    %1756 = vsyncpa [#allocation6], 1
    %1757 = vsyncpa [#allocation4], 1

</llo_original>
